<compile_context>
chip_gen: v7x
topology: tpu7x:2x2x1
jax: 0.10.0
libtpu: 0.0.40
codegen_flags: <defaults>
</compile_context>

<pallas_src>
import functools

import jax
import jax.numpy as jnp
from jax.experimental import pallas as pl
from jax.experimental.pallas import tpu as pltpu

FILTERS = 4
RESOLUTION = 16
RES_SCALE = 0.2
LEAKY_SLOPE = 0.01  # PyTorch nn.LeakyReLU() default negative_slope


def _shortcut_rrdb_kernel(x_ref, w_ref, b_ref, m_ref, o_ref, patch_ref, *,
                          H, W, C0, n_blocks, convs_per_block):
    """Fused ShortcutBlock/RRDB forward for one batch element.

    x_ref:     (1, C0, H*W)        lane-dense input (NCHW flattened over H,W)
    w_ref:     (15, C0, 9*5*C0)    packed conv weights (group-major columns)
    b_ref:     (15, C0, 1)         biases
    m_ref:     (2, H*W)            column masks for dx=-1 / dx=+1 taps (0/1)
    o_ref:     (1, C0, H*W)        output
    patch_ref: (9*5*C0, H*W)       VMEM im2col scratch, group-major rows:
                                   row = g*(9*C0) + tap*C0 + c
    """
    HW = H * W
    TAPS = 9
    GROUP_ROWS = TAPS * C0             # rows per dense-block group (= 36)
    OFF = 128                          # lane offset of the valid window (128-aligned)
    f32 = jnp.float32

    mask_l = m_ref[0:1, :]             # zero where x == 0      (dx = -1 taps)
    mask_r = m_ref[1:2, :]             # zero where x == W - 1  (dx = +1 taps)
    zpad = jnp.zeros((C0, OFF), f32)

    def scatter_group(group, g):
        """Write the 9 spatially shifted copies of one 4-channel group into the
        im2col scratch.  Writing group g IS the dense-block channel concat."""
        padv = jnp.concatenate([zpad, group, zpad], axis=1)   # (C0, HW + 256)
        base = g * GROUP_ROWS
        for t in range(TAPS):
            i, j = divmod(t, 3)                               # dy = i-1, dx = j-1
            start = OFF + (i - 1) * W + (j - 1)
            slab = padv[:, start:start + HW]                  # (C0, HW)
            if j == 0:
                slab = slab * mask_l
            elif j == 2:
                slab = slab * mask_r
            r = base + t * C0
            patch_ref[r:r + C0, :] = slab

    x0 = x_ref[0].astype(f32)                                 # (C0, HW)
    y = x0
    conv = 0
    for _b in range(n_blocks):
        block_in = y
        scatter_group(block_in, 0)
        out = None
        for k in range(convs_per_block):
            kk = (k + 1) * GROUP_ROWS       # exact contraction size for conv k
            # 3x3 conv as one lane-dense MXU matmul: (C0, kk) x (kk, HW).
            acc = jnp.dot(w_ref[conv][:, :kk], patch_ref[0:kk, :],
                          preferred_element_type=f32)         # (C0, HW)
            acc = acc + b_ref[conv]                           # (C0, 1) broadcast
            if k < convs_per_block - 1:                       # b1..b4: LeakyReLU
                acc = jnp.where(acc >= 0.0, acc, LEAKY_SLOPE * acc)
                scatter_group(acc, k + 1)                     # concat for next conv
            out = acc
            conv += 1
        y = out * RES_SCALE + block_in                        # dense-block residual
    # ShortcutBlock: x + sub(x), with sub(x) = RES_SCALE * trunk(x).
    o_ref[0] = (y * RES_SCALE + x0).astype(o_ref.dtype)


def shortcut_rrdb_forward(x, w_packed, b_packed):
    """x: (N, C, H, W) NCHW like the PyTorch module.  Returns (N, C, H, W)."""
    N, C, H, W = x.shape
    HW = H * W
    n_conv, c0, K = w_packed.shape
    convs_per_block = 5
    n_blocks = n_conv // convs_per_block
    assert c0 == C and K == 9 * convs_per_block * C
    assert W + 1 <= 128  # shifted slices stay inside the 128-lane zero border

    # Column-border masks (precomputed host side; 0/1 floats).
    col = jnp.arange(HW, dtype=jnp.int32) % W
    masks = jnp.stack([(col != 0), (col != W - 1)]).astype(jnp.float32)  # (2, HW)

    kernel = functools.partial(
        _shortcut_rrdb_kernel, H=H, W=W, C0=C,
        n_blocks=n_blocks, convs_per_block=convs_per_block)

    out = pl.pallas_call(
        kernel,
        out_shape=jax.ShapeDtypeStruct((N, C, HW), x.dtype),
        grid=(N,),
        in_specs=[
            pl.BlockSpec((1, C, HW), lambda n: (n, 0, 0)),
            pl.BlockSpec(w_packed.shape, lambda n: (0, 0, 0)),
            pl.BlockSpec(b_packed.shape, lambda n: (0, 0, 0)),
            pl.BlockSpec((2, HW), lambda n: (0, 0)),
        ],
        out_specs=pl.BlockSpec((1, C, HW), lambda n: (n, 0, 0)),
        scratch_shapes=[pltpu.VMEM((9 * convs_per_block * C, HW), jnp.float32)],
        compiler_params=pltpu.CompilerParams(
            dimension_semantics=("parallel",)),
    )(x.reshape(N, C, HW), w_packed, b_packed, masks)
    return out.reshape(N, C, H, W)


def init_params(key, filters):
    """Synthetic weights matching PyTorch Conv2d, stored HWIO: (3, 3, Cin, Cout)."""
    params = []
    for _ in range(3):                     # 3 DenseResidualBlocks
        block_params = []
        for k in range(5):                 # b1..b5
            cin = (k + 1) * filters
            key, kw, kb = jax.random.split(key, 3)
            w = jax.random.normal(kw, (3, 3, cin, filters), jnp.float32) * 0.05
            b = jax.random.normal(kb, (filters,), jnp.float32) * 0.01
            block_params.append((w, b))
        params.append(block_params)
    return params


def pack_params(params, c0):
    """Pack the 15 HWIO conv weights into (15, Cout, 9*5*c0).

    Column layout is group-major to match the kernel's im2col scratch:
        col = g*(9*c0) + tap*c0 + c   (g = dense-block group, c = in-channel
    within the group).  Columns beyond the conv's real Cin are zero-padded only
    so the 15 weights stack to one array; the kernel never reads them.
    Biases are packed to (15, Cout, 1)."""
    convs_per_block = len(params[0])
    group_rows = 9 * c0
    kmax = convs_per_block * group_rows
    ws, bs = [], []
    for block in params:
        for (w, b) in block:
            cin = w.shape[2]
            n_groups = cin // c0
            cols = []
            for g in range(n_groups):
                for t in range(9):
                    i, j = divmod(t, 3)
                    cols.append(w[i, j, g * c0:(g + 1) * c0, :].T)   # (c0, c0)
            wk = jnp.concatenate(cols, axis=1)                       # (c0, n_groups*9*c0)
            wk = jnp.pad(wk, ((0, 0), (0, kmax - wk.shape[1])))
            ws.append(wk)
            bs.append(b.reshape(c0, 1))
    return jnp.stack(ws), jnp.stack(bs)


# ---------------- pure-JAX reference (for correctness check) ----------------
def _conv3x3_ref(x, w, b, relu):
    y = jax.lax.conv_general_dilated(
        x, w, window_strides=(1, 1), padding=((1, 1), (1, 1)),
        dimension_numbers=("NCHW", "HWIO", "NCHW"),
        precision=jax.lax.Precision.HIGHEST)
    y = y + b.reshape(1, -1, 1, 1)
    if relu:
        y = jnp.where(y >= 0, y, LEAKY_SLOPE * y)
    return y


def shortcut_rrdb_reference(x, params):
    y = x
    for block in params:
        block_in = y
        feats = block_in
        out = None
        for k, (w, b) in enumerate(block):
            out = _conv3x3_ref(feats, w, b, relu=(k < 4))
            feats = jnp.concatenate([feats, out], axis=1)
        y = out * RES_SCALE + block_in
    return y * RES_SCALE + x


if __name__ == "__main__":
    key = jax.random.PRNGKey(0)
    k_x, k_p = jax.random.split(key)

    N, C, H, W = 2, FILTERS, RESOLUTION, RESOLUTION   # NCHW, like PyTorch
    x = jax.random.normal(k_x, (N, C, H, W), jnp.float32)

    params = init_params(k_p, FILTERS)
    w_packed, b_packed = pack_params(params, FILTERS)

    fwd = jax.jit(shortcut_rrdb_forward)
    out = fwd(x, w_packed, b_packed)
    jax.block_until_ready(out)

    assert out.shape == (N, C, H, W), out.shape
    assert out.dtype == jnp.float32

    # Numerical check vs an XLA reference (loose tol: default TPU matmul
    # precision may round operands to bf16 inside the MXU).
    ref = shortcut_rrdb_reference(x, params)
    err = float(jnp.max(jnp.abs(out - ref)))
    assert err < 5e-2, f"max abs err {err}"

    print("KERNEL_OK")
</pallas_src>

<mosaic_0001>
module attributes {stable_mosaic.version = 11 : i64} {
  func.func @_shortcut_rrdb_kernel(%arg0: i32, %arg1: memref<1x4x256xf32, #tpu.memory_space<vmem>>, %arg2: memref<15x4x180xf32, #tpu.memory_space<vmem>>, %arg3: memref<15x4x1xf32, #tpu.memory_space<vmem>>, %arg4: memref<2x256xf32, #tpu.memory_space<vmem>>, %arg5: memref<1x4x256xf32, #tpu.memory_space<vmem>>, %arg6: memref<180x256xf32, #tpu.memory_space<vmem>>) attributes {dimension_semantics = [#tpu.dimension_semantics<parallel>], iteration_bounds = array<i64: 2>, scalar_prefetch = 0 : i64, scratch_operands = 1 : i64, tpu.core_type = #tpu.core_type<tc>, window_params = [{transform_indices = @transform_0, window_bounds = array<i64: 1, 4, 256>}, {pipeline_mode = #tpu.pipeline_mode<synchronous>, transform_indices = @transform_1, window_bounds = array<i64: 15, 4, 180>}, {pipeline_mode = #tpu.pipeline_mode<synchronous>, transform_indices = @transform_2, window_bounds = array<i64: 15, 4, 1>}, {pipeline_mode = #tpu.pipeline_mode<synchronous>, transform_indices = @transform_3, window_bounds = array<i64: 2, 256>}, {transform_indices = @transform_4, window_bounds = array<i64: 1, 4, 256>}]} {
    %c0 = arith.constant 0 : index
    %c0_0 = arith.constant 0 : index
    %0 = vector.load %arg4[%c0, %c0_0] : memref<2x256xf32, #tpu.memory_space<vmem>>, vector<1x256xf32>
    %c1 = arith.constant 1 : index
    %c0_1 = arith.constant 0 : index
    %1 = vector.load %arg4[%c1, %c0_1] : memref<2x256xf32, #tpu.memory_space<vmem>>, vector<1x256xf32>
    %cst = arith.constant 0.000000e+00 : f32
    %2 = vector.broadcast %cst : f32 to vector<4x128xf32>
    %c0_2 = arith.constant 0 : index
    %c0_3 = arith.constant 0 : index
    %c0_4 = arith.constant 0 : index
    %3 = vector.load %arg1[%c0_2, %c0_3, %c0_4] : memref<1x4x256xf32, #tpu.memory_space<vmem>>, vector<1x4x256xf32>
    %4 = vector.shape_cast %3 : vector<1x4x256xf32> to vector<4x256xf32>
    %5 = tpu.concatenate %2, %4, %2 in 1 : vector<4x128xf32>, vector<4x256xf32>, vector<4x128xf32> -> vector<4x512xf32>
    %6 = vector.extract_strided_slice %5 {offsets = [0, 111], sizes = [4, 256], strides = [1, 1]} : vector<4x512xf32> to vector<4x256xf32>
    %7 = vector.broadcast %0 : vector<1x256xf32> to vector<4x256xf32>
    %8 = arith.mulf %6, %7 : vector<4x256xf32>
    %c0_5 = arith.constant 0 : index
    %c0_6 = arith.constant 0 : index
    %9 = vector.load %arg6[%c0_5, %c0_6] : memref<180x256xf32, #tpu.memory_space<vmem>>, vector<4x256xf32>
    tpu.vector_store %arg6[%c0_5, %c0_6], %8 {strides = array<i32>} : memref<180x256xf32, #tpu.memory_space<vmem>>, vector<4x256xf32>,
    %10 = vector.extract_strided_slice %5 {offsets = [0, 112], sizes = [4, 256], strides = [1, 1]} : vector<4x512xf32> to vector<4x256xf32>
    %c4 = arith.constant 4 : index
    %c0_7 = arith.constant 0 : index
    %11 = vector.load %arg6[%c4, %c0_7] : memref<180x256xf32, #tpu.memory_space<vmem>>, vector<4x256xf32>
    tpu.vector_store %arg6[%c4, %c0_7], %10 {strides = array<i32>} : memref<180x256xf32, #tpu.memory_space<vmem>>, vector<4x256xf32>,
    %12 = vector.extract_strided_slice %5 {offsets = [0, 113], sizes = [4, 256], strides = [1, 1]} : vector<4x512xf32> to vector<4x256xf32>
    %13 = vector.broadcast %1 : vector<1x256xf32> to vector<4x256xf32>
    %14 = arith.mulf %12, %13 : vector<4x256xf32>
    %c8 = arith.constant 8 : index
    %c0_8 = arith.constant 0 : index
    %15 = vector.load %arg6[%c8, %c0_8] : memref<180x256xf32, #tpu.memory_space<vmem>>, vector<4x256xf32>
    tpu.vector_store %arg6[%c8, %c0_8], %14 {strides = array<i32>} : memref<180x256xf32, #tpu.memory_space<vmem>>, vector<4x256xf32>,
    %16 = vector.extract_strided_slice %5 {offsets = [0, 127], sizes = [4, 256], strides = [1, 1]} : vector<4x512xf32> to vector<4x256xf32>
    %17 = vector.broadcast %0 : vector<1x256xf32> to vector<4x256xf32>
    %18 = arith.mulf %16, %17 : vector<4x256xf32>
    %c12 = arith.constant 12 : index
    %c0_9 = arith.constant 0 : index
    %19 = vector.load %arg6[%c12, %c0_9] : memref<180x256xf32, #tpu.memory_space<vmem>>, vector<4x256xf32>
    tpu.vector_store %arg6[%c12, %c0_9], %18 {strides = array<i32>} : memref<180x256xf32, #tpu.memory_space<vmem>>, vector<4x256xf32>,
    %20 = vector.extract_strided_slice %5 {offsets = [0, 128], sizes = [4, 256], strides = [1, 1]} : vector<4x512xf32> to vector<4x256xf32>
    %c16 = arith.constant 16 : index
    %c0_10 = arith.constant 0 : index
    %21 = vector.load %arg6[%c16, %c0_10] : memref<180x256xf32, #tpu.memory_space<vmem>>, vector<4x256xf32>
    tpu.vector_store %arg6[%c16, %c0_10], %20 {strides = array<i32>} : memref<180x256xf32, #tpu.memory_space<vmem>>, vector<4x256xf32>,
    %22 = vector.extract_strided_slice %5 {offsets = [0, 129], sizes = [4, 256], strides = [1, 1]} : vector<4x512xf32> to vector<4x256xf32>
    %23 = vector.broadcast %1 : vector<1x256xf32> to vector<4x256xf32>
    %24 = arith.mulf %22, %23 : vector<4x256xf32>
    %c20 = arith.constant 20 : index
    %c0_11 = arith.constant 0 : index
    %25 = vector.load %arg6[%c20, %c0_11] : memref<180x256xf32, #tpu.memory_space<vmem>>, vector<4x256xf32>
    tpu.vector_store %arg6[%c20, %c0_11], %24 {strides = array<i32>} : memref<180x256xf32, #tpu.memory_space<vmem>>, vector<4x256xf32>,
    %26 = vector.extract_strided_slice %5 {offsets = [0, 143], sizes = [4, 256], strides = [1, 1]} : vector<4x512xf32> to vector<4x256xf32>
    %27 = vector.broadcast %0 : vector<1x256xf32> to vector<4x256xf32>
    %28 = arith.mulf %26, %27 : vector<4x256xf32>
    %c24 = arith.constant 24 : index
    %c0_12 = arith.constant 0 : index
    %29 = vector.load %arg6[%c24, %c0_12] : memref<180x256xf32, #tpu.memory_space<vmem>>, vector<4x256xf32>
    tpu.vector_store %arg6[%c24, %c0_12], %28 {strides = array<i32>} : memref<180x256xf32, #tpu.memory_space<vmem>>, vector<4x256xf32>,
    %30 = vector.extract_strided_slice %5 {offsets = [0, 144], sizes = [4, 256], strides = [1, 1]} : vector<4x512xf32> to vector<4x256xf32>
    %c28 = arith.constant 28 : index
    %c0_13 = arith.constant 0 : index
    %31 = vector.load %arg6[%c28, %c0_13] : memref<180x256xf32, #tpu.memory_space<vmem>>, vector<4x256xf32>
    tpu.vector_store %arg6[%c28, %c0_13], %30 {strides = array<i32>} : memref<180x256xf32, #tpu.memory_space<vmem>>, vector<4x256xf32>,
    %32 = vector.extract_strided_slice %5 {offsets = [0, 145], sizes = [4, 256], strides = [1, 1]} : vector<4x512xf32> to vector<4x256xf32>
    %33 = vector.broadcast %1 : vector<1x256xf32> to vector<4x256xf32>
    %34 = arith.mulf %32, %33 : vector<4x256xf32>
    %c32 = arith.constant 32 : index
    %c0_14 = arith.constant 0 : index
    %35 = vector.load %arg6[%c32, %c0_14] : memref<180x256xf32, #tpu.memory_space<vmem>>, vector<4x256xf32>
    tpu.vector_store %arg6[%c32, %c0_14], %34 {strides = array<i32>} : memref<180x256xf32, #tpu.memory_space<vmem>>, vector<4x256xf32>,
    %c0_15 = arith.constant 0 : index
    %c0_16 = arith.constant 0 : index
    %c0_17 = arith.constant 0 : index
    %36 = vector.load %arg2[%c0_15, %c0_16, %c0_17] : memref<15x4x180xf32, #tpu.memory_space<vmem>>, vector<1x4x180xf32>
    %37 = vector.shape_cast %36 : vector<1x4x180xf32> to vector<4x180xf32>
    %38 = vector.extract_strided_slice %37 {offsets = [0, 0], sizes = [4, 36], strides = [1, 1]} : vector<4x180xf32> to vector<4x36xf32>
    %c0_18 = arith.constant 0 : index
    %c0_19 = arith.constant 0 : index
    %39 = vector.load %arg6[%c0_18, %c0_19] : memref<180x256xf32, #tpu.memory_space<vmem>>, vector<36x256xf32>
    %cst_20 = arith.constant dense<0.000000e+00> : vector<4x256xf32>
    %40 = tpu.matmul %38, %39, %cst_20 {dimension_numbers = #tpu.dot_dimension_numbers<[1], [0], [0], [1], [0, 0, 1, 1], [], []>} : vector<4x36xf32>, vector<36x256xf32>, vector<4x256xf32> -> vector<4x256xf32>
    %c0_21 = arith.constant 0 : index
    %c0_22 = arith.constant 0 : index
    %c0_23 = arith.constant 0 : index
    %41 = vector.load %arg3[%c0_21, %c0_22, %c0_23] : memref<15x4x1xf32, #tpu.memory_space<vmem>>, vector<1x4x1xf32>
    %42 = vector.shape_cast %41 : vector<1x4x1xf32> to vector<4x1xf32>
    %43 = vector.broadcast %42 : vector<4x1xf32> to vector<4x256xf32>
    %44 = arith.addf %40, %43 : vector<4x256xf32>
    %cst_24 = arith.constant 0.000000e+00 : f32
    %45 = vector.broadcast %cst_24 : f32 to vector<4x256xf32>
    %46 = arith.cmpf oge, %44, %45 : vector<4x256xf32>
    %cst_25 = arith.constant 0.00999999977 : f32
    %47 = vector.broadcast %cst_25 : f32 to vector<4x256xf32>
    %48 = arith.mulf %47, %44 : vector<4x256xf32>
    %49 = arith.select %46, %44, %48 : vector<4x256xi1>, vector<4x256xf32>
    %50 = tpu.concatenate %2, %49, %2 in 1 : vector<4x128xf32>, vector<4x256xf32>, vector<4x128xf32> -> vector<4x512xf32>
    %51 = vector.extract_strided_slice %50 {offsets = [0, 111], sizes = [4, 256], strides = [1, 1]} : vector<4x512xf32> to vector<4x256xf32>
    %52 = vector.broadcast %0 : vector<1x256xf32> to vector<4x256xf32>
    %53 = arith.mulf %51, %52 : vector<4x256xf32>
    %c36 = arith.constant 36 : index
    %c0_26 = arith.constant 0 : index
    %54 = vector.load %arg6[%c36, %c0_26] : memref<180x256xf32, #tpu.memory_space<vmem>>, vector<4x256xf32>
    tpu.vector_store %arg6[%c36, %c0_26], %53 {strides = array<i32>} : memref<180x256xf32, #tpu.memory_space<vmem>>, vector<4x256xf32>,
    %55 = vector.extract_strided_slice %50 {offsets = [0, 112], sizes = [4, 256], strides = [1, 1]} : vector<4x512xf32> to vector<4x256xf32>
    %c40 = arith.constant 40 : index
    %c0_27 = arith.constant 0 : index
    %56 = vector.load %arg6[%c40, %c0_27] : memref<180x256xf32, #tpu.memory_space<vmem>>, vector<4x256xf32>
    tpu.vector_store %arg6[%c40, %c0_27], %55 {strides = array<i32>} : memref<180x256xf32, #tpu.memory_space<vmem>>, vector<4x256xf32>,
    %57 = vector.extract_strided_slice %50 {offsets = [0, 113], sizes = [4, 256], strides = [1, 1]} : vector<4x512xf32> to vector<4x256xf32>
    %58 = vector.broadcast %1 : vector<1x256xf32> to vector<4x256xf32>
    %59 = arith.mulf %57, %58 : vector<4x256xf32>
    %c44 = arith.constant 44 : index
    %c0_28 = arith.constant 0 : index
    %60 = vector.load %arg6[%c44, %c0_28] : memref<180x256xf32, #tpu.memory_space<vmem>>, vector<4x256xf32>
    tpu.vector_store %arg6[%c44, %c0_28], %59 {strides = array<i32>} : memref<180x256xf32, #tpu.memory_space<vmem>>, vector<4x256xf32>,
    %61 = vector.extract_strided_slice %50 {offsets = [0, 127], sizes = [4, 256], strides = [1, 1]} : vector<4x512xf32> to vector<4x256xf32>
    %62 = vector.broadcast %0 : vector<1x256xf32> to vector<4x256xf32>
    %63 = arith.mulf %61, %62 : vector<4x256xf32>
    %c48 = arith.constant 48 : index
    %c0_29 = arith.constant 0 : index
    %64 = vector.load %arg6[%c48, %c0_29] : memref<180x256xf32, #tpu.memory_space<vmem>>, vector<4x256xf32>
    tpu.vector_store %arg6[%c48, %c0_29], %63 {strides = array<i32>} : memref<180x256xf32, #tpu.memory_space<vmem>>, vector<4x256xf32>,
    %65 = vector.extract_strided_slice %50 {offsets = [0, 128], sizes = [4, 256], strides = [1, 1]} : vector<4x512xf32> to vector<4x256xf32>
    %c52 = arith.constant 52 : index
    %c0_30 = arith.constant 0 : index
    %66 = vector.load %arg6[%c52, %c0_30] : memref<180x256xf32, #tpu.memory_space<vmem>>, vector<4x256xf32>
    tpu.vector_store %arg6[%c52, %c0_30], %65 {strides = array<i32>} : memref<180x256xf32, #tpu.memory_space<vmem>>, vector<4x256xf32>,
    %67 = vector.extract_strided_slice %50 {offsets = [0, 129], sizes = [4, 256], strides = [1, 1]} : vector<4x512xf32> to vector<4x256xf32>
    %68 = vector.broadcast %1 : vector<1x256xf32> to vector<4x256xf32>
    %69 = arith.mulf %67, %68 : vector<4x256xf32>
    %c56 = arith.constant 56 : index
    %c0_31 = arith.constant 0 : index
    %70 = vector.load %arg6[%c56, %c0_31] : memref<180x256xf32, #tpu.memory_space<vmem>>, vector<4x256xf32>
    tpu.vector_store %arg6[%c56, %c0_31], %69 {strides = array<i32>} : memref<180x256xf32, #tpu.memory_space<vmem>>, vector<4x256xf32>,
    %71 = vector.extract_strided_slice %50 {offsets = [0, 143], sizes = [4, 256], strides = [1, 1]} : vector<4x512xf32> to vector<4x256xf32>
    %72 = vector.broadcast %0 : vector<1x256xf32> to vector<4x256xf32>
    %73 = arith.mulf %71, %72 : vector<4x256xf32>
    %c60 = arith.constant 60 : index
    %c0_32 = arith.constant 0 : index
    %74 = vector.load %arg6[%c60, %c0_32] : memref<180x256xf32, #tpu.memory_space<vmem>>, vector<4x256xf32>
    tpu.vector_store %arg6[%c60, %c0_32], %73 {strides = array<i32>} : memref<180x256xf32, #tpu.memory_space<vmem>>, vector<4x256xf32>,
    %75 = vector.extract_strided_slice %50 {offsets = [0, 144], sizes = [4, 256], strides = [1, 1]} : vector<4x512xf32> to vector<4x256xf32>
    %c64 = arith.constant 64 : index
    %c0_33 = arith.constant 0 : index
    %76 = vector.load %arg6[%c64, %c0_33] : memref<180x256xf32, #tpu.memory_space<vmem>>, vector<4x256xf32>
    tpu.vector_store %arg6[%c64, %c0_33], %75 {strides = array<i32>} : memref<180x256xf32, #tpu.memory_space<vmem>>, vector<4x256xf32>,
    %77 = vector.extract_strided_slice %50 {offsets = [0, 145], sizes = [4, 256], strides = [1, 1]} : vector<4x512xf32> to vector<4x256xf32>
    %78 = vector.broadcast %1 : vector<1x256xf32> to vector<4x256xf32>
    %79 = arith.mulf %77, %78 : vector<4x256xf32>
    %c68 = arith.constant 68 : index
    %c0_34 = arith.constant 0 : index
    %80 = vector.load %arg6[%c68, %c0_34] : memref<180x256xf32, #tpu.memory_space<vmem>>, vector<4x256xf32>
    tpu.vector_store %arg6[%c68, %c0_34], %79 {strides = array<i32>} : memref<180x256xf32, #tpu.memory_space<vmem>>, vector<4x256xf32>,
    %c1_35 = arith.constant 1 : index
    %c0_36 = arith.constant 0 : index
    %c0_37 = arith.constant 0 : index
    %81 = vector.load %arg2[%c1_35, %c0_36, %c0_37] : memref<15x4x180xf32, #tpu.memory_space<vmem>>, vector<1x4x180xf32>
    %82 = vector.shape_cast %81 : vector<1x4x180xf32> to vector<4x180xf32>
    %83 = vector.extract_strided_slice %82 {offsets = [0, 0], sizes = [4, 72], strides = [1, 1]} : vector<4x180xf32> to vector<4x72xf32>
    %c0_38 = arith.constant 0 : index
    %c0_39 = arith.constant 0 : index
    %84 = vector.load %arg6[%c0_38, %c0_39] : memref<180x256xf32, #tpu.memory_space<vmem>>, vector<72x256xf32>
    %cst_40 = arith.constant dense<0.000000e+00> : vector<4x256xf32>
    %85 = tpu.matmul %83, %84, %cst_40 {dimension_numbers = #tpu.dot_dimension_numbers<[1], [0], [0], [1], [0, 0, 1, 1], [], []>} : vector<4x72xf32>, vector<72x256xf32>, vector<4x256xf32> -> vector<4x256xf32>
    %c1_41 = arith.constant 1 : index
    %c0_42 = arith.constant 0 : index
    %c0_43 = arith.constant 0 : index
    %86 = vector.load %arg3[%c1_41, %c0_42, %c0_43] : memref<15x4x1xf32, #tpu.memory_space<vmem>>, vector<1x4x1xf32>
    %87 = vector.shape_cast %86 : vector<1x4x1xf32> to vector<4x1xf32>
    %88 = vector.broadcast %87 : vector<4x1xf32> to vector<4x256xf32>
    %89 = arith.addf %85, %88 : vector<4x256xf32>
    %cst_44 = arith.constant 0.000000e+00 : f32
    %90 = vector.broadcast %cst_44 : f32 to vector<4x256xf32>
    %91 = arith.cmpf oge, %89, %90 : vector<4x256xf32>
    %cst_45 = arith.constant 0.00999999977 : f32
    %92 = vector.broadcast %cst_45 : f32 to vector<4x256xf32>
    %93 = arith.mulf %92, %89 : vector<4x256xf32>
    %94 = arith.select %91, %89, %93 : vector<4x256xi1>, vector<4x256xf32>
    %95 = tpu.concatenate %2, %94, %2 in 1 : vector<4x128xf32>, vector<4x256xf32>, vector<4x128xf32> -> vector<4x512xf32>
    %96 = vector.extract_strided_slice %95 {offsets = [0, 111], sizes = [4, 256], strides = [1, 1]} : vector<4x512xf32> to vector<4x256xf32>
    %97 = vector.broadcast %0 : vector<1x256xf32> to vector<4x256xf32>
    %98 = arith.mulf %96, %97 : vector<4x256xf32>
    %c72 = arith.constant 72 : index
    %c0_46 = arith.constant 0 : index
    %99 = vector.load %arg6[%c72, %c0_46] : memref<180x256xf32, #tpu.memory_space<vmem>>, vector<4x256xf32>
    tpu.vector_store %arg6[%c72, %c0_46], %98 {strides = array<i32>} : memref<180x256xf32, #tpu.memory_space<vmem>>, vector<4x256xf32>,
    %100 = vector.extract_strided_slice %95 {offsets = [0, 112], sizes = [4, 256], strides = [1, 1]} : vector<4x512xf32> to vector<4x256xf32>
    %c76 = arith.constant 76 : index
    %c0_47 = arith.constant 0 : index
    %101 = vector.load %arg6[%c76, %c0_47] : memref<180x256xf32, #tpu.memory_space<vmem>>, vector<4x256xf32>
    tpu.vector_store %arg6[%c76, %c0_47], %100 {strides = array<i32>} : memref<180x256xf32, #tpu.memory_space<vmem>>, vector<4x256xf32>,
    %102 = vector.extract_strided_slice %95 {offsets = [0, 113], sizes = [4, 256], strides = [1, 1]} : vector<4x512xf32> to vector<4x256xf32>
    %103 = vector.broadcast %1 : vector<1x256xf32> to vector<4x256xf32>
    %104 = arith.mulf %102, %103 : vector<4x256xf32>
    %c80 = arith.constant 80 : index
    %c0_48 = arith.constant 0 : index
    %105 = vector.load %arg6[%c80, %c0_48] : memref<180x256xf32, #tpu.memory_space<vmem>>, vector<4x256xf32>
    tpu.vector_store %arg6[%c80, %c0_48], %104 {strides = array<i32>} : memref<180x256xf32, #tpu.memory_space<vmem>>, vector<4x256xf32>,
    %106 = vector.extract_strided_slice %95 {offsets = [0, 127], sizes = [4, 256], strides = [1, 1]} : vector<4x512xf32> to vector<4x256xf32>
    %107 = vector.broadcast %0 : vector<1x256xf32> to vector<4x256xf32>
    %108 = arith.mulf %106, %107 : vector<4x256xf32>
    %c84 = arith.constant 84 : index
    %c0_49 = arith.constant 0 : index
    %109 = vector.load %arg6[%c84, %c0_49] : memref<180x256xf32, #tpu.memory_space<vmem>>, vector<4x256xf32>
    tpu.vector_store %arg6[%c84, %c0_49], %108 {strides = array<i32>} : memref<180x256xf32, #tpu.memory_space<vmem>>, vector<4x256xf32>,
    %110 = vector.extract_strided_slice %95 {offsets = [0, 128], sizes = [4, 256], strides = [1, 1]} : vector<4x512xf32> to vector<4x256xf32>
    %c88 = arith.constant 88 : index
    %c0_50 = arith.constant 0 : index
    %111 = vector.load %arg6[%c88, %c0_50] : memref<180x256xf32, #tpu.memory_space<vmem>>, vector<4x256xf32>
    tpu.vector_store %arg6[%c88, %c0_50], %110 {strides = array<i32>} : memref<180x256xf32, #tpu.memory_space<vmem>>, vector<4x256xf32>,
    %112 = vector.extract_strided_slice %95 {offsets = [0, 129], sizes = [4, 256], strides = [1, 1]} : vector<4x512xf32> to vector<4x256xf32>
    %113 = vector.broadcast %1 : vector<1x256xf32> to vector<4x256xf32>
    %114 = arith.mulf %112, %113 : vector<4x256xf32>
    %c92 = arith.constant 92 : index
    %c0_51 = arith.constant 0 : index
    %115 = vector.load %arg6[%c92, %c0_51] : memref<180x256xf32, #tpu.memory_space<vmem>>, vector<4x256xf32>
    tpu.vector_store %arg6[%c92, %c0_51], %114 {strides = array<i32>} : memref<180x256xf32, #tpu.memory_space<vmem>>, vector<4x256xf32>,
    %116 = vector.extract_strided_slice %95 {offsets = [0, 143], sizes = [4, 256], strides = [1, 1]} : vector<4x512xf32> to vector<4x256xf32>
    %117 = vector.broadcast %0 : vector<1x256xf32> to vector<4x256xf32>
    %118 = arith.mulf %116, %117 : vector<4x256xf32>
    %c96 = arith.constant 96 : index
    %c0_52 = arith.constant 0 : index
    %119 = vector.load %arg6[%c96, %c0_52] : memref<180x256xf32, #tpu.memory_space<vmem>>, vector<4x256xf32>
    tpu.vector_store %arg6[%c96, %c0_52], %118 {strides = array<i32>} : memref<180x256xf32, #tpu.memory_space<vmem>>, vector<4x256xf32>,
    %120 = vector.extract_strided_slice %95 {offsets = [0, 144], sizes = [4, 256], strides = [1, 1]} : vector<4x512xf32> to vector<4x256xf32>
    %c100 = arith.constant 100 : index
    %c0_53 = arith.constant 0 : index
    %121 = vector.load %arg6[%c100, %c0_53] : memref<180x256xf32, #tpu.memory_space<vmem>>, vector<4x256xf32>
    tpu.vector_store %arg6[%c100, %c0_53], %120 {strides = array<i32>} : memref<180x256xf32, #tpu.memory_space<vmem>>, vector<4x256xf32>,
    %122 = vector.extract_strided_slice %95 {offsets = [0, 145], sizes = [4, 256], strides = [1, 1]} : vector<4x512xf32> to vector<4x256xf32>
    %123 = vector.broadcast %1 : vector<1x256xf32> to vector<4x256xf32>
    %124 = arith.mulf %122, %123 : vector<4x256xf32>
    %c104 = arith.constant 104 : index
    %c0_54 = arith.constant 0 : index
    %125 = vector.load %arg6[%c104, %c0_54] : memref<180x256xf32, #tpu.memory_space<vmem>>, vector<4x256xf32>
    tpu.vector_store %arg6[%c104, %c0_54], %124 {strides = array<i32>} : memref<180x256xf32, #tpu.memory_space<vmem>>, vector<4x256xf32>,
    %c2 = arith.constant 2 : index
    %c0_55 = arith.constant 0 : index
    %c0_56 = arith.constant 0 : index
    %126 = vector.load %arg2[%c2, %c0_55, %c0_56] : memref<15x4x180xf32, #tpu.memory_space<vmem>>, vector<1x4x180xf32>
    %127 = vector.shape_cast %126 : vector<1x4x180xf32> to vector<4x180xf32>
    %128 = vector.extract_strided_slice %127 {offsets = [0, 0], sizes = [4, 108], strides = [1, 1]} : vector<4x180xf32> to vector<4x108xf32>
    %c0_57 = arith.constant 0 : index
    %c0_58 = arith.constant 0 : index
    %129 = vector.load %arg6[%c0_57, %c0_58] : memref<180x256xf32, #tpu.memory_space<vmem>>, vector<108x256xf32>
    %cst_59 = arith.constant dense<0.000000e+00> : vector<4x256xf32>
    %130 = tpu.matmul %128, %129, %cst_59 {dimension_numbers = #tpu.dot_dimension_numbers<[1], [0], [0], [1], [0, 0, 1, 1], [], []>} : vector<4x108xf32>, vector<108x256xf32>, vector<4x256xf32> -> vector<4x256xf32>
    %c2_60 = arith.constant 2 : index
    %c0_61 = arith.constant 0 : index
    %c0_62 = arith.constant 0 : index
    %131 = vector.load %arg3[%c2_60, %c0_61, %c0_62] : memref<15x4x1xf32, #tpu.memory_space<vmem>>, vector<1x4x1xf32>
    %132 = vector.shape_cast %131 : vector<1x4x1xf32> to vector<4x1xf32>
    %133 = vector.broadcast %132 : vector<4x1xf32> to vector<4x256xf32>
    %134 = arith.addf %130, %133 : vector<4x256xf32>
    %cst_63 = arith.constant 0.000000e+00 : f32
    %135 = vector.broadcast %cst_63 : f32 to vector<4x256xf32>
    %136 = arith.cmpf oge, %134, %135 : vector<4x256xf32>
    %cst_64 = arith.constant 0.00999999977 : f32
    %137 = vector.broadcast %cst_64 : f32 to vector<4x256xf32>
    %138 = arith.mulf %137, %134 : vector<4x256xf32>
    %139 = arith.select %136, %134, %138 : vector<4x256xi1>, vector<4x256xf32>
    %140 = tpu.concatenate %2, %139, %2 in 1 : vector<4x128xf32>, vector<4x256xf32>, vector<4x128xf32> -> vector<4x512xf32>
    %141 = vector.extract_strided_slice %140 {offsets = [0, 111], sizes = [4, 256], strides = [1, 1]} : vector<4x512xf32> to vector<4x256xf32>
    %142 = vector.broadcast %0 : vector<1x256xf32> to vector<4x256xf32>
    %143 = arith.mulf %141, %142 : vector<4x256xf32>
    %c108 = arith.constant 108 : index
    %c0_65 = arith.constant 0 : index
    %144 = vector.load %arg6[%c108, %c0_65] : memref<180x256xf32, #tpu.memory_space<vmem>>, vector<4x256xf32>
    tpu.vector_store %arg6[%c108, %c0_65], %143 {strides = array<i32>} : memref<180x256xf32, #tpu.memory_space<vmem>>, vector<4x256xf32>,
    %145 = vector.extract_strided_slice %140 {offsets = [0, 112], sizes = [4, 256], strides = [1, 1]} : vector<4x512xf32> to vector<4x256xf32>
    %c112 = arith.constant 112 : index
    %c0_66 = arith.constant 0 : index
    %146 = vector.load %arg6[%c112, %c0_66] : memref<180x256xf32, #tpu.memory_space<vmem>>, vector<4x256xf32>
    tpu.vector_store %arg6[%c112, %c0_66], %145 {strides = array<i32>} : memref<180x256xf32, #tpu.memory_space<vmem>>, vector<4x256xf32>,
    %147 = vector.extract_strided_slice %140 {offsets = [0, 113], sizes = [4, 256], strides = [1, 1]} : vector<4x512xf32> to vector<4x256xf32>
    %148 = vector.broadcast %1 : vector<1x256xf32> to vector<4x256xf32>
    %149 = arith.mulf %147, %148 : vector<4x256xf32>
    %c116 = arith.constant 116 : index
    %c0_67 = arith.constant 0 : index
    %150 = vector.load %arg6[%c116, %c0_67] : memref<180x256xf32, #tpu.memory_space<vmem>>, vector<4x256xf32>
    tpu.vector_store %arg6[%c116, %c0_67], %149 {strides = array<i32>} : memref<180x256xf32, #tpu.memory_space<vmem>>, vector<4x256xf32>,
    %151 = vector.extract_strided_slice %140 {offsets = [0, 127], sizes = [4, 256], strides = [1, 1]} : vector<4x512xf32> to vector<4x256xf32>
    %152 = vector.broadcast %0 : vector<1x256xf32> to vector<4x256xf32>
    %153 = arith.mulf %151, %152 : vector<4x256xf32>
    %c120 = arith.constant 120 : index
    %c0_68 = arith.constant 0 : index
    %154 = vector.load %arg6[%c120, %c0_68] : memref<180x256xf32, #tpu.memory_space<vmem>>, vector<4x256xf32>
    tpu.vector_store %arg6[%c120, %c0_68], %153 {strides = array<i32>} : memref<180x256xf32, #tpu.memory_space<vmem>>, vector<4x256xf32>,
    %155 = vector.extract_strided_slice %140 {offsets = [0, 128], sizes = [4, 256], strides = [1, 1]} : vector<4x512xf32> to vector<4x256xf32>
    %c124 = arith.constant 124 : index
    %c0_69 = arith.constant 0 : index
    %156 = vector.load %arg6[%c124, %c0_69] : memref<180x256xf32, #tpu.memory_space<vmem>>, vector<4x256xf32>
    tpu.vector_store %arg6[%c124, %c0_69], %155 {strides = array<i32>} : memref<180x256xf32, #tpu.memory_space<vmem>>, vector<4x256xf32>,
    %157 = vector.extract_strided_slice %140 {offsets = [0, 129], sizes = [4, 256], strides = [1, 1]} : vector<4x512xf32> to vector<4x256xf32>
    %158 = vector.broadcast %1 : vector<1x256xf32> to vector<4x256xf32>
    %159 = arith.mulf %157, %158 : vector<4x256xf32>
    %c128 = arith.constant 128 : index
    %c0_70 = arith.constant 0 : index
    %160 = vector.load %arg6[%c128, %c0_70] : memref<180x256xf32, #tpu.memory_space<vmem>>, vector<4x256xf32>
    tpu.vector_store %arg6[%c128, %c0_70], %159 {strides = array<i32>} : memref<180x256xf32, #tpu.memory_space<vmem>>, vector<4x256xf32>,
    %161 = vector.extract_strided_slice %140 {offsets = [0, 143], sizes = [4, 256], strides = [1, 1]} : vector<4x512xf32> to vector<4x256xf32>
    %162 = vector.broadcast %0 : vector<1x256xf32> to vector<4x256xf32>
    %163 = arith.mulf %161, %162 : vector<4x256xf32>
    %c132 = arith.constant 132 : index
    %c0_71 = arith.constant 0 : index
    %164 = vector.load %arg6[%c132, %c0_71] : memref<180x256xf32, #tpu.memory_space<vmem>>, vector<4x256xf32>
    tpu.vector_store %arg6[%c132, %c0_71], %163 {strides = array<i32>} : memref<180x256xf32, #tpu.memory_space<vmem>>, vector<4x256xf32>,
    %165 = vector.extract_strided_slice %140 {offsets = [0, 144], sizes = [4, 256], strides = [1, 1]} : vector<4x512xf32> to vector<4x256xf32>
    %c136 = arith.constant 136 : index
    %c0_72 = arith.constant 0 : index
    %166 = vector.load %arg6[%c136, %c0_72] : memref<180x256xf32, #tpu.memory_space<vmem>>, vector<4x256xf32>
    tpu.vector_store %arg6[%c136, %c0_72], %165 {strides = array<i32>} : memref<180x256xf32, #tpu.memory_space<vmem>>, vector<4x256xf32>,
    %167 = vector.extract_strided_slice %140 {offsets = [0, 145], sizes = [4, 256], strides = [1, 1]} : vector<4x512xf32> to vector<4x256xf32>
    %168 = vector.broadcast %1 : vector<1x256xf32> to vector<4x256xf32>
    %169 = arith.mulf %167, %168 : vector<4x256xf32>
    %c140 = arith.constant 140 : index
    %c0_73 = arith.constant 0 : index
    %170 = vector.load %arg6[%c140, %c0_73] : memref<180x256xf32, #tpu.memory_space<vmem>>, vector<4x256xf32>
    tpu.vector_store %arg6[%c140, %c0_73], %169 {strides = array<i32>} : memref<180x256xf32, #tpu.memory_space<vmem>>, vector<4x256xf32>,
    %c3 = arith.constant 3 : index
    %c0_74 = arith.constant 0 : index
    %c0_75 = arith.constant 0 : index
    %171 = vector.load %arg2[%c3, %c0_74, %c0_75] : memref<15x4x180xf32, #tpu.memory_space<vmem>>, vector<1x4x180xf32>
    %172 = vector.shape_cast %171 : vector<1x4x180xf32> to vector<4x180xf32>
    %173 = vector.extract_strided_slice %172 {offsets = [0, 0], sizes = [4, 144], strides = [1, 1]} : vector<4x180xf32> to vector<4x144xf32>
    %c0_76 = arith.constant 0 : index
    %c0_77 = arith.constant 0 : index
    %174 = vector.load %arg6[%c0_76, %c0_77] : memref<180x256xf32, #tpu.memory_space<vmem>>, vector<144x256xf32>
    %cst_78 = arith.constant dense<0.000000e+00> : vector<4x256xf32>
    %175 = tpu.matmul %173, %174, %cst_78 {dimension_numbers = #tpu.dot_dimension_numbers<[1], [0], [0], [1], [0, 0, 1, 1], [], []>} : vector<4x144xf32>, vector<144x256xf32>, vector<4x256xf32> -> vector<4x256xf32>
    %c3_79 = arith.constant 3 : index
    %c0_80 = arith.constant 0 : index
    %c0_81 = arith.constant 0 : index
    %176 = vector.load %arg3[%c3_79, %c0_80, %c0_81] : memref<15x4x1xf32, #tpu.memory_space<vmem>>, vector<1x4x1xf32>
    %177 = vector.shape_cast %176 : vector<1x4x1xf32> to vector<4x1xf32>
    %178 = vector.broadcast %177 : vector<4x1xf32> to vector<4x256xf32>
    %179 = arith.addf %175, %178 : vector<4x256xf32>
    %cst_82 = arith.constant 0.000000e+00 : f32
    %180 = vector.broadcast %cst_82 : f32 to vector<4x256xf32>
    %181 = arith.cmpf oge, %179, %180 : vector<4x256xf32>
    %cst_83 = arith.constant 0.00999999977 : f32
    %182 = vector.broadcast %cst_83 : f32 to vector<4x256xf32>
    %183 = arith.mulf %182, %179 : vector<4x256xf32>
    %184 = arith.select %181, %179, %183 : vector<4x256xi1>, vector<4x256xf32>
    %185 = tpu.concatenate %2, %184, %2 in 1 : vector<4x128xf32>, vector<4x256xf32>, vector<4x128xf32> -> vector<4x512xf32>
    %186 = vector.extract_strided_slice %185 {offsets = [0, 111], sizes = [4, 256], strides = [1, 1]} : vector<4x512xf32> to vector<4x256xf32>
    %187 = vector.broadcast %0 : vector<1x256xf32> to vector<4x256xf32>
    %188 = arith.mulf %186, %187 : vector<4x256xf32>
    %c144 = arith.constant 144 : index
    %c0_84 = arith.constant 0 : index
    %189 = vector.load %arg6[%c144, %c0_84] : memref<180x256xf32, #tpu.memory_space<vmem>>, vector<4x256xf32>
    tpu.vector_store %arg6[%c144, %c0_84], %188 {strides = array<i32>} : memref<180x256xf32, #tpu.memory_space<vmem>>, vector<4x256xf32>,
    %190 = vector.extract_strided_slice %185 {offsets = [0, 112], sizes = [4, 256], strides = [1, 1]} : vector<4x512xf32> to vector<4x256xf32>
    %c148 = arith.constant 148 : index
    %c0_85 = arith.constant 0 : index
    %191 = vector.load %arg6[%c148, %c0_85] : memref<180x256xf32, #tpu.memory_space<vmem>>, vector<4x256xf32>
    tpu.vector_store %arg6[%c148, %c0_85], %190 {strides = array<i32>} : memref<180x256xf32, #tpu.memory_space<vmem>>, vector<4x256xf32>,
    %192 = vector.extract_strided_slice %185 {offsets = [0, 113], sizes = [4, 256], strides = [1, 1]} : vector<4x512xf32> to vector<4x256xf32>
    %193 = vector.broadcast %1 : vector<1x256xf32> to vector<4x256xf32>
    %194 = arith.mulf %192, %193 : vector<4x256xf32>
    %c152 = arith.constant 152 : index
    %c0_86 = arith.constant 0 : index
    %195 = vector.load %arg6[%c152, %c0_86] : memref<180x256xf32, #tpu.memory_space<vmem>>, vector<4x256xf32>
    tpu.vector_store %arg6[%c152, %c0_86], %194 {strides = array<i32>} : memref<180x256xf32, #tpu.memory_space<vmem>>, vector<4x256xf32>,
    %196 = vector.extract_strided_slice %185 {offsets = [0, 127], sizes = [4, 256], strides = [1, 1]} : vector<4x512xf32> to vector<4x256xf32>
    %197 = vector.broadcast %0 : vector<1x256xf32> to vector<4x256xf32>
    %198 = arith.mulf %196, %197 : vector<4x256xf32>
    %c156 = arith.constant 156 : index
    %c0_87 = arith.constant 0 : index
    %199 = vector.load %arg6[%c156, %c0_87] : memref<180x256xf32, #tpu.memory_space<vmem>>, vector<4x256xf32>
    tpu.vector_store %arg6[%c156, %c0_87], %198 {strides = array<i32>} : memref<180x256xf32, #tpu.memory_space<vmem>>, vector<4x256xf32>,
    %200 = vector.extract_strided_slice %185 {offsets = [0, 128], sizes = [4, 256], strides = [1, 1]} : vector<4x512xf32> to vector<4x256xf32>
    %c160 = arith.constant 160 : index
    %c0_88 = arith.constant 0 : index
    %201 = vector.load %arg6[%c160, %c0_88] : memref<180x256xf32, #tpu.memory_space<vmem>>, vector<4x256xf32>
    tpu.vector_store %arg6[%c160, %c0_88], %200 {strides = array<i32>} : memref<180x256xf32, #tpu.memory_space<vmem>>, vector<4x256xf32>,
    %202 = vector.extract_strided_slice %185 {offsets = [0, 129], sizes = [4, 256], strides = [1, 1]} : vector<4x512xf32> to vector<4x256xf32>
    %203 = vector.broadcast %1 : vector<1x256xf32> to vector<4x256xf32>
    %204 = arith.mulf %202, %203 : vector<4x256xf32>
    %c164 = arith.constant 164 : index
    %c0_89 = arith.constant 0 : index
    %205 = vector.load %arg6[%c164, %c0_89] : memref<180x256xf32, #tpu.memory_space<vmem>>, vector<4x256xf32>
    tpu.vector_store %arg6[%c164, %c0_89], %204 {strides = array<i32>} : memref<180x256xf32, #tpu.memory_space<vmem>>, vector<4x256xf32>,
    %206 = vector.extract_strided_slice %185 {offsets = [0, 143], sizes = [4, 256], strides = [1, 1]} : vector<4x512xf32> to vector<4x256xf32>
    %207 = vector.broadcast %0 : vector<1x256xf32> to vector<4x256xf32>
    %208 = arith.mulf %206, %207 : vector<4x256xf32>
    %c168 = arith.constant 168 : index
    %c0_90 = arith.constant 0 : index
    %209 = vector.load %arg6[%c168, %c0_90] : memref<180x256xf32, #tpu.memory_space<vmem>>, vector<4x256xf32>
    tpu.vector_store %arg6[%c168, %c0_90], %208 {strides = array<i32>} : memref<180x256xf32, #tpu.memory_space<vmem>>, vector<4x256xf32>,
    %210 = vector.extract_strided_slice %185 {offsets = [0, 144], sizes = [4, 256], strides = [1, 1]} : vector<4x512xf32> to vector<4x256xf32>
    %c172 = arith.constant 172 : index
    %c0_91 = arith.constant 0 : index
    %211 = vector.load %arg6[%c172, %c0_91] : memref<180x256xf32, #tpu.memory_space<vmem>>, vector<4x256xf32>
    tpu.vector_store %arg6[%c172, %c0_91], %210 {strides = array<i32>} : memref<180x256xf32, #tpu.memory_space<vmem>>, vector<4x256xf32>,
    %212 = vector.extract_strided_slice %185 {offsets = [0, 145], sizes = [4, 256], strides = [1, 1]} : vector<4x512xf32> to vector<4x256xf32>
    %213 = vector.broadcast %1 : vector<1x256xf32> to vector<4x256xf32>
    %214 = arith.mulf %212, %213 : vector<4x256xf32>
    %c176 = arith.constant 176 : index
    %c0_92 = arith.constant 0 : index
    %215 = vector.load %arg6[%c176, %c0_92] : memref<180x256xf32, #tpu.memory_space<vmem>>, vector<4x256xf32>
    tpu.vector_store %arg6[%c176, %c0_92], %214 {strides = array<i32>} : memref<180x256xf32, #tpu.memory_space<vmem>>, vector<4x256xf32>,
    %c4_93 = arith.constant 4 : index
    %c0_94 = arith.constant 0 : index
    %c0_95 = arith.constant 0 : index
    %216 = vector.load %arg2[%c4_93, %c0_94, %c0_95] : memref<15x4x180xf32, #tpu.memory_space<vmem>>, vector<1x4x180xf32>
    %217 = vector.shape_cast %216 : vector<1x4x180xf32> to vector<4x180xf32>
    %c0_96 = arith.constant 0 : index
    %c0_97 = arith.constant 0 : index
    %218 = vector.load %arg6[%c0_96, %c0_97] : memref<180x256xf32, #tpu.memory_space<vmem>>, vector<180x256xf32>
    %cst_98 = arith.constant dense<0.000000e+00> : vector<4x256xf32>
    %219 = tpu.matmul %217, %218, %cst_98 {dimension_numbers = #tpu.dot_dimension_numbers<[1], [0], [0], [1], [0, 0, 1, 1], [], []>} : vector<4x180xf32>, vector<180x256xf32>, vector<4x256xf32> -> vector<4x256xf32>
    %c4_99 = arith.constant 4 : index
    %c0_100 = arith.constant 0 : index
    %c0_101 = arith.constant 0 : index
    %220 = vector.load %arg3[%c4_99, %c0_100, %c0_101] : memref<15x4x1xf32, #tpu.memory_space<vmem>>, vector<1x4x1xf32>
    %221 = vector.shape_cast %220 : vector<1x4x1xf32> to vector<4x1xf32>
    %222 = vector.broadcast %221 : vector<4x1xf32> to vector<4x256xf32>
    %223 = arith.addf %219, %222 : vector<4x256xf32>
    %cst_102 = arith.constant 2.000000e-01 : f32
    %224 = vector.broadcast %cst_102 : f32 to vector<4x256xf32>
    %225 = arith.mulf %223, %224 : vector<4x256xf32>
    %226 = arith.addf %225, %4 : vector<4x256xf32>
    %227 = tpu.concatenate %2, %226, %2 in 1 : vector<4x128xf32>, vector<4x256xf32>, vector<4x128xf32> -> vector<4x512xf32>
    %228 = vector.extract_strided_slice %227 {offsets = [0, 111], sizes = [4, 256], strides = [1, 1]} : vector<4x512xf32> to vector<4x256xf32>
    %229 = vector.broadcast %0 : vector<1x256xf32> to vector<4x256xf32>
    %230 = arith.mulf %228, %229 : vector<4x256xf32>
    %c0_103 = arith.constant 0 : index
    %c0_104 = arith.constant 0 : index
    %231 = vector.load %arg6[%c0_103, %c0_104] : memref<180x256xf32, #tpu.memory_space<vmem>>, vector<4x256xf32>
    tpu.vector_store %arg6[%c0_103, %c0_104], %230 {strides = array<i32>} : memref<180x256xf32, #tpu.memory_space<vmem>>, vector<4x256xf32>,
    %232 = vector.extract_strided_slice %227 {offsets = [0, 112], sizes = [4, 256], strides = [1, 1]} : vector<4x512xf32> to vector<4x256xf32>
    %c4_105 = arith.constant 4 : index
    %c0_106 = arith.constant 0 : index
    %233 = vector.load %arg6[%c4_105, %c0_106] : memref<180x256xf32, #tpu.memory_space<vmem>>, vector<4x256xf32>
    tpu.vector_store %arg6[%c4_105, %c0_106], %232 {strides = array<i32>} : memref<180x256xf32, #tpu.memory_space<vmem>>, vector<4x256xf32>,
    %234 = vector.extract_strided_slice %227 {offsets = [0, 113], sizes = [4, 256], strides = [1, 1]} : vector<4x512xf32> to vector<4x256xf32>
    %235 = vector.broadcast %1 : vector<1x256xf32> to vector<4x256xf32>
    %236 = arith.mulf %234, %235 : vector<4x256xf32>
    %c8_107 = arith.constant 8 : index
    %c0_108 = arith.constant 0 : index
    %237 = vector.load %arg6[%c8_107, %c0_108] : memref<180x256xf32, #tpu.memory_space<vmem>>, vector<4x256xf32>
    tpu.vector_store %arg6[%c8_107, %c0_108], %236 {strides = array<i32>} : memref<180x256xf32, #tpu.memory_space<vmem>>, vector<4x256xf32>,
    %238 = vector.extract_strided_slice %227 {offsets = [0, 127], sizes = [4, 256], strides = [1, 1]} : vector<4x512xf32> to vector<4x256xf32>
    %239 = vector.broadcast %0 : vector<1x256xf32> to vector<4x256xf32>
    %240 = arith.mulf %238, %239 : vector<4x256xf32>
    %c12_109 = arith.constant 12 : index
    %c0_110 = arith.constant 0 : index
    %241 = vector.load %arg6[%c12_109, %c0_110] : memref<180x256xf32, #tpu.memory_space<vmem>>, vector<4x256xf32>
    tpu.vector_store %arg6[%c12_109, %c0_110], %240 {strides = array<i32>} : memref<180x256xf32, #tpu.memory_space<vmem>>, vector<4x256xf32>,
    %242 = vector.extract_strided_slice %227 {offsets = [0, 128], sizes = [4, 256], strides = [1, 1]} : vector<4x512xf32> to vector<4x256xf32>
    %c16_111 = arith.constant 16 : index
    %c0_112 = arith.constant 0 : index
    %243 = vector.load %arg6[%c16_111, %c0_112] : memref<180x256xf32, #tpu.memory_space<vmem>>, vector<4x256xf32>
    tpu.vector_store %arg6[%c16_111, %c0_112], %242 {strides = array<i32>} : memref<180x256xf32, #tpu.memory_space<vmem>>, vector<4x256xf32>,
    %244 = vector.extract_strided_slice %227 {offsets = [0, 129], sizes = [4, 256], strides = [1, 1]} : vector<4x512xf32> to vector<4x256xf32>
    %245 = vector.broadcast %1 : vector<1x256xf32> to vector<4x256xf32>
    %246 = arith.mulf %244, %245 : vector<4x256xf32>
    %c20_113 = arith.constant 20 : index
    %c0_114 = arith.constant 0 : index
    %247 = vector.load %arg6[%c20_113, %c0_114] : memref<180x256xf32, #tpu.memory_space<vmem>>, vector<4x256xf32>
    tpu.vector_store %arg6[%c20_113, %c0_114], %246 {strides = array<i32>} : memref<180x256xf32, #tpu.memory_space<vmem>>, vector<4x256xf32>,
    %248 = vector.extract_strided_slice %227 {offsets = [0, 143], sizes = [4, 256], strides = [1, 1]} : vector<4x512xf32> to vector<4x256xf32>
    %249 = vector.broadcast %0 : vector<1x256xf32> to vector<4x256xf32>
    %250 = arith.mulf %248, %249 : vector<4x256xf32>
    %c24_115 = arith.constant 24 : index
    %c0_116 = arith.constant 0 : index
    %251 = vector.load %arg6[%c24_115, %c0_116] : memref<180x256xf32, #tpu.memory_space<vmem>>, vector<4x256xf32>
    tpu.vector_store %arg6[%c24_115, %c0_116], %250 {strides = array<i32>} : memref<180x256xf32, #tpu.memory_space<vmem>>, vector<4x256xf32>,
    %252 = vector.extract_strided_slice %227 {offsets = [0, 144], sizes = [4, 256], strides = [1, 1]} : vector<4x512xf32> to vector<4x256xf32>
    %c28_117 = arith.constant 28 : index
    %c0_118 = arith.constant 0 : index
    %253 = vector.load %arg6[%c28_117, %c0_118] : memref<180x256xf32, #tpu.memory_space<vmem>>, vector<4x256xf32>
    tpu.vector_store %arg6[%c28_117, %c0_118], %252 {strides = array<i32>} : memref<180x256xf32, #tpu.memory_space<vmem>>, vector<4x256xf32>,
    %254 = vector.extract_strided_slice %227 {offsets = [0, 145], sizes = [4, 256], strides = [1, 1]} : vector<4x512xf32> to vector<4x256xf32>
    %255 = vector.broadcast %1 : vector<1x256xf32> to vector<4x256xf32>
    %256 = arith.mulf %254, %255 : vector<4x256xf32>
    %c32_119 = arith.constant 32 : index
    %c0_120 = arith.constant 0 : index
    %257 = vector.load %arg6[%c32_119, %c0_120] : memref<180x256xf32, #tpu.memory_space<vmem>>, vector<4x256xf32>
    tpu.vector_store %arg6[%c32_119, %c0_120], %256 {strides = array<i32>} : memref<180x256xf32, #tpu.memory_space<vmem>>, vector<4x256xf32>,
    %c5 = arith.constant 5 : index
    %c0_121 = arith.constant 0 : index
    %c0_122 = arith.constant 0 : index
    %258 = vector.load %arg2[%c5, %c0_121, %c0_122] : memref<15x4x180xf32, #tpu.memory_space<vmem>>, vector<1x4x180xf32>
    %259 = vector.shape_cast %258 : vector<1x4x180xf32> to vector<4x180xf32>
    %260 = vector.extract_strided_slice %259 {offsets = [0, 0], sizes = [4, 36], strides = [1, 1]} : vector<4x180xf32> to vector<4x36xf32>
    %c0_123 = arith.constant 0 : index
    %c0_124 = arith.constant 0 : index
    %261 = vector.load %arg6[%c0_123, %c0_124] : memref<180x256xf32, #tpu.memory_space<vmem>>, vector<36x256xf32>
    %cst_125 = arith.constant dense<0.000000e+00> : vector<4x256xf32>
    %262 = tpu.matmul %260, %261, %cst_125 {dimension_numbers = #tpu.dot_dimension_numbers<[1], [0], [0], [1], [0, 0, 1, 1], [], []>} : vector<4x36xf32>, vector<36x256xf32>, vector<4x256xf32> -> vector<4x256xf32>
    %c5_126 = arith.constant 5 : index
    %c0_127 = arith.constant 0 : index
    %c0_128 = arith.constant 0 : index
    %263 = vector.load %arg3[%c5_126, %c0_127, %c0_128] : memref<15x4x1xf32, #tpu.memory_space<vmem>>, vector<1x4x1xf32>
    %264 = vector.shape_cast %263 : vector<1x4x1xf32> to vector<4x1xf32>
    %265 = vector.broadcast %264 : vector<4x1xf32> to vector<4x256xf32>
    %266 = arith.addf %262, %265 : vector<4x256xf32>
    %cst_129 = arith.constant 0.000000e+00 : f32
    %267 = vector.broadcast %cst_129 : f32 to vector<4x256xf32>
    %268 = arith.cmpf oge, %266, %267 : vector<4x256xf32>
    %cst_130 = arith.constant 0.00999999977 : f32
    %269 = vector.broadcast %cst_130 : f32 to vector<4x256xf32>
    %270 = arith.mulf %269, %266 : vector<4x256xf32>
    %271 = arith.select %268, %266, %270 : vector<4x256xi1>, vector<4x256xf32>
    %272 = tpu.concatenate %2, %271, %2 in 1 : vector<4x128xf32>, vector<4x256xf32>, vector<4x128xf32> -> vector<4x512xf32>
    %273 = vector.extract_strided_slice %272 {offsets = [0, 111], sizes = [4, 256], strides = [1, 1]} : vector<4x512xf32> to vector<4x256xf32>
    %274 = vector.broadcast %0 : vector<1x256xf32> to vector<4x256xf32>
    %275 = arith.mulf %273, %274 : vector<4x256xf32>
    %c36_131 = arith.constant 36 : index
    %c0_132 = arith.constant 0 : index
    %276 = vector.load %arg6[%c36_131, %c0_132] : memref<180x256xf32, #tpu.memory_space<vmem>>, vector<4x256xf32>
    tpu.vector_store %arg6[%c36_131, %c0_132], %275 {strides = array<i32>} : memref<180x256xf32, #tpu.memory_space<vmem>>, vector<4x256xf32>,
    %277 = vector.extract_strided_slice %272 {offsets = [0, 112], sizes = [4, 256], strides = [1, 1]} : vector<4x512xf32> to vector<4x256xf32>
    %c40_133 = arith.constant 40 : index
    %c0_134 = arith.constant 0 : index
    %278 = vector.load %arg6[%c40_133, %c0_134] : memref<180x256xf32, #tpu.memory_space<vmem>>, vector<4x256xf32>
    tpu.vector_store %arg6[%c40_133, %c0_134], %277 {strides = array<i32>} : memref<180x256xf32, #tpu.memory_space<vmem>>, vector<4x256xf32>,
    %279 = vector.extract_strided_slice %272 {offsets = [0, 113], sizes = [4, 256], strides = [1, 1]} : vector<4x512xf32> to vector<4x256xf32>
    %280 = vector.broadcast %1 : vector<1x256xf32> to vector<4x256xf32>
    %281 = arith.mulf %279, %280 : vector<4x256xf32>
    %c44_135 = arith.constant 44 : index
    %c0_136 = arith.constant 0 : index
    %282 = vector.load %arg6[%c44_135, %c0_136] : memref<180x256xf32, #tpu.memory_space<vmem>>, vector<4x256xf32>
    tpu.vector_store %arg6[%c44_135, %c0_136], %281 {strides = array<i32>} : memref<180x256xf32, #tpu.memory_space<vmem>>, vector<4x256xf32>,
    %283 = vector.extract_strided_slice %272 {offsets = [0, 127], sizes = [4, 256], strides = [1, 1]} : vector<4x512xf32> to vector<4x256xf32>
    %284 = vector.broadcast %0 : vector<1x256xf32> to vector<4x256xf32>
    %285 = arith.mulf %283, %284 : vector<4x256xf32>
    %c48_137 = arith.constant 48 : index
    %c0_138 = arith.constant 0 : index
    %286 = vector.load %arg6[%c48_137, %c0_138] : memref<180x256xf32, #tpu.memory_space<vmem>>, vector<4x256xf32>
    tpu.vector_store %arg6[%c48_137, %c0_138], %285 {strides = array<i32>} : memref<180x256xf32, #tpu.memory_space<vmem>>, vector<4x256xf32>,
    %287 = vector.extract_strided_slice %272 {offsets = [0, 128], sizes = [4, 256], strides = [1, 1]} : vector<4x512xf32> to vector<4x256xf32>
    %c52_139 = arith.constant 52 : index
    %c0_140 = arith.constant 0 : index
    %288 = vector.load %arg6[%c52_139, %c0_140] : memref<180x256xf32, #tpu.memory_space<vmem>>, vector<4x256xf32>
    tpu.vector_store %arg6[%c52_139, %c0_140], %287 {strides = array<i32>} : memref<180x256xf32, #tpu.memory_space<vmem>>, vector<4x256xf32>,
    %289 = vector.extract_strided_slice %272 {offsets = [0, 129], sizes = [4, 256], strides = [1, 1]} : vector<4x512xf32> to vector<4x256xf32>
    %290 = vector.broadcast %1 : vector<1x256xf32> to vector<4x256xf32>
    %291 = arith.mulf %289, %290 : vector<4x256xf32>
    %c56_141 = arith.constant 56 : index
    %c0_142 = arith.constant 0 : index
    %292 = vector.load %arg6[%c56_141, %c0_142] : memref<180x256xf32, #tpu.memory_space<vmem>>, vector<4x256xf32>
    tpu.vector_store %arg6[%c56_141, %c0_142], %291 {strides = array<i32>} : memref<180x256xf32, #tpu.memory_space<vmem>>, vector<4x256xf32>,
    %293 = vector.extract_strided_slice %272 {offsets = [0, 143], sizes = [4, 256], strides = [1, 1]} : vector<4x512xf32> to vector<4x256xf32>
    %294 = vector.broadcast %0 : vector<1x256xf32> to vector<4x256xf32>
    %295 = arith.mulf %293, %294 : vector<4x256xf32>
    %c60_143 = arith.constant 60 : index
    %c0_144 = arith.constant 0 : index
    %296 = vector.load %arg6[%c60_143, %c0_144] : memref<180x256xf32, #tpu.memory_space<vmem>>, vector<4x256xf32>
    tpu.vector_store %arg6[%c60_143, %c0_144], %295 {strides = array<i32>} : memref<180x256xf32, #tpu.memory_space<vmem>>, vector<4x256xf32>,
    %297 = vector.extract_strided_slice %272 {offsets = [0, 144], sizes = [4, 256], strides = [1, 1]} : vector<4x512xf32> to vector<4x256xf32>
    %c64_145 = arith.constant 64 : index
    %c0_146 = arith.constant 0 : index
    %298 = vector.load %arg6[%c64_145, %c0_146] : memref<180x256xf32, #tpu.memory_space<vmem>>, vector<4x256xf32>
    tpu.vector_store %arg6[%c64_145, %c0_146], %297 {strides = array<i32>} : memref<180x256xf32, #tpu.memory_space<vmem>>, vector<4x256xf32>,
    %299 = vector.extract_strided_slice %272 {offsets = [0, 145], sizes = [4, 256], strides = [1, 1]} : vector<4x512xf32> to vector<4x256xf32>
    %300 = vector.broadcast %1 : vector<1x256xf32> to vector<4x256xf32>
    %301 = arith.mulf %299, %300 : vector<4x256xf32>
    %c68_147 = arith.constant 68 : index
    %c0_148 = arith.constant 0 : index
    %302 = vector.load %arg6[%c68_147, %c0_148] : memref<180x256xf32, #tpu.memory_space<vmem>>, vector<4x256xf32>
    tpu.vector_store %arg6[%c68_147, %c0_148], %301 {strides = array<i32>} : memref<180x256xf32, #tpu.memory_space<vmem>>, vector<4x256xf32>,
    %c6 = arith.constant 6 : index
    %c0_149 = arith.constant 0 : index
    %c0_150 = arith.constant 0 : index
    %303 = vector.load %arg2[%c6, %c0_149, %c0_150] : memref<15x4x180xf32, #tpu.memory_space<vmem>>, vector<1x4x180xf32>
    %304 = vector.shape_cast %303 : vector<1x4x180xf32> to vector<4x180xf32>
    %305 = vector.extract_strided_slice %304 {offsets = [0, 0], sizes = [4, 72], strides = [1, 1]} : vector<4x180xf32> to vector<4x72xf32>
    %c0_151 = arith.constant 0 : index
    %c0_152 = arith.constant 0 : index
    %306 = vector.load %arg6[%c0_151, %c0_152] : memref<180x256xf32, #tpu.memory_space<vmem>>, vector<72x256xf32>
    %cst_153 = arith.constant dense<0.000000e+00> : vector<4x256xf32>
    %307 = tpu.matmul %305, %306, %cst_153 {dimension_numbers = #tpu.dot_dimension_numbers<[1], [0], [0], [1], [0, 0, 1, 1], [], []>} : vector<4x72xf32>, vector<72x256xf32>, vector<4x256xf32> -> vector<4x256xf32>
    %c6_154 = arith.constant 6 : index
    %c0_155 = arith.constant 0 : index
    %c0_156 = arith.constant 0 : index
    %308 = vector.load %arg3[%c6_154, %c0_155, %c0_156] : memref<15x4x1xf32, #tpu.memory_space<vmem>>, vector<1x4x1xf32>
    %309 = vector.shape_cast %308 : vector<1x4x1xf32> to vector<4x1xf32>
    %310 = vector.broadcast %309 : vector<4x1xf32> to vector<4x256xf32>
    %311 = arith.addf %307, %310 : vector<4x256xf32>
    %cst_157 = arith.constant 0.000000e+00 : f32
    %312 = vector.broadcast %cst_157 : f32 to vector<4x256xf32>
    %313 = arith.cmpf oge, %311, %312 : vector<4x256xf32>
    %cst_158 = arith.constant 0.00999999977 : f32
    %314 = vector.broadcast %cst_158 : f32 to vector<4x256xf32>
    %315 = arith.mulf %314, %311 : vector<4x256xf32>
    %316 = arith.select %313, %311, %315 : vector<4x256xi1>, vector<4x256xf32>
    %317 = tpu.concatenate %2, %316, %2 in 1 : vector<4x128xf32>, vector<4x256xf32>, vector<4x128xf32> -> vector<4x512xf32>
    %318 = vector.extract_strided_slice %317 {offsets = [0, 111], sizes = [4, 256], strides = [1, 1]} : vector<4x512xf32> to vector<4x256xf32>
    %319 = vector.broadcast %0 : vector<1x256xf32> to vector<4x256xf32>
    %320 = arith.mulf %318, %319 : vector<4x256xf32>
    %c72_159 = arith.constant 72 : index
    %c0_160 = arith.constant 0 : index
    %321 = vector.load %arg6[%c72_159, %c0_160] : memref<180x256xf32, #tpu.memory_space<vmem>>, vector<4x256xf32>
    tpu.vector_store %arg6[%c72_159, %c0_160], %320 {strides = array<i32>} : memref<180x256xf32, #tpu.memory_space<vmem>>, vector<4x256xf32>,
    %322 = vector.extract_strided_slice %317 {offsets = [0, 112], sizes = [4, 256], strides = [1, 1]} : vector<4x512xf32> to vector<4x256xf32>
    %c76_161 = arith.constant 76 : index
    %c0_162 = arith.constant 0 : index
    %323 = vector.load %arg6[%c76_161, %c0_162] : memref<180x256xf32, #tpu.memory_space<vmem>>, vector<4x256xf32>
    tpu.vector_store %arg6[%c76_161, %c0_162], %322 {strides = array<i32>} : memref<180x256xf32, #tpu.memory_space<vmem>>, vector<4x256xf32>,
    %324 = vector.extract_strided_slice %317 {offsets = [0, 113], sizes = [4, 256], strides = [1, 1]} : vector<4x512xf32> to vector<4x256xf32>
    %325 = vector.broadcast %1 : vector<1x256xf32> to vector<4x256xf32>
    %326 = arith.mulf %324, %325 : vector<4x256xf32>
    %c80_163 = arith.constant 80 : index
    %c0_164 = arith.constant 0 : index
    %327 = vector.load %arg6[%c80_163, %c0_164] : memref<180x256xf32, #tpu.memory_space<vmem>>, vector<4x256xf32>
    tpu.vector_store %arg6[%c80_163, %c0_164], %326 {strides = array<i32>} : memref<180x256xf32, #tpu.memory_space<vmem>>, vector<4x256xf32>,
    %328 = vector.extract_strided_slice %317 {offsets = [0, 127], sizes = [4, 256], strides = [1, 1]} : vector<4x512xf32> to vector<4x256xf32>
    %329 = vector.broadcast %0 : vector<1x256xf32> to vector<4x256xf32>
    %330 = arith.mulf %328, %329 : vector<4x256xf32>
    %c84_165 = arith.constant 84 : index
    %c0_166 = arith.constant 0 : index
    %331 = vector.load %arg6[%c84_165, %c0_166] : memref<180x256xf32, #tpu.memory_space<vmem>>, vector<4x256xf32>
    tpu.vector_store %arg6[%c84_165, %c0_166], %330 {strides = array<i32>} : memref<180x256xf32, #tpu.memory_space<vmem>>, vector<4x256xf32>,
    %332 = vector.extract_strided_slice %317 {offsets = [0, 128], sizes = [4, 256], strides = [1, 1]} : vector<4x512xf32> to vector<4x256xf32>
    %c88_167 = arith.constant 88 : index
    %c0_168 = arith.constant 0 : index
    %333 = vector.load %arg6[%c88_167, %c0_168] : memref<180x256xf32, #tpu.memory_space<vmem>>, vector<4x256xf32>
    tpu.vector_store %arg6[%c88_167, %c0_168], %332 {strides = array<i32>} : memref<180x256xf32, #tpu.memory_space<vmem>>, vector<4x256xf32>,
    %334 = vector.extract_strided_slice %317 {offsets = [0, 129], sizes = [4, 256], strides = [1, 1]} : vector<4x512xf32> to vector<4x256xf32>
    %335 = vector.broadcast %1 : vector<1x256xf32> to vector<4x256xf32>
    %336 = arith.mulf %334, %335 : vector<4x256xf32>
    %c92_169 = arith.constant 92 : index
    %c0_170 = arith.constant 0 : index
    %337 = vector.load %arg6[%c92_169, %c0_170] : memref<180x256xf32, #tpu.memory_space<vmem>>, vector<4x256xf32>
    tpu.vector_store %arg6[%c92_169, %c0_170], %336 {strides = array<i32>} : memref<180x256xf32, #tpu.memory_space<vmem>>, vector<4x256xf32>,
    %338 = vector.extract_strided_slice %317 {offsets = [0, 143], sizes = [4, 256], strides = [1, 1]} : vector<4x512xf32> to vector<4x256xf32>
    %339 = vector.broadcast %0 : vector<1x256xf32> to vector<4x256xf32>
    %340 = arith.mulf %338, %339 : vector<4x256xf32>
    %c96_171 = arith.constant 96 : index
    %c0_172 = arith.constant 0 : index
    %341 = vector.load %arg6[%c96_171, %c0_172] : memref<180x256xf32, #tpu.memory_space<vmem>>, vector<4x256xf32>
    tpu.vector_store %arg6[%c96_171, %c0_172], %340 {strides = array<i32>} : memref<180x256xf32, #tpu.memory_space<vmem>>, vector<4x256xf32>,
    %342 = vector.extract_strided_slice %317 {offsets = [0, 144], sizes = [4, 256], strides = [1, 1]} : vector<4x512xf32> to vector<4x256xf32>
    %c100_173 = arith.constant 100 : index
    %c0_174 = arith.constant 0 : index
    %343 = vector.load %arg6[%c100_173, %c0_174] : memref<180x256xf32, #tpu.memory_space<vmem>>, vector<4x256xf32>
    tpu.vector_store %arg6[%c100_173, %c0_174], %342 {strides = array<i32>} : memref<180x256xf32, #tpu.memory_space<vmem>>, vector<4x256xf32>,
    %344 = vector.extract_strided_slice %317 {offsets = [0, 145], sizes = [4, 256], strides = [1, 1]} : vector<4x512xf32> to vector<4x256xf32>
    %345 = vector.broadcast %1 : vector<1x256xf32> to vector<4x256xf32>
    %346 = arith.mulf %344, %345 : vector<4x256xf32>
    %c104_175 = arith.constant 104 : index
    %c0_176 = arith.constant 0 : index
    %347 = vector.load %arg6[%c104_175, %c0_176] : memref<180x256xf32, #tpu.memory_space<vmem>>, vector<4x256xf32>
    tpu.vector_store %arg6[%c104_175, %c0_176], %346 {strides = array<i32>} : memref<180x256xf32, #tpu.memory_space<vmem>>, vector<4x256xf32>,
    %c7 = arith.constant 7 : index
    %c0_177 = arith.constant 0 : index
    %c0_178 = arith.constant 0 : index
    %348 = vector.load %arg2[%c7, %c0_177, %c0_178] : memref<15x4x180xf32, #tpu.memory_space<vmem>>, vector<1x4x180xf32>
    %349 = vector.shape_cast %348 : vector<1x4x180xf32> to vector<4x180xf32>
    %350 = vector.extract_strided_slice %349 {offsets = [0, 0], sizes = [4, 108], strides = [1, 1]} : vector<4x180xf32> to vector<4x108xf32>
    %c0_179 = arith.constant 0 : index
    %c0_180 = arith.constant 0 : index
    %351 = vector.load %arg6[%c0_179, %c0_180] : memref<180x256xf32, #tpu.memory_space<vmem>>, vector<108x256xf32>
    %cst_181 = arith.constant dense<0.000000e+00> : vector<4x256xf32>
    %352 = tpu.matmul %350, %351, %cst_181 {dimension_numbers = #tpu.dot_dimension_numbers<[1], [0], [0], [1], [0, 0, 1, 1], [], []>} : vector<4x108xf32>, vector<108x256xf32>, vector<4x256xf32> -> vector<4x256xf32>
    %c7_182 = arith.constant 7 : index
    %c0_183 = arith.constant 0 : index
    %c0_184 = arith.constant 0 : index
    %353 = vector.load %arg3[%c7_182, %c0_183, %c0_184] : memref<15x4x1xf32, #tpu.memory_space<vmem>>, vector<1x4x1xf32>
    %354 = vector.shape_cast %353 : vector<1x4x1xf32> to vector<4x1xf32>
    %355 = vector.broadcast %354 : vector<4x1xf32> to vector<4x256xf32>
    %356 = arith.addf %352, %355 : vector<4x256xf32>
    %cst_185 = arith.constant 0.000000e+00 : f32
    %357 = vector.broadcast %cst_185 : f32 to vector<4x256xf32>
    %358 = arith.cmpf oge, %356, %357 : vector<4x256xf32>
    %cst_186 = arith.constant 0.00999999977 : f32
    %359 = vector.broadcast %cst_186 : f32 to vector<4x256xf32>
    %360 = arith.mulf %359, %356 : vector<4x256xf32>
    %361 = arith.select %358, %356, %360 : vector<4x256xi1>, vector<4x256xf32>
    %362 = tpu.concatenate %2, %361, %2 in 1 : vector<4x128xf32>, vector<4x256xf32>, vector<4x128xf32> -> vector<4x512xf32>
    %363 = vector.extract_strided_slice %362 {offsets = [0, 111], sizes = [4, 256], strides = [1, 1]} : vector<4x512xf32> to vector<4x256xf32>
    %364 = vector.broadcast %0 : vector<1x256xf32> to vector<4x256xf32>
    %365 = arith.mulf %363, %364 : vector<4x256xf32>
    %c108_187 = arith.constant 108 : index
    %c0_188 = arith.constant 0 : index
    %366 = vector.load %arg6[%c108_187, %c0_188] : memref<180x256xf32, #tpu.memory_space<vmem>>, vector<4x256xf32>
    tpu.vector_store %arg6[%c108_187, %c0_188], %365 {strides = array<i32>} : memref<180x256xf32, #tpu.memory_space<vmem>>, vector<4x256xf32>,
    %367 = vector.extract_strided_slice %362 {offsets = [0, 112], sizes = [4, 256], strides = [1, 1]} : vector<4x512xf32> to vector<4x256xf32>
    %c112_189 = arith.constant 112 : index
    %c0_190 = arith.constant 0 : index
    %368 = vector.load %arg6[%c112_189, %c0_190] : memref<180x256xf32, #tpu.memory_space<vmem>>, vector<4x256xf32>
    tpu.vector_store %arg6[%c112_189, %c0_190], %367 {strides = array<i32>} : memref<180x256xf32, #tpu.memory_space<vmem>>, vector<4x256xf32>,
    %369 = vector.extract_strided_slice %362 {offsets = [0, 113], sizes = [4, 256], strides = [1, 1]} : vector<4x512xf32> to vector<4x256xf32>
    %370 = vector.broadcast %1 : vector<1x256xf32> to vector<4x256xf32>
    %371 = arith.mulf %369, %370 : vector<4x256xf32>
    %c116_191 = arith.constant 116 : index
    %c0_192 = arith.constant 0 : index
    %372 = vector.load %arg6[%c116_191, %c0_192] : memref<180x256xf32, #tpu.memory_space<vmem>>, vector<4x256xf32>
    tpu.vector_store %arg6[%c116_191, %c0_192], %371 {strides = array<i32>} : memref<180x256xf32, #tpu.memory_space<vmem>>, vector<4x256xf32>,
    %373 = vector.extract_strided_slice %362 {offsets = [0, 127], sizes = [4, 256], strides = [1, 1]} : vector<4x512xf32> to vector<4x256xf32>
    %374 = vector.broadcast %0 : vector<1x256xf32> to vector<4x256xf32>
    %375 = arith.mulf %373, %374 : vector<4x256xf32>
    %c120_193 = arith.constant 120 : index
    %c0_194 = arith.constant 0 : index
    %376 = vector.load %arg6[%c120_193, %c0_194] : memref<180x256xf32, #tpu.memory_space<vmem>>, vector<4x256xf32>
    tpu.vector_store %arg6[%c120_193, %c0_194], %375 {strides = array<i32>} : memref<180x256xf32, #tpu.memory_space<vmem>>, vector<4x256xf32>,
    %377 = vector.extract_strided_slice %362 {offsets = [0, 128], sizes = [4, 256], strides = [1, 1]} : vector<4x512xf32> to vector<4x256xf32>
    %c124_195 = arith.constant 124 : index
    %c0_196 = arith.constant 0 : index
    %378 = vector.load %arg6[%c124_195, %c0_196] : memref<180x256xf32, #tpu.memory_space<vmem>>, vector<4x256xf32>
    tpu.vector_store %arg6[%c124_195, %c0_196], %377 {strides = array<i32>} : memref<180x256xf32, #tpu.memory_space<vmem>>, vector<4x256xf32>,
    %379 = vector.extract_strided_slice %362 {offsets = [0, 129], sizes = [4, 256], strides = [1, 1]} : vector<4x512xf32> to vector<4x256xf32>
    %380 = vector.broadcast %1 : vector<1x256xf32> to vector<4x256xf32>
    %381 = arith.mulf %379, %380 : vector<4x256xf32>
    %c128_197 = arith.constant 128 : index
    %c0_198 = arith.constant 0 : index
    %382 = vector.load %arg6[%c128_197, %c0_198] : memref<180x256xf32, #tpu.memory_space<vmem>>, vector<4x256xf32>
    tpu.vector_store %arg6[%c128_197, %c0_198], %381 {strides = array<i32>} : memref<180x256xf32, #tpu.memory_space<vmem>>, vector<4x256xf32>,
    %383 = vector.extract_strided_slice %362 {offsets = [0, 143], sizes = [4, 256], strides = [1, 1]} : vector<4x512xf32> to vector<4x256xf32>
    %384 = vector.broadcast %0 : vector<1x256xf32> to vector<4x256xf32>
    %385 = arith.mulf %383, %384 : vector<4x256xf32>
    %c132_199 = arith.constant 132 : index
    %c0_200 = arith.constant 0 : index
    %386 = vector.load %arg6[%c132_199, %c0_200] : memref<180x256xf32, #tpu.memory_space<vmem>>, vector<4x256xf32>
    tpu.vector_store %arg6[%c132_199, %c0_200], %385 {strides = array<i32>} : memref<180x256xf32, #tpu.memory_space<vmem>>, vector<4x256xf32>,
    %387 = vector.extract_strided_slice %362 {offsets = [0, 144], sizes = [4, 256], strides = [1, 1]} : vector<4x512xf32> to vector<4x256xf32>
    %c136_201 = arith.constant 136 : index
    %c0_202 = arith.constant 0 : index
    %388 = vector.load %arg6[%c136_201, %c0_202] : memref<180x256xf32, #tpu.memory_space<vmem>>, vector<4x256xf32>
    tpu.vector_store %arg6[%c136_201, %c0_202], %387 {strides = array<i32>} : memref<180x256xf32, #tpu.memory_space<vmem>>, vector<4x256xf32>,
    %389 = vector.extract_strided_slice %362 {offsets = [0, 145], sizes = [4, 256], strides = [1, 1]} : vector<4x512xf32> to vector<4x256xf32>
    %390 = vector.broadcast %1 : vector<1x256xf32> to vector<4x256xf32>
    %391 = arith.mulf %389, %390 : vector<4x256xf32>
    %c140_203 = arith.constant 140 : index
    %c0_204 = arith.constant 0 : index
    %392 = vector.load %arg6[%c140_203, %c0_204] : memref<180x256xf32, #tpu.memory_space<vmem>>, vector<4x256xf32>
    tpu.vector_store %arg6[%c140_203, %c0_204], %391 {strides = array<i32>} : memref<180x256xf32, #tpu.memory_space<vmem>>, vector<4x256xf32>,
    %c8_205 = arith.constant 8 : index
    %c0_206 = arith.constant 0 : index
    %c0_207 = arith.constant 0 : index
    %393 = vector.load %arg2[%c8_205, %c0_206, %c0_207] : memref<15x4x180xf32, #tpu.memory_space<vmem>>, vector<1x4x180xf32>
    %394 = vector.shape_cast %393 : vector<1x4x180xf32> to vector<4x180xf32>
    %395 = vector.extract_strided_slice %394 {offsets = [0, 0], sizes = [4, 144], strides = [1, 1]} : vector<4x180xf32> to vector<4x144xf32>
    %c0_208 = arith.constant 0 : index
    %c0_209 = arith.constant 0 : index
    %396 = vector.load %arg6[%c0_208, %c0_209] : memref<180x256xf32, #tpu.memory_space<vmem>>, vector<144x256xf32>
    %cst_210 = arith.constant dense<0.000000e+00> : vector<4x256xf32>
    %397 = tpu.matmul %395, %396, %cst_210 {dimension_numbers = #tpu.dot_dimension_numbers<[1], [0], [0], [1], [0, 0, 1, 1], [], []>} : vector<4x144xf32>, vector<144x256xf32>, vector<4x256xf32> -> vector<4x256xf32>
    %c8_211 = arith.constant 8 : index
    %c0_212 = arith.constant 0 : index
    %c0_213 = arith.constant 0 : index
    %398 = vector.load %arg3[%c8_211, %c0_212, %c0_213] : memref<15x4x1xf32, #tpu.memory_space<vmem>>, vector<1x4x1xf32>
    %399 = vector.shape_cast %398 : vector<1x4x1xf32> to vector<4x1xf32>
    %400 = vector.broadcast %399 : vector<4x1xf32> to vector<4x256xf32>
    %401 = arith.addf %397, %400 : vector<4x256xf32>
    %cst_214 = arith.constant 0.000000e+00 : f32
    %402 = vector.broadcast %cst_214 : f32 to vector<4x256xf32>
    %403 = arith.cmpf oge, %401, %402 : vector<4x256xf32>
    %cst_215 = arith.constant 0.00999999977 : f32
    %404 = vector.broadcast %cst_215 : f32 to vector<4x256xf32>
    %405 = arith.mulf %404, %401 : vector<4x256xf32>
    %406 = arith.select %403, %401, %405 : vector<4x256xi1>, vector<4x256xf32>
    %407 = tpu.concatenate %2, %406, %2 in 1 : vector<4x128xf32>, vector<4x256xf32>, vector<4x128xf32> -> vector<4x512xf32>
    %408 = vector.extract_strided_slice %407 {offsets = [0, 111], sizes = [4, 256], strides = [1, 1]} : vector<4x512xf32> to vector<4x256xf32>
    %409 = vector.broadcast %0 : vector<1x256xf32> to vector<4x256xf32>
    %410 = arith.mulf %408, %409 : vector<4x256xf32>
    %c144_216 = arith.constant 144 : index
    %c0_217 = arith.constant 0 : index
    %411 = vector.load %arg6[%c144_216, %c0_217] : memref<180x256xf32, #tpu.memory_space<vmem>>, vector<4x256xf32>
    tpu.vector_store %arg6[%c144_216, %c0_217], %410 {strides = array<i32>} : memref<180x256xf32, #tpu.memory_space<vmem>>, vector<4x256xf32>,
    %412 = vector.extract_strided_slice %407 {offsets = [0, 112], sizes = [4, 256], strides = [1, 1]} : vector<4x512xf32> to vector<4x256xf32>
    %c148_218 = arith.constant 148 : index
    %c0_219 = arith.constant 0 : index
    %413 = vector.load %arg6[%c148_218, %c0_219] : memref<180x256xf32, #tpu.memory_space<vmem>>, vector<4x256xf32>
    tpu.vector_store %arg6[%c148_218, %c0_219], %412 {strides = array<i32>} : memref<180x256xf32, #tpu.memory_space<vmem>>, vector<4x256xf32>,
    %414 = vector.extract_strided_slice %407 {offsets = [0, 113], sizes = [4, 256], strides = [1, 1]} : vector<4x512xf32> to vector<4x256xf32>
    %415 = vector.broadcast %1 : vector<1x256xf32> to vector<4x256xf32>
    %416 = arith.mulf %414, %415 : vector<4x256xf32>
    %c152_220 = arith.constant 152 : index
    %c0_221 = arith.constant 0 : index
    %417 = vector.load %arg6[%c152_220, %c0_221] : memref<180x256xf32, #tpu.memory_space<vmem>>, vector<4x256xf32>
    tpu.vector_store %arg6[%c152_220, %c0_221], %416 {strides = array<i32>} : memref<180x256xf32, #tpu.memory_space<vmem>>, vector<4x256xf32>,
    %418 = vector.extract_strided_slice %407 {offsets = [0, 127], sizes = [4, 256], strides = [1, 1]} : vector<4x512xf32> to vector<4x256xf32>
    %419 = vector.broadcast %0 : vector<1x256xf32> to vector<4x256xf32>
    %420 = arith.mulf %418, %419 : vector<4x256xf32>
    %c156_222 = arith.constant 156 : index
    %c0_223 = arith.constant 0 : index
    %421 = vector.load %arg6[%c156_222, %c0_223] : memref<180x256xf32, #tpu.memory_space<vmem>>, vector<4x256xf32>
    tpu.vector_store %arg6[%c156_222, %c0_223], %420 {strides = array<i32>} : memref<180x256xf32, #tpu.memory_space<vmem>>, vector<4x256xf32>,
    %422 = vector.extract_strided_slice %407 {offsets = [0, 128], sizes = [4, 256], strides = [1, 1]} : vector<4x512xf32> to vector<4x256xf32>
    %c160_224 = arith.constant 160 : index
    %c0_225 = arith.constant 0 : index
    %423 = vector.load %arg6[%c160_224, %c0_225] : memref<180x256xf32, #tpu.memory_space<vmem>>, vector<4x256xf32>
    tpu.vector_store %arg6[%c160_224, %c0_225], %422 {strides = array<i32>} : memref<180x256xf32, #tpu.memory_space<vmem>>, vector<4x256xf32>,
    %424 = vector.extract_strided_slice %407 {offsets = [0, 129], sizes = [4, 256], strides = [1, 1]} : vector<4x512xf32> to vector<4x256xf32>
    %425 = vector.broadcast %1 : vector<1x256xf32> to vector<4x256xf32>
    %426 = arith.mulf %424, %425 : vector<4x256xf32>
    %c164_226 = arith.constant 164 : index
    %c0_227 = arith.constant 0 : index
    %427 = vector.load %arg6[%c164_226, %c0_227] : memref<180x256xf32, #tpu.memory_space<vmem>>, vector<4x256xf32>
    tpu.vector_store %arg6[%c164_226, %c0_227], %426 {strides = array<i32>} : memref<180x256xf32, #tpu.memory_space<vmem>>, vector<4x256xf32>,
    %428 = vector.extract_strided_slice %407 {offsets = [0, 143], sizes = [4, 256], strides = [1, 1]} : vector<4x512xf32> to vector<4x256xf32>
    %429 = vector.broadcast %0 : vector<1x256xf32> to vector<4x256xf32>
    %430 = arith.mulf %428, %429 : vector<4x256xf32>
    %c168_228 = arith.constant 168 : index
    %c0_229 = arith.constant 0 : index
    %431 = vector.load %arg6[%c168_228, %c0_229] : memref<180x256xf32, #tpu.memory_space<vmem>>, vector<4x256xf32>
    tpu.vector_store %arg6[%c168_228, %c0_229], %430 {strides = array<i32>} : memref<180x256xf32, #tpu.memory_space<vmem>>, vector<4x256xf32>,
    %432 = vector.extract_strided_slice %407 {offsets = [0, 144], sizes = [4, 256], strides = [1, 1]} : vector<4x512xf32> to vector<4x256xf32>
    %c172_230 = arith.constant 172 : index
    %c0_231 = arith.constant 0 : index
    %433 = vector.load %arg6[%c172_230, %c0_231] : memref<180x256xf32, #tpu.memory_space<vmem>>, vector<4x256xf32>
    tpu.vector_store %arg6[%c172_230, %c0_231], %432 {strides = array<i32>} : memref<180x256xf32, #tpu.memory_space<vmem>>, vector<4x256xf32>,
    %434 = vector.extract_strided_slice %407 {offsets = [0, 145], sizes = [4, 256], strides = [1, 1]} : vector<4x512xf32> to vector<4x256xf32>
    %435 = vector.broadcast %1 : vector<1x256xf32> to vector<4x256xf32>
    %436 = arith.mulf %434, %435 : vector<4x256xf32>
    %c176_232 = arith.constant 176 : index
    %c0_233 = arith.constant 0 : index
    %437 = vector.load %arg6[%c176_232, %c0_233] : memref<180x256xf32, #tpu.memory_space<vmem>>, vector<4x256xf32>
    tpu.vector_store %arg6[%c176_232, %c0_233], %436 {strides = array<i32>} : memref<180x256xf32, #tpu.memory_space<vmem>>, vector<4x256xf32>,
    %c9 = arith.constant 9 : index
    %c0_234 = arith.constant 0 : index
    %c0_235 = arith.constant 0 : index
    %438 = vector.load %arg2[%c9, %c0_234, %c0_235] : memref<15x4x180xf32, #tpu.memory_space<vmem>>, vector<1x4x180xf32>
    %439 = vector.shape_cast %438 : vector<1x4x180xf32> to vector<4x180xf32>
    %c0_236 = arith.constant 0 : index
    %c0_237 = arith.constant 0 : index
    %440 = vector.load %arg6[%c0_236, %c0_237] : memref<180x256xf32, #tpu.memory_space<vmem>>, vector<180x256xf32>
    %cst_238 = arith.constant dense<0.000000e+00> : vector<4x256xf32>
    %441 = tpu.matmul %439, %440, %cst_238 {dimension_numbers = #tpu.dot_dimension_numbers<[1], [0], [0], [1], [0, 0, 1, 1], [], []>} : vector<4x180xf32>, vector<180x256xf32>, vector<4x256xf32> -> vector<4x256xf32>
    %c9_239 = arith.constant 9 : index
    %c0_240 = arith.constant 0 : index
    %c0_241 = arith.constant 0 : index
    %442 = vector.load %arg3[%c9_239, %c0_240, %c0_241] : memref<15x4x1xf32, #tpu.memory_space<vmem>>, vector<1x4x1xf32>
    %443 = vector.shape_cast %442 : vector<1x4x1xf32> to vector<4x1xf32>
    %444 = vector.broadcast %443 : vector<4x1xf32> to vector<4x256xf32>
    %445 = arith.addf %441, %444 : vector<4x256xf32>
    %cst_242 = arith.constant 2.000000e-01 : f32
    %446 = vector.broadcast %cst_242 : f32 to vector<4x256xf32>
    %447 = arith.mulf %445, %446 : vector<4x256xf32>
    %448 = arith.addf %447, %226 : vector<4x256xf32>
    %449 = tpu.concatenate %2, %448, %2 in 1 : vector<4x128xf32>, vector<4x256xf32>, vector<4x128xf32> -> vector<4x512xf32>
    %450 = vector.extract_strided_slice %449 {offsets = [0, 111], sizes = [4, 256], strides = [1, 1]} : vector<4x512xf32> to vector<4x256xf32>
    %451 = vector.broadcast %0 : vector<1x256xf32> to vector<4x256xf32>
    %452 = arith.mulf %450, %451 : vector<4x256xf32>
    %c0_243 = arith.constant 0 : index
    %c0_244 = arith.constant 0 : index
    %453 = vector.load %arg6[%c0_243, %c0_244] : memref<180x256xf32, #tpu.memory_space<vmem>>, vector<4x256xf32>
    tpu.vector_store %arg6[%c0_243, %c0_244], %452 {strides = array<i32>} : memref<180x256xf32, #tpu.memory_space<vmem>>, vector<4x256xf32>,
    %454 = vector.extract_strided_slice %449 {offsets = [0, 112], sizes = [4, 256], strides = [1, 1]} : vector<4x512xf32> to vector<4x256xf32>
    %c4_245 = arith.constant 4 : index
    %c0_246 = arith.constant 0 : index
    %455 = vector.load %arg6[%c4_245, %c0_246] : memref<180x256xf32, #tpu.memory_space<vmem>>, vector<4x256xf32>
    tpu.vector_store %arg6[%c4_245, %c0_246], %454 {strides = array<i32>} : memref<180x256xf32, #tpu.memory_space<vmem>>, vector<4x256xf32>,
    %456 = vector.extract_strided_slice %449 {offsets = [0, 113], sizes = [4, 256], strides = [1, 1]} : vector<4x512xf32> to vector<4x256xf32>
    %457 = vector.broadcast %1 : vector<1x256xf32> to vector<4x256xf32>
    %458 = arith.mulf %456, %457 : vector<4x256xf32>
    %c8_247 = arith.constant 8 : index
    %c0_248 = arith.constant 0 : index
    %459 = vector.load %arg6[%c8_247, %c0_248] : memref<180x256xf32, #tpu.memory_space<vmem>>, vector<4x256xf32>
    tpu.vector_store %arg6[%c8_247, %c0_248], %458 {strides = array<i32>} : memref<180x256xf32, #tpu.memory_space<vmem>>, vector<4x256xf32>,
    %460 = vector.extract_strided_slice %449 {offsets = [0, 127], sizes = [4, 256], strides = [1, 1]} : vector<4x512xf32> to vector<4x256xf32>
    %461 = vector.broadcast %0 : vector<1x256xf32> to vector<4x256xf32>
    %462 = arith.mulf %460, %461 : vector<4x256xf32>
    %c12_249 = arith.constant 12 : index
    %c0_250 = arith.constant 0 : index
    %463 = vector.load %arg6[%c12_249, %c0_250] : memref<180x256xf32, #tpu.memory_space<vmem>>, vector<4x256xf32>
    tpu.vector_store %arg6[%c12_249, %c0_250], %462 {strides = array<i32>} : memref<180x256xf32, #tpu.memory_space<vmem>>, vector<4x256xf32>,
    %464 = vector.extract_strided_slice %449 {offsets = [0, 128], sizes = [4, 256], strides = [1, 1]} : vector<4x512xf32> to vector<4x256xf32>
    %c16_251 = arith.constant 16 : index
    %c0_252 = arith.constant 0 : index
    %465 = vector.load %arg6[%c16_251, %c0_252] : memref<180x256xf32, #tpu.memory_space<vmem>>, vector<4x256xf32>
    tpu.vector_store %arg6[%c16_251, %c0_252], %464 {strides = array<i32>} : memref<180x256xf32, #tpu.memory_space<vmem>>, vector<4x256xf32>,
    %466 = vector.extract_strided_slice %449 {offsets = [0, 129], sizes = [4, 256], strides = [1, 1]} : vector<4x512xf32> to vector<4x256xf32>
    %467 = vector.broadcast %1 : vector<1x256xf32> to vector<4x256xf32>
    %468 = arith.mulf %466, %467 : vector<4x256xf32>
    %c20_253 = arith.constant 20 : index
    %c0_254 = arith.constant 0 : index
    %469 = vector.load %arg6[%c20_253, %c0_254] : memref<180x256xf32, #tpu.memory_space<vmem>>, vector<4x256xf32>
    tpu.vector_store %arg6[%c20_253, %c0_254], %468 {strides = array<i32>} : memref<180x256xf32, #tpu.memory_space<vmem>>, vector<4x256xf32>,
    %470 = vector.extract_strided_slice %449 {offsets = [0, 143], sizes = [4, 256], strides = [1, 1]} : vector<4x512xf32> to vector<4x256xf32>
    %471 = vector.broadcast %0 : vector<1x256xf32> to vector<4x256xf32>
    %472 = arith.mulf %470, %471 : vector<4x256xf32>
    %c24_255 = arith.constant 24 : index
    %c0_256 = arith.constant 0 : index
    %473 = vector.load %arg6[%c24_255, %c0_256] : memref<180x256xf32, #tpu.memory_space<vmem>>, vector<4x256xf32>
    tpu.vector_store %arg6[%c24_255, %c0_256], %472 {strides = array<i32>} : memref<180x256xf32, #tpu.memory_space<vmem>>, vector<4x256xf32>,
    %474 = vector.extract_strided_slice %449 {offsets = [0, 144], sizes = [4, 256], strides = [1, 1]} : vector<4x512xf32> to vector<4x256xf32>
    %c28_257 = arith.constant 28 : index
    %c0_258 = arith.constant 0 : index
    %475 = vector.load %arg6[%c28_257, %c0_258] : memref<180x256xf32, #tpu.memory_space<vmem>>, vector<4x256xf32>
    tpu.vector_store %arg6[%c28_257, %c0_258], %474 {strides = array<i32>} : memref<180x256xf32, #tpu.memory_space<vmem>>, vector<4x256xf32>,
    %476 = vector.extract_strided_slice %449 {offsets = [0, 145], sizes = [4, 256], strides = [1, 1]} : vector<4x512xf32> to vector<4x256xf32>
    %477 = vector.broadcast %1 : vector<1x256xf32> to vector<4x256xf32>
    %478 = arith.mulf %476, %477 : vector<4x256xf32>
    %c32_259 = arith.constant 32 : index
    %c0_260 = arith.constant 0 : index
    %479 = vector.load %arg6[%c32_259, %c0_260] : memref<180x256xf32, #tpu.memory_space<vmem>>, vector<4x256xf32>
    tpu.vector_store %arg6[%c32_259, %c0_260], %478 {strides = array<i32>} : memref<180x256xf32, #tpu.memory_space<vmem>>, vector<4x256xf32>,
    %c10 = arith.constant 10 : index
    %c0_261 = arith.constant 0 : index
    %c0_262 = arith.constant 0 : index
    %480 = vector.load %arg2[%c10, %c0_261, %c0_262] : memref<15x4x180xf32, #tpu.memory_space<vmem>>, vector<1x4x180xf32>
    %481 = vector.shape_cast %480 : vector<1x4x180xf32> to vector<4x180xf32>
    %482 = vector.extract_strided_slice %481 {offsets = [0, 0], sizes = [4, 36], strides = [1, 1]} : vector<4x180xf32> to vector<4x36xf32>
    %c0_263 = arith.constant 0 : index
    %c0_264 = arith.constant 0 : index
    %483 = vector.load %arg6[%c0_263, %c0_264] : memref<180x256xf32, #tpu.memory_space<vmem>>, vector<36x256xf32>
    %cst_265 = arith.constant dense<0.000000e+00> : vector<4x256xf32>
    %484 = tpu.matmul %482, %483, %cst_265 {dimension_numbers = #tpu.dot_dimension_numbers<[1], [0], [0], [1], [0, 0, 1, 1], [], []>} : vector<4x36xf32>, vector<36x256xf32>, vector<4x256xf32> -> vector<4x256xf32>
    %c10_266 = arith.constant 10 : index
    %c0_267 = arith.constant 0 : index
    %c0_268 = arith.constant 0 : index
    %485 = vector.load %arg3[%c10_266, %c0_267, %c0_268] : memref<15x4x1xf32, #tpu.memory_space<vmem>>, vector<1x4x1xf32>
    %486 = vector.shape_cast %485 : vector<1x4x1xf32> to vector<4x1xf32>
    %487 = vector.broadcast %486 : vector<4x1xf32> to vector<4x256xf32>
    %488 = arith.addf %484, %487 : vector<4x256xf32>
    %cst_269 = arith.constant 0.000000e+00 : f32
    %489 = vector.broadcast %cst_269 : f32 to vector<4x256xf32>
    %490 = arith.cmpf oge, %488, %489 : vector<4x256xf32>
    %cst_270 = arith.constant 0.00999999977 : f32
    %491 = vector.broadcast %cst_270 : f32 to vector<4x256xf32>
    %492 = arith.mulf %491, %488 : vector<4x256xf32>
    %493 = arith.select %490, %488, %492 : vector<4x256xi1>, vector<4x256xf32>
    %494 = tpu.concatenate %2, %493, %2 in 1 : vector<4x128xf32>, vector<4x256xf32>, vector<4x128xf32> -> vector<4x512xf32>
    %495 = vector.extract_strided_slice %494 {offsets = [0, 111], sizes = [4, 256], strides = [1, 1]} : vector<4x512xf32> to vector<4x256xf32>
    %496 = vector.broadcast %0 : vector<1x256xf32> to vector<4x256xf32>
    %497 = arith.mulf %495, %496 : vector<4x256xf32>
    %c36_271 = arith.constant 36 : index
    %c0_272 = arith.constant 0 : index
    %498 = vector.load %arg6[%c36_271, %c0_272] : memref<180x256xf32, #tpu.memory_space<vmem>>, vector<4x256xf32>
    tpu.vector_store %arg6[%c36_271, %c0_272], %497 {strides = array<i32>} : memref<180x256xf32, #tpu.memory_space<vmem>>, vector<4x256xf32>,
    %499 = vector.extract_strided_slice %494 {offsets = [0, 112], sizes = [4, 256], strides = [1, 1]} : vector<4x512xf32> to vector<4x256xf32>
    %c40_273 = arith.constant 40 : index
    %c0_274 = arith.constant 0 : index
    %500 = vector.load %arg6[%c40_273, %c0_274] : memref<180x256xf32, #tpu.memory_space<vmem>>, vector<4x256xf32>
    tpu.vector_store %arg6[%c40_273, %c0_274], %499 {strides = array<i32>} : memref<180x256xf32, #tpu.memory_space<vmem>>, vector<4x256xf32>,
    %501 = vector.extract_strided_slice %494 {offsets = [0, 113], sizes = [4, 256], strides = [1, 1]} : vector<4x512xf32> to vector<4x256xf32>
    %502 = vector.broadcast %1 : vector<1x256xf32> to vector<4x256xf32>
    %503 = arith.mulf %501, %502 : vector<4x256xf32>
    %c44_275 = arith.constant 44 : index
    %c0_276 = arith.constant 0 : index
    %504 = vector.load %arg6[%c44_275, %c0_276] : memref<180x256xf32, #tpu.memory_space<vmem>>, vector<4x256xf32>
    tpu.vector_store %arg6[%c44_275, %c0_276], %503 {strides = array<i32>} : memref<180x256xf32, #tpu.memory_space<vmem>>, vector<4x256xf32>,
    %505 = vector.extract_strided_slice %494 {offsets = [0, 127], sizes = [4, 256], strides = [1, 1]} : vector<4x512xf32> to vector<4x256xf32>
    %506 = vector.broadcast %0 : vector<1x256xf32> to vector<4x256xf32>
    %507 = arith.mulf %505, %506 : vector<4x256xf32>
    %c48_277 = arith.constant 48 : index
    %c0_278 = arith.constant 0 : index
    %508 = vector.load %arg6[%c48_277, %c0_278] : memref<180x256xf32, #tpu.memory_space<vmem>>, vector<4x256xf32>
    tpu.vector_store %arg6[%c48_277, %c0_278], %507 {strides = array<i32>} : memref<180x256xf32, #tpu.memory_space<vmem>>, vector<4x256xf32>,
    %509 = vector.extract_strided_slice %494 {offsets = [0, 128], sizes = [4, 256], strides = [1, 1]} : vector<4x512xf32> to vector<4x256xf32>
    %c52_279 = arith.constant 52 : index
    %c0_280 = arith.constant 0 : index
    %510 = vector.load %arg6[%c52_279, %c0_280] : memref<180x256xf32, #tpu.memory_space<vmem>>, vector<4x256xf32>
    tpu.vector_store %arg6[%c52_279, %c0_280], %509 {strides = array<i32>} : memref<180x256xf32, #tpu.memory_space<vmem>>, vector<4x256xf32>,
    %511 = vector.extract_strided_slice %494 {offsets = [0, 129], sizes = [4, 256], strides = [1, 1]} : vector<4x512xf32> to vector<4x256xf32>
    %512 = vector.broadcast %1 : vector<1x256xf32> to vector<4x256xf32>
    %513 = arith.mulf %511, %512 : vector<4x256xf32>
    %c56_281 = arith.constant 56 : index
    %c0_282 = arith.constant 0 : index
    %514 = vector.load %arg6[%c56_281, %c0_282] : memref<180x256xf32, #tpu.memory_space<vmem>>, vector<4x256xf32>
    tpu.vector_store %arg6[%c56_281, %c0_282], %513 {strides = array<i32>} : memref<180x256xf32, #tpu.memory_space<vmem>>, vector<4x256xf32>,
    %515 = vector.extract_strided_slice %494 {offsets = [0, 143], sizes = [4, 256], strides = [1, 1]} : vector<4x512xf32> to vector<4x256xf32>
    %516 = vector.broadcast %0 : vector<1x256xf32> to vector<4x256xf32>
    %517 = arith.mulf %515, %516 : vector<4x256xf32>
    %c60_283 = arith.constant 60 : index
    %c0_284 = arith.constant 0 : index
    %518 = vector.load %arg6[%c60_283, %c0_284] : memref<180x256xf32, #tpu.memory_space<vmem>>, vector<4x256xf32>
    tpu.vector_store %arg6[%c60_283, %c0_284], %517 {strides = array<i32>} : memref<180x256xf32, #tpu.memory_space<vmem>>, vector<4x256xf32>,
    %519 = vector.extract_strided_slice %494 {offsets = [0, 144], sizes = [4, 256], strides = [1, 1]} : vector<4x512xf32> to vector<4x256xf32>
    %c64_285 = arith.constant 64 : index
    %c0_286 = arith.constant 0 : index
    %520 = vector.load %arg6[%c64_285, %c0_286] : memref<180x256xf32, #tpu.memory_space<vmem>>, vector<4x256xf32>
    tpu.vector_store %arg6[%c64_285, %c0_286], %519 {strides = array<i32>} : memref<180x256xf32, #tpu.memory_space<vmem>>, vector<4x256xf32>,
    %521 = vector.extract_strided_slice %494 {offsets = [0, 145], sizes = [4, 256], strides = [1, 1]} : vector<4x512xf32> to vector<4x256xf32>
    %522 = vector.broadcast %1 : vector<1x256xf32> to vector<4x256xf32>
    %523 = arith.mulf %521, %522 : vector<4x256xf32>
    %c68_287 = arith.constant 68 : index
    %c0_288 = arith.constant 0 : index
    %524 = vector.load %arg6[%c68_287, %c0_288] : memref<180x256xf32, #tpu.memory_space<vmem>>, vector<4x256xf32>
    tpu.vector_store %arg6[%c68_287, %c0_288], %523 {strides = array<i32>} : memref<180x256xf32, #tpu.memory_space<vmem>>, vector<4x256xf32>,
    %c11 = arith.constant 11 : index
    %c0_289 = arith.constant 0 : index
    %c0_290 = arith.constant 0 : index
    %525 = vector.load %arg2[%c11, %c0_289, %c0_290] : memref<15x4x180xf32, #tpu.memory_space<vmem>>, vector<1x4x180xf32>
    %526 = vector.shape_cast %525 : vector<1x4x180xf32> to vector<4x180xf32>
    %527 = vector.extract_strided_slice %526 {offsets = [0, 0], sizes = [4, 72], strides = [1, 1]} : vector<4x180xf32> to vector<4x72xf32>
    %c0_291 = arith.constant 0 : index
    %c0_292 = arith.constant 0 : index
    %528 = vector.load %arg6[%c0_291, %c0_292] : memref<180x256xf32, #tpu.memory_space<vmem>>, vector<72x256xf32>
    %cst_293 = arith.constant dense<0.000000e+00> : vector<4x256xf32>
    %529 = tpu.matmul %527, %528, %cst_293 {dimension_numbers = #tpu.dot_dimension_numbers<[1], [0], [0], [1], [0, 0, 1, 1], [], []>} : vector<4x72xf32>, vector<72x256xf32>, vector<4x256xf32> -> vector<4x256xf32>
    %c11_294 = arith.constant 11 : index
    %c0_295 = arith.constant 0 : index
    %c0_296 = arith.constant 0 : index
    %530 = vector.load %arg3[%c11_294, %c0_295, %c0_296] : memref<15x4x1xf32, #tpu.memory_space<vmem>>, vector<1x4x1xf32>
    %531 = vector.shape_cast %530 : vector<1x4x1xf32> to vector<4x1xf32>
    %532 = vector.broadcast %531 : vector<4x1xf32> to vector<4x256xf32>
    %533 = arith.addf %529, %532 : vector<4x256xf32>
    %cst_297 = arith.constant 0.000000e+00 : f32
    %534 = vector.broadcast %cst_297 : f32 to vector<4x256xf32>
    %535 = arith.cmpf oge, %533, %534 : vector<4x256xf32>
    %cst_298 = arith.constant 0.00999999977 : f32
    %536 = vector.broadcast %cst_298 : f32 to vector<4x256xf32>
    %537 = arith.mulf %536, %533 : vector<4x256xf32>
    %538 = arith.select %535, %533, %537 : vector<4x256xi1>, vector<4x256xf32>
    %539 = tpu.concatenate %2, %538, %2 in 1 : vector<4x128xf32>, vector<4x256xf32>, vector<4x128xf32> -> vector<4x512xf32>
    %540 = vector.extract_strided_slice %539 {offsets = [0, 111], sizes = [4, 256], strides = [1, 1]} : vector<4x512xf32> to vector<4x256xf32>
    %541 = vector.broadcast %0 : vector<1x256xf32> to vector<4x256xf32>
    %542 = arith.mulf %540, %541 : vector<4x256xf32>
    %c72_299 = arith.constant 72 : index
    %c0_300 = arith.constant 0 : index
    %543 = vector.load %arg6[%c72_299, %c0_300] : memref<180x256xf32, #tpu.memory_space<vmem>>, vector<4x256xf32>
    tpu.vector_store %arg6[%c72_299, %c0_300], %542 {strides = array<i32>} : memref<180x256xf32, #tpu.memory_space<vmem>>, vector<4x256xf32>,
    %544 = vector.extract_strided_slice %539 {offsets = [0, 112], sizes = [4, 256], strides = [1, 1]} : vector<4x512xf32> to vector<4x256xf32>
    %c76_301 = arith.constant 76 : index
    %c0_302 = arith.constant 0 : index
    %545 = vector.load %arg6[%c76_301, %c0_302] : memref<180x256xf32, #tpu.memory_space<vmem>>, vector<4x256xf32>
    tpu.vector_store %arg6[%c76_301, %c0_302], %544 {strides = array<i32>} : memref<180x256xf32, #tpu.memory_space<vmem>>, vector<4x256xf32>,
    %546 = vector.extract_strided_slice %539 {offsets = [0, 113], sizes = [4, 256], strides = [1, 1]} : vector<4x512xf32> to vector<4x256xf32>
    %547 = vector.broadcast %1 : vector<1x256xf32> to vector<4x256xf32>
    %548 = arith.mulf %546, %547 : vector<4x256xf32>
    %c80_303 = arith.constant 80 : index
    %c0_304 = arith.constant 0 : index
    %549 = vector.load %arg6[%c80_303, %c0_304] : memref<180x256xf32, #tpu.memory_space<vmem>>, vector<4x256xf32>
    tpu.vector_store %arg6[%c80_303, %c0_304], %548 {strides = array<i32>} : memref<180x256xf32, #tpu.memory_space<vmem>>, vector<4x256xf32>,
    %550 = vector.extract_strided_slice %539 {offsets = [0, 127], sizes = [4, 256], strides = [1, 1]} : vector<4x512xf32> to vector<4x256xf32>
    %551 = vector.broadcast %0 : vector<1x256xf32> to vector<4x256xf32>
    %552 = arith.mulf %550, %551 : vector<4x256xf32>
    %c84_305 = arith.constant 84 : index
    %c0_306 = arith.constant 0 : index
    %553 = vector.load %arg6[%c84_305, %c0_306] : memref<180x256xf32, #tpu.memory_space<vmem>>, vector<4x256xf32>
    tpu.vector_store %arg6[%c84_305, %c0_306], %552 {strides = array<i32>} : memref<180x256xf32, #tpu.memory_space<vmem>>, vector<4x256xf32>,
    %554 = vector.extract_strided_slice %539 {offsets = [0, 128], sizes = [4, 256], strides = [1, 1]} : vector<4x512xf32> to vector<4x256xf32>
    %c88_307 = arith.constant 88 : index
    %c0_308 = arith.constant 0 : index
    %555 = vector.load %arg6[%c88_307, %c0_308] : memref<180x256xf32, #tpu.memory_space<vmem>>, vector<4x256xf32>
    tpu.vector_store %arg6[%c88_307, %c0_308], %554 {strides = array<i32>} : memref<180x256xf32, #tpu.memory_space<vmem>>, vector<4x256xf32>,
    %556 = vector.extract_strided_slice %539 {offsets = [0, 129], sizes = [4, 256], strides = [1, 1]} : vector<4x512xf32> to vector<4x256xf32>
    %557 = vector.broadcast %1 : vector<1x256xf32> to vector<4x256xf32>
    %558 = arith.mulf %556, %557 : vector<4x256xf32>
    %c92_309 = arith.constant 92 : index
    %c0_310 = arith.constant 0 : index
    %559 = vector.load %arg6[%c92_309, %c0_310] : memref<180x256xf32, #tpu.memory_space<vmem>>, vector<4x256xf32>
    tpu.vector_store %arg6[%c92_309, %c0_310], %558 {strides = array<i32>} : memref<180x256xf32, #tpu.memory_space<vmem>>, vector<4x256xf32>,
    %560 = vector.extract_strided_slice %539 {offsets = [0, 143], sizes = [4, 256], strides = [1, 1]} : vector<4x512xf32> to vector<4x256xf32>
    %561 = vector.broadcast %0 : vector<1x256xf32> to vector<4x256xf32>
    %562 = arith.mulf %560, %561 : vector<4x256xf32>
    %c96_311 = arith.constant 96 : index
    %c0_312 = arith.constant 0 : index
    %563 = vector.load %arg6[%c96_311, %c0_312] : memref<180x256xf32, #tpu.memory_space<vmem>>, vector<4x256xf32>
    tpu.vector_store %arg6[%c96_311, %c0_312], %562 {strides = array<i32>} : memref<180x256xf32, #tpu.memory_space<vmem>>, vector<4x256xf32>,
    %564 = vector.extract_strided_slice %539 {offsets = [0, 144], sizes = [4, 256], strides = [1, 1]} : vector<4x512xf32> to vector<4x256xf32>
    %c100_313 = arith.constant 100 : index
    %c0_314 = arith.constant 0 : index
    %565 = vector.load %arg6[%c100_313, %c0_314] : memref<180x256xf32, #tpu.memory_space<vmem>>, vector<4x256xf32>
    tpu.vector_store %arg6[%c100_313, %c0_314], %564 {strides = array<i32>} : memref<180x256xf32, #tpu.memory_space<vmem>>, vector<4x256xf32>,
    %566 = vector.extract_strided_slice %539 {offsets = [0, 145], sizes = [4, 256], strides = [1, 1]} : vector<4x512xf32> to vector<4x256xf32>
    %567 = vector.broadcast %1 : vector<1x256xf32> to vector<4x256xf32>
    %568 = arith.mulf %566, %567 : vector<4x256xf32>
    %c104_315 = arith.constant 104 : index
    %c0_316 = arith.constant 0 : index
    %569 = vector.load %arg6[%c104_315, %c0_316] : memref<180x256xf32, #tpu.memory_space<vmem>>, vector<4x256xf32>
    tpu.vector_store %arg6[%c104_315, %c0_316], %568 {strides = array<i32>} : memref<180x256xf32, #tpu.memory_space<vmem>>, vector<4x256xf32>,
    %c12_317 = arith.constant 12 : index
    %c0_318 = arith.constant 0 : index
    %c0_319 = arith.constant 0 : index
    %570 = vector.load %arg2[%c12_317, %c0_318, %c0_319] : memref<15x4x180xf32, #tpu.memory_space<vmem>>, vector<1x4x180xf32>
    %571 = vector.shape_cast %570 : vector<1x4x180xf32> to vector<4x180xf32>
    %572 = vector.extract_strided_slice %571 {offsets = [0, 0], sizes = [4, 108], strides = [1, 1]} : vector<4x180xf32> to vector<4x108xf32>
    %c0_320 = arith.constant 0 : index
    %c0_321 = arith.constant 0 : index
    %573 = vector.load %arg6[%c0_320, %c0_321] : memref<180x256xf32, #tpu.memory_space<vmem>>, vector<108x256xf32>
    %cst_322 = arith.constant dense<0.000000e+00> : vector<4x256xf32>
    %574 = tpu.matmul %572, %573, %cst_322 {dimension_numbers = #tpu.dot_dimension_numbers<[1], [0], [0], [1], [0, 0, 1, 1], [], []>} : vector<4x108xf32>, vector<108x256xf32>, vector<4x256xf32> -> vector<4x256xf32>
    %c12_323 = arith.constant 12 : index
    %c0_324 = arith.constant 0 : index
    %c0_325 = arith.constant 0 : index
    %575 = vector.load %arg3[%c12_323, %c0_324, %c0_325] : memref<15x4x1xf32, #tpu.memory_space<vmem>>, vector<1x4x1xf32>
    %576 = vector.shape_cast %575 : vector<1x4x1xf32> to vector<4x1xf32>
    %577 = vector.broadcast %576 : vector<4x1xf32> to vector<4x256xf32>
    %578 = arith.addf %574, %577 : vector<4x256xf32>
    %cst_326 = arith.constant 0.000000e+00 : f32
    %579 = vector.broadcast %cst_326 : f32 to vector<4x256xf32>
    %580 = arith.cmpf oge, %578, %579 : vector<4x256xf32>
    %cst_327 = arith.constant 0.00999999977 : f32
    %581 = vector.broadcast %cst_327 : f32 to vector<4x256xf32>
    %582 = arith.mulf %581, %578 : vector<4x256xf32>
    %583 = arith.select %580, %578, %582 : vector<4x256xi1>, vector<4x256xf32>
    %584 = tpu.concatenate %2, %583, %2 in 1 : vector<4x128xf32>, vector<4x256xf32>, vector<4x128xf32> -> vector<4x512xf32>
    %585 = vector.extract_strided_slice %584 {offsets = [0, 111], sizes = [4, 256], strides = [1, 1]} : vector<4x512xf32> to vector<4x256xf32>
    %586 = vector.broadcast %0 : vector<1x256xf32> to vector<4x256xf32>
    %587 = arith.mulf %585, %586 : vector<4x256xf32>
    %c108_328 = arith.constant 108 : index
    %c0_329 = arith.constant 0 : index
    %588 = vector.load %arg6[%c108_328, %c0_329] : memref<180x256xf32, #tpu.memory_space<vmem>>, vector<4x256xf32>
    tpu.vector_store %arg6[%c108_328, %c0_329], %587 {strides = array<i32>} : memref<180x256xf32, #tpu.memory_space<vmem>>, vector<4x256xf32>,
    %589 = vector.extract_strided_slice %584 {offsets = [0, 112], sizes = [4, 256], strides = [1, 1]} : vector<4x512xf32> to vector<4x256xf32>
    %c112_330 = arith.constant 112 : index
    %c0_331 = arith.constant 0 : index
    %590 = vector.load %arg6[%c112_330, %c0_331] : memref<180x256xf32, #tpu.memory_space<vmem>>, vector<4x256xf32>
    tpu.vector_store %arg6[%c112_330, %c0_331], %589 {strides = array<i32>} : memref<180x256xf32, #tpu.memory_space<vmem>>, vector<4x256xf32>,
    %591 = vector.extract_strided_slice %584 {offsets = [0, 113], sizes = [4, 256], strides = [1, 1]} : vector<4x512xf32> to vector<4x256xf32>
    %592 = vector.broadcast %1 : vector<1x256xf32> to vector<4x256xf32>
    %593 = arith.mulf %591, %592 : vector<4x256xf32>
    %c116_332 = arith.constant 116 : index
    %c0_333 = arith.constant 0 : index
    %594 = vector.load %arg6[%c116_332, %c0_333] : memref<180x256xf32, #tpu.memory_space<vmem>>, vector<4x256xf32>
    tpu.vector_store %arg6[%c116_332, %c0_333], %593 {strides = array<i32>} : memref<180x256xf32, #tpu.memory_space<vmem>>, vector<4x256xf32>,
    %595 = vector.extract_strided_slice %584 {offsets = [0, 127], sizes = [4, 256], strides = [1, 1]} : vector<4x512xf32> to vector<4x256xf32>
    %596 = vector.broadcast %0 : vector<1x256xf32> to vector<4x256xf32>
    %597 = arith.mulf %595, %596 : vector<4x256xf32>
    %c120_334 = arith.constant 120 : index
    %c0_335 = arith.constant 0 : index
    %598 = vector.load %arg6[%c120_334, %c0_335] : memref<180x256xf32, #tpu.memory_space<vmem>>, vector<4x256xf32>
    tpu.vector_store %arg6[%c120_334, %c0_335], %597 {strides = array<i32>} : memref<180x256xf32, #tpu.memory_space<vmem>>, vector<4x256xf32>,
    %599 = vector.extract_strided_slice %584 {offsets = [0, 128], sizes = [4, 256], strides = [1, 1]} : vector<4x512xf32> to vector<4x256xf32>
    %c124_336 = arith.constant 124 : index
    %c0_337 = arith.constant 0 : index
    %600 = vector.load %arg6[%c124_336, %c0_337] : memref<180x256xf32, #tpu.memory_space<vmem>>, vector<4x256xf32>
    tpu.vector_store %arg6[%c124_336, %c0_337], %599 {strides = array<i32>} : memref<180x256xf32, #tpu.memory_space<vmem>>, vector<4x256xf32>,
    %601 = vector.extract_strided_slice %584 {offsets = [0, 129], sizes = [4, 256], strides = [1, 1]} : vector<4x512xf32> to vector<4x256xf32>
    %602 = vector.broadcast %1 : vector<1x256xf32> to vector<4x256xf32>
    %603 = arith.mulf %601, %602 : vector<4x256xf32>
    %c128_338 = arith.constant 128 : index
    %c0_339 = arith.constant 0 : index
    %604 = vector.load %arg6[%c128_338, %c0_339] : memref<180x256xf32, #tpu.memory_space<vmem>>, vector<4x256xf32>
    tpu.vector_store %arg6[%c128_338, %c0_339], %603 {strides = array<i32>} : memref<180x256xf32, #tpu.memory_space<vmem>>, vector<4x256xf32>,
    %605 = vector.extract_strided_slice %584 {offsets = [0, 143], sizes = [4, 256], strides = [1, 1]} : vector<4x512xf32> to vector<4x256xf32>
    %606 = vector.broadcast %0 : vector<1x256xf32> to vector<4x256xf32>
    %607 = arith.mulf %605, %606 : vector<4x256xf32>
    %c132_340 = arith.constant 132 : index
    %c0_341 = arith.constant 0 : index
    %608 = vector.load %arg6[%c132_340, %c0_341] : memref<180x256xf32, #tpu.memory_space<vmem>>, vector<4x256xf32>
    tpu.vector_store %arg6[%c132_340, %c0_341], %607 {strides = array<i32>} : memref<180x256xf32, #tpu.memory_space<vmem>>, vector<4x256xf32>,
    %609 = vector.extract_strided_slice %584 {offsets = [0, 144], sizes = [4, 256], strides = [1, 1]} : vector<4x512xf32> to vector<4x256xf32>
    %c136_342 = arith.constant 136 : index
    %c0_343 = arith.constant 0 : index
    %610 = vector.load %arg6[%c136_342, %c0_343] : memref<180x256xf32, #tpu.memory_space<vmem>>, vector<4x256xf32>
    tpu.vector_store %arg6[%c136_342, %c0_343], %609 {strides = array<i32>} : memref<180x256xf32, #tpu.memory_space<vmem>>, vector<4x256xf32>,
    %611 = vector.extract_strided_slice %584 {offsets = [0, 145], sizes = [4, 256], strides = [1, 1]} : vector<4x512xf32> to vector<4x256xf32>
    %612 = vector.broadcast %1 : vector<1x256xf32> to vector<4x256xf32>
    %613 = arith.mulf %611, %612 : vector<4x256xf32>
    %c140_344 = arith.constant 140 : index
    %c0_345 = arith.constant 0 : index
    %614 = vector.load %arg6[%c140_344, %c0_345] : memref<180x256xf32, #tpu.memory_space<vmem>>, vector<4x256xf32>
    tpu.vector_store %arg6[%c140_344, %c0_345], %613 {strides = array<i32>} : memref<180x256xf32, #tpu.memory_space<vmem>>, vector<4x256xf32>,
    %c13 = arith.constant 13 : index
    %c0_346 = arith.constant 0 : index
    %c0_347 = arith.constant 0 : index
    %615 = vector.load %arg2[%c13, %c0_346, %c0_347] : memref<15x4x180xf32, #tpu.memory_space<vmem>>, vector<1x4x180xf32>
    %616 = vector.shape_cast %615 : vector<1x4x180xf32> to vector<4x180xf32>
    %617 = vector.extract_strided_slice %616 {offsets = [0, 0], sizes = [4, 144], strides = [1, 1]} : vector<4x180xf32> to vector<4x144xf32>
    %c0_348 = arith.constant 0 : index
    %c0_349 = arith.constant 0 : index
    %618 = vector.load %arg6[%c0_348, %c0_349] : memref<180x256xf32, #tpu.memory_space<vmem>>, vector<144x256xf32>
    %cst_350 = arith.constant dense<0.000000e+00> : vector<4x256xf32>
    %619 = tpu.matmul %617, %618, %cst_350 {dimension_numbers = #tpu.dot_dimension_numbers<[1], [0], [0], [1], [0, 0, 1, 1], [], []>} : vector<4x144xf32>, vector<144x256xf32>, vector<4x256xf32> -> vector<4x256xf32>
    %c13_351 = arith.constant 13 : index
    %c0_352 = arith.constant 0 : index
    %c0_353 = arith.constant 0 : index
    %620 = vector.load %arg3[%c13_351, %c0_352, %c0_353] : memref<15x4x1xf32, #tpu.memory_space<vmem>>, vector<1x4x1xf32>
    %621 = vector.shape_cast %620 : vector<1x4x1xf32> to vector<4x1xf32>
    %622 = vector.broadcast %621 : vector<4x1xf32> to vector<4x256xf32>
    %623 = arith.addf %619, %622 : vector<4x256xf32>
    %cst_354 = arith.constant 0.000000e+00 : f32
    %624 = vector.broadcast %cst_354 : f32 to vector<4x256xf32>
    %625 = arith.cmpf oge, %623, %624 : vector<4x256xf32>
    %cst_355 = arith.constant 0.00999999977 : f32
    %626 = vector.broadcast %cst_355 : f32 to vector<4x256xf32>
    %627 = arith.mulf %626, %623 : vector<4x256xf32>
    %628 = arith.select %625, %623, %627 : vector<4x256xi1>, vector<4x256xf32>
    %629 = tpu.concatenate %2, %628, %2 in 1 : vector<4x128xf32>, vector<4x256xf32>, vector<4x128xf32> -> vector<4x512xf32>
    %630 = vector.extract_strided_slice %629 {offsets = [0, 111], sizes = [4, 256], strides = [1, 1]} : vector<4x512xf32> to vector<4x256xf32>
    %631 = vector.broadcast %0 : vector<1x256xf32> to vector<4x256xf32>
    %632 = arith.mulf %630, %631 : vector<4x256xf32>
    %c144_356 = arith.constant 144 : index
    %c0_357 = arith.constant 0 : index
    %633 = vector.load %arg6[%c144_356, %c0_357] : memref<180x256xf32, #tpu.memory_space<vmem>>, vector<4x256xf32>
    tpu.vector_store %arg6[%c144_356, %c0_357], %632 {strides = array<i32>} : memref<180x256xf32, #tpu.memory_space<vmem>>, vector<4x256xf32>,
    %634 = vector.extract_strided_slice %629 {offsets = [0, 112], sizes = [4, 256], strides = [1, 1]} : vector<4x512xf32> to vector<4x256xf32>
    %c148_358 = arith.constant 148 : index
    %c0_359 = arith.constant 0 : index
    %635 = vector.load %arg6[%c148_358, %c0_359] : memref<180x256xf32, #tpu.memory_space<vmem>>, vector<4x256xf32>
    tpu.vector_store %arg6[%c148_358, %c0_359], %634 {strides = array<i32>} : memref<180x256xf32, #tpu.memory_space<vmem>>, vector<4x256xf32>,
    %636 = vector.extract_strided_slice %629 {offsets = [0, 113], sizes = [4, 256], strides = [1, 1]} : vector<4x512xf32> to vector<4x256xf32>
    %637 = vector.broadcast %1 : vector<1x256xf32> to vector<4x256xf32>
    %638 = arith.mulf %636, %637 : vector<4x256xf32>
    %c152_360 = arith.constant 152 : index
    %c0_361 = arith.constant 0 : index
    %639 = vector.load %arg6[%c152_360, %c0_361] : memref<180x256xf32, #tpu.memory_space<vmem>>, vector<4x256xf32>
    tpu.vector_store %arg6[%c152_360, %c0_361], %638 {strides = array<i32>} : memref<180x256xf32, #tpu.memory_space<vmem>>, vector<4x256xf32>,
    %640 = vector.extract_strided_slice %629 {offsets = [0, 127], sizes = [4, 256], strides = [1, 1]} : vector<4x512xf32> to vector<4x256xf32>
    %641 = vector.broadcast %0 : vector<1x256xf32> to vector<4x256xf32>
    %642 = arith.mulf %640, %641 : vector<4x256xf32>
    %c156_362 = arith.constant 156 : index
    %c0_363 = arith.constant 0 : index
    %643 = vector.load %arg6[%c156_362, %c0_363] : memref<180x256xf32, #tpu.memory_space<vmem>>, vector<4x256xf32>
    tpu.vector_store %arg6[%c156_362, %c0_363], %642 {strides = array<i32>} : memref<180x256xf32, #tpu.memory_space<vmem>>, vector<4x256xf32>,
    %644 = vector.extract_strided_slice %629 {offsets = [0, 128], sizes = [4, 256], strides = [1, 1]} : vector<4x512xf32> to vector<4x256xf32>
    %c160_364 = arith.constant 160 : index
    %c0_365 = arith.constant 0 : index
    %645 = vector.load %arg6[%c160_364, %c0_365] : memref<180x256xf32, #tpu.memory_space<vmem>>, vector<4x256xf32>
    tpu.vector_store %arg6[%c160_364, %c0_365], %644 {strides = array<i32>} : memref<180x256xf32, #tpu.memory_space<vmem>>, vector<4x256xf32>,
    %646 = vector.extract_strided_slice %629 {offsets = [0, 129], sizes = [4, 256], strides = [1, 1]} : vector<4x512xf32> to vector<4x256xf32>
    %647 = vector.broadcast %1 : vector<1x256xf32> to vector<4x256xf32>
    %648 = arith.mulf %646, %647 : vector<4x256xf32>
    %c164_366 = arith.constant 164 : index
    %c0_367 = arith.constant 0 : index
    %649 = vector.load %arg6[%c164_366, %c0_367] : memref<180x256xf32, #tpu.memory_space<vmem>>, vector<4x256xf32>
    tpu.vector_store %arg6[%c164_366, %c0_367], %648 {strides = array<i32>} : memref<180x256xf32, #tpu.memory_space<vmem>>, vector<4x256xf32>,
    %650 = vector.extract_strided_slice %629 {offsets = [0, 143], sizes = [4, 256], strides = [1, 1]} : vector<4x512xf32> to vector<4x256xf32>
    %651 = vector.broadcast %0 : vector<1x256xf32> to vector<4x256xf32>
    %652 = arith.mulf %650, %651 : vector<4x256xf32>
    %c168_368 = arith.constant 168 : index
    %c0_369 = arith.constant 0 : index
    %653 = vector.load %arg6[%c168_368, %c0_369] : memref<180x256xf32, #tpu.memory_space<vmem>>, vector<4x256xf32>
    tpu.vector_store %arg6[%c168_368, %c0_369], %652 {strides = array<i32>} : memref<180x256xf32, #tpu.memory_space<vmem>>, vector<4x256xf32>,
    %654 = vector.extract_strided_slice %629 {offsets = [0, 144], sizes = [4, 256], strides = [1, 1]} : vector<4x512xf32> to vector<4x256xf32>
    %c172_370 = arith.constant 172 : index
    %c0_371 = arith.constant 0 : index
    %655 = vector.load %arg6[%c172_370, %c0_371] : memref<180x256xf32, #tpu.memory_space<vmem>>, vector<4x256xf32>
    tpu.vector_store %arg6[%c172_370, %c0_371], %654 {strides = array<i32>} : memref<180x256xf32, #tpu.memory_space<vmem>>, vector<4x256xf32>,
    %656 = vector.extract_strided_slice %629 {offsets = [0, 145], sizes = [4, 256], strides = [1, 1]} : vector<4x512xf32> to vector<4x256xf32>
    %657 = vector.broadcast %1 : vector<1x256xf32> to vector<4x256xf32>
    %658 = arith.mulf %656, %657 : vector<4x256xf32>
    %c176_372 = arith.constant 176 : index
    %c0_373 = arith.constant 0 : index
    %659 = vector.load %arg6[%c176_372, %c0_373] : memref<180x256xf32, #tpu.memory_space<vmem>>, vector<4x256xf32>
    tpu.vector_store %arg6[%c176_372, %c0_373], %658 {strides = array<i32>} : memref<180x256xf32, #tpu.memory_space<vmem>>, vector<4x256xf32>,
    %c14 = arith.constant 14 : index
    %c0_374 = arith.constant 0 : index
    %c0_375 = arith.constant 0 : index
    %660 = vector.load %arg2[%c14, %c0_374, %c0_375] : memref<15x4x180xf32, #tpu.memory_space<vmem>>, vector<1x4x180xf32>
    %661 = vector.shape_cast %660 : vector<1x4x180xf32> to vector<4x180xf32>
    %c0_376 = arith.constant 0 : index
    %c0_377 = arith.constant 0 : index
    %662 = vector.load %arg6[%c0_376, %c0_377] : memref<180x256xf32, #tpu.memory_space<vmem>>, vector<180x256xf32>
    %cst_378 = arith.constant dense<0.000000e+00> : vector<4x256xf32>
    %663 = tpu.matmul %661, %662, %cst_378 {dimension_numbers = #tpu.dot_dimension_numbers<[1], [0], [0], [1], [0, 0, 1, 1], [], []>} : vector<4x180xf32>, vector<180x256xf32>, vector<4x256xf32> -> vector<4x256xf32>
    %c14_379 = arith.constant 14 : index
    %c0_380 = arith.constant 0 : index
    %c0_381 = arith.constant 0 : index
    %664 = vector.load %arg3[%c14_379, %c0_380, %c0_381] : memref<15x4x1xf32, #tpu.memory_space<vmem>>, vector<1x4x1xf32>
    %665 = vector.shape_cast %664 : vector<1x4x1xf32> to vector<4x1xf32>
    %666 = vector.broadcast %665 : vector<4x1xf32> to vector<4x256xf32>
    %667 = arith.addf %663, %666 : vector<4x256xf32>
    %cst_382 = arith.constant 2.000000e-01 : f32
    %668 = vector.broadcast %cst_382 : f32 to vector<4x256xf32>
    %669 = arith.mulf %667, %668 : vector<4x256xf32>
    %670 = arith.addf %669, %448 : vector<4x256xf32>
    %cst_383 = arith.constant 2.000000e-01 : f32
    %671 = vector.broadcast %cst_383 : f32 to vector<4x256xf32>
    %672 = arith.mulf %670, %671 : vector<4x256xf32>
    %673 = arith.addf %672, %4 : vector<4x256xf32>
    %c0_384 = arith.constant 0 : index
    %c0_385 = arith.constant 0 : index
    %c0_386 = arith.constant 0 : index
    %674 = vector.load %arg5[%c0_384, %c0_385, %c0_386] : memref<1x4x256xf32, #tpu.memory_space<vmem>>, vector<1x4x256xf32>
    %675 = vector.shape_cast %674 : vector<1x4x256xf32> to vector<4x256xf32>
    %676 = vector.shape_cast %673 : vector<4x256xf32> to vector<1x4x256xf32>
    tpu.vector_store %arg5[%c0_384, %c0_385, %c0_386], %676 {strides = array<i32>} : memref<1x4x256xf32, #tpu.memory_space<vmem>>, vector<1x4x256xf32>,
    return
  }
  func.func @transform_0(%arg0: i32) -> (i32, i32, i32) {
    %c0_i32 = arith.constant 0 : i32
    %c0_i32_0 = arith.constant 0 : i32
    %c0_i32_1 = arith.constant 0 : i32
    return %arg0, %c0_i32, %c0_i32_0 : i32, i32, i32
  }
  func.func @transform_1(%arg0: i32) -> (i32, i32, i32) {
    %c0_i32 = arith.constant 0 : i32
    %c0_i32_0 = arith.constant 0 : i32
    %c0_i32_1 = arith.constant 0 : i32
    %c0_i32_2 = arith.constant 0 : i32
    return %c0_i32, %c0_i32_0, %c0_i32_1 : i32, i32, i32
  }
  func.func @transform_2(%arg0: i32) -> (i32, i32, i32) {
    %c0_i32 = arith.constant 0 : i32
    %c0_i32_0 = arith.constant 0 : i32
    %c0_i32_1 = arith.constant 0 : i32
    %c0_i32_2 = arith.constant 0 : i32
    return %c0_i32, %c0_i32_0, %c0_i32_1 : i32, i32, i32
  }
  func.func @transform_3(%arg0: i32) -> (i32, i32) {
    %c0_i32 = arith.constant 0 : i32
    %c0_i32_0 = arith.constant 0 : i32
    %c0_i32_1 = arith.constant 0 : i32
    return %c0_i32, %c0_i32_0 : i32, i32
  }
  func.func @transform_4(%arg0: i32) -> (i32, i32, i32) {
    %c0_i32 = arith.constant 0 : i32
    %c0_i32_0 = arith.constant 0 : i32
    %c0_i32_1 = arith.constant 0 : i32
    return %arg0, %c0_i32, %c0_i32_0 : i32, i32, i32
  }
}

</mosaic_0001>

<llo_original>
// kernel: shortcut_rrdb_forward.1
$region0: #{shortcut_rrdb_forward.1}
  #allocation0 [shape = 'u32[]', space=smem, size = 0x4, offset = 0x4, fixed_abs, tag = 'smem constant byte address 0x4 - core index']
  #allocation1 [shape = 'u32[144,128]{1,0:T(1,128)}', space=vmem, size = 0x12000, scoped, tag = 'internal scratch']
  #allocation2 [shape = 'f32[180,256]{1,0:T(8,128)}', space=vmem, size = 0x2e000, scoped, tag = 'scratch operand']
  %s0 = inlined_call_operand.vmem [shape: f32[2,4,256], index: 0, kind: input, shape index: {}]
  %s1 = inlined_call_operand.vmem [shape: f32[15,4,180], index: 1, kind: input, shape index: {}]
  %s2 = inlined_call_operand.vmem [shape: f32[15,4,1], index: 2, kind: input, shape index: {}]
  %s3 = inlined_call_operand.vmem [shape: f32[2,256], index: 3, kind: input, shape index: {}]
  %s4 = inlined_call_operand.vmem [shape: f32[2,4,256], index: 4, kind: output, shape index: {}]
  %s5 = sld [smem:[#allocation0]]
  $region49: #{shortcut_rrdb_forward.1} parent=0
    _
  %s7 = ssub.s32 1, %s5
  %s8 = scalar_select 0, %s7, %s5
  loop: start=0, step=1, limit=4
  $region2: #{shortcut_rrdb_forward.1} parent=0 // loop_pre_header
    _
  $region3: #{shortcut_rrdb_forward.1} parent=0 // loop_header
    %s10 = sphi 0, %s14
    %p11 = scmp.ge.s32.totalorder %s10, 4
    %s20 = sphi 0, %s22
    %s23 = sphi 0, %s20
    %s24 = sphi 0, %s23
    %s40 = sphi 0, %s24
    %s44 = sphi 0, %s44
    %s46 = sphi 0, %s44
    %s47 = sphi 0, %s46
    %s61 = sphi 0, %s47
    %s65 = sphi 0, %s65
    %s67 = sphi 0, %s65
    %s68 = sphi 0, %s67
    %s82 = sphi 0, %s68
    %s86 = sphi 0, %s86
    %s88 = sphi 0, %s86
    %s89 = sphi 0, %s88
    %s103 = sphi 0, %s89
    %s109 = sphi 0, %s111
    %s112 = sphi 0, %s109
    %s113 = sphi 0, %s112
    %s129 = sphi 0, %s113
  $region4: #{shortcut_rrdb_forward.1} parent=0 // loop_header_branch
    %13 = sbr.rel (%p11) target = $region8
  $region5: #{shortcut_rrdb_forward.1} parent=0 // loop_body
    %s15 = ssub.s32 %s10, 1
    %s16 = ssub.s32 %s10, 2
    %s17 = sadd.s32 %s10, 1
    %s18 = ssub.s32 %s10, %s17
    %p19 = scmp.eq.s32.totalorder %s18, 0
    %s21 = sadd.s32 %s20, 1
    %s22 = scalar_select %p19, %s20, %s21
    %p25 = pneg %p19
    %p26 = scmp.eq.s32.totalorder %s10, 1
    %p27 = por %p25, %p26
    %p28 = scmp.ne.s32.totalorder %s20, %s23
    %p29 = scmp.eq.s32.totalorder %s10, 0
    %p30 = por %p28, %p29
    %p31 = scmp.ne.s32.totalorder %s20, %s23
    %p32 = scmp.eq.s32.totalorder %s15, 1
    %p33 = por %p31, %p32
    %p34 = scmp.ne.s32.totalorder %s23, %s24
    %p35 = scmp.eq.s32.totalorder %s15, 0
    %p36 = por %p34, %p35
    %p37 = scmp.ne.s32.totalorder %s23, %s24
    %p38 = scmp.eq.s32.totalorder %s16, 1
    %p39 = por %p37, %p38
    %p41 = scmp.ne.s32.totalorder %s24, %s40
    %p42 = scmp.eq.s32.totalorder %s16, 0
    %p43 = por %p41, %p42
    %s45 = sadd.s32 %s44, 1
    %p48 = scmp.eq.s32.totalorder %s10, 1
    %p49 = scmp.ne.s32.totalorder %s44, %s46
    %p50 = scmp.eq.s32.totalorder %s10, 0
    %p51 = por %p49, %p50
    %p52 = scmp.ne.s32.totalorder %s44, %s46
    %p53 = scmp.eq.s32.totalorder %s15, 1
    %p54 = por %p52, %p53
    %p55 = scmp.ne.s32.totalorder %s46, %s47
    %p56 = scmp.eq.s32.totalorder %s15, 0
    %p57 = por %p55, %p56
    %p58 = scmp.ne.s32.totalorder %s46, %s47
    %p59 = scmp.eq.s32.totalorder %s16, 1
    %p60 = por %p58, %p59
    %p62 = scmp.ne.s32.totalorder %s47, %s61
    %p63 = scmp.eq.s32.totalorder %s16, 0
    %p64 = por %p62, %p63
    %s66 = sadd.s32 %s65, 1
    %p69 = scmp.eq.s32.totalorder %s10, 1
    %p70 = scmp.ne.s32.totalorder %s65, %s67
    %p71 = scmp.eq.s32.totalorder %s10, 0
    %p72 = por %p70, %p71
    %p73 = scmp.ne.s32.totalorder %s65, %s67
    %p74 = scmp.eq.s32.totalorder %s15, 1
    %p75 = por %p73, %p74
    %p76 = scmp.ne.s32.totalorder %s67, %s68
    %p77 = scmp.eq.s32.totalorder %s15, 0
    %p78 = por %p76, %p77
    %p79 = scmp.ne.s32.totalorder %s67, %s68
    %p80 = scmp.eq.s32.totalorder %s16, 1
    %p81 = por %p79, %p80
    %p83 = scmp.ne.s32.totalorder %s68, %s82
    %p84 = scmp.eq.s32.totalorder %s16, 0
    %p85 = por %p83, %p84
    %s87 = sadd.s32 %s86, 1
    %p90 = scmp.eq.s32.totalorder %s10, 1
    %p91 = scmp.ne.s32.totalorder %s86, %s88
    %p92 = scmp.eq.s32.totalorder %s10, 0
    %p93 = por %p91, %p92
    %p94 = scmp.ne.s32.totalorder %s86, %s88
    %p95 = scmp.eq.s32.totalorder %s15, 1
    %p96 = por %p94, %p95
    %p97 = scmp.ne.s32.totalorder %s88, %s89
    %p98 = scmp.eq.s32.totalorder %s15, 0
    %p99 = por %p97, %p98
    %p100 = scmp.ne.s32.totalorder %s88, %s89
    %p101 = scmp.eq.s32.totalorder %s16, 1
    %p102 = por %p100, %p101
    %p104 = scmp.ne.s32.totalorder %s89, %s103
    %p105 = scmp.eq.s32.totalorder %s16, 0
    %p106 = por %p104, %p105
    %s107 = ssub.s32 %s10, %s17
    %p108 = scmp.eq.s32.totalorder %s107, 0
    %s110 = sadd.s32 %s109, 1
    %s111 = scalar_select %p108, %s109, %s110
    %p114 = pneg %p108
    %p115 = scmp.eq.s32.totalorder %s10, 1
    %p116 = por %p114, %p115
    %p117 = scmp.ne.s32.totalorder %s109, %s112
    %p118 = scmp.eq.s32.totalorder %s10, 0
    %p119 = por %p117, %p118
    %p120 = scmp.ne.s32.totalorder %s109, %s112
    %p121 = scmp.eq.s32.totalorder %s15, 1
    %p122 = por %p120, %p121
    %p123 = scmp.ne.s32.totalorder %s112, %s113
    %p124 = scmp.eq.s32.totalorder %s15, 0
    %p125 = por %p123, %p124
    %p126 = scmp.ne.s32.totalorder %s112, %s113
    %p127 = scmp.eq.s32.totalorder %s16, 1
    %p128 = por %p126, %p127
    %p130 = scmp.ne.s32.totalorder %s113, %s129
    %p131 = scmp.eq.s32.totalorder %s16, 0
    %p132 = por %p130, %p131
    %p133 = scmp.le.s32.totalorder 1, %s10
    %p134 = scmp.lt.s32.totalorder %s10, 3
    %p135 = pnand %p133, %p134
    %p136 = pneg %p135
    // Predicated region
    $region9: #{shortcut_rrdb_forward.1} parent=5 // pred_check
      _
    $region10: #{shortcut_rrdb_forward.1} parent=5 // pred_check_branch
      %138 = sbr.rel (%p135) target = $region12
    $region11: #{shortcut_rrdb_forward.1} parent=5 // pred_region
      %s139 = ssub.s32 %s10, 1
      // Predicated region
      $region13: #{shortcut_rrdb_forward.1} parent=11 // pred_check
        %p140 = pneg %p57
      $region14: #{shortcut_rrdb_forward.1} parent=11 // pred_check_branch
        %142 = sbr.rel (%p140) target = $region16
      $region15: #{shortcut_rrdb_forward.1} parent=11 // pred_region
        _
      $region16: #{shortcut_rrdb_forward.1} parent=11 // pred_fallthru
        _
      // Predicated region
      $region17: #{shortcut_rrdb_forward.1} parent=11 // pred_check
        %p143 = pneg %p78
      $region18: #{shortcut_rrdb_forward.1} parent=11 // pred_check_branch
        %145 = sbr.rel (%p143) target = $region20
      $region19: #{shortcut_rrdb_forward.1} parent=11 // pred_region
        _
      $region20: #{shortcut_rrdb_forward.1} parent=11 // pred_fallthru
        _
      // Predicated region
      $region21: #{shortcut_rrdb_forward.1} parent=11 // pred_check
        %p146 = pneg %p99
      $region22: #{shortcut_rrdb_forward.1} parent=11 // pred_check_branch
        %148 = sbr.rel (%p146) target = $region24
      $region23: #{shortcut_rrdb_forward.1} parent=11 // pred_region
        _
      $region24: #{shortcut_rrdb_forward.1} parent=11 // pred_fallthru
        _
    $region12: #{shortcut_rrdb_forward.1} parent=5 // pred_fallthru
      _
    %p149 = scmp.lt.s32.totalorder %s10, 2
    // Predicated region
    $region25: #{shortcut_rrdb_forward.1} parent=5 // pred_check
      %p150 = pneg %p149
    $region26: #{shortcut_rrdb_forward.1} parent=5 // pred_check_branch
      %152 = sbr.rel (%p150) target = $region28
    $region27: #{shortcut_rrdb_forward.1} parent=5 // pred_region
      // Predicated region
      $region29: #{shortcut_rrdb_forward.1} parent=27 // pred_check
        %p153 = pneg %p30
      $region30: #{shortcut_rrdb_forward.1} parent=27 // pred_check_branch
        %155 = sbr.rel (%p153) target = $region32
      $region31: #{shortcut_rrdb_forward.1} parent=27 // pred_region
        %p156 = scmp.lt.s32.totalorder %s10, 1
        %s157 = scalar_select %p156, %s10, 1
        %s158 = smul.addr %s157, 2
        %s159 = smul.addr %s158, 4
        %s160 = scalar_lea.vmem %s0, %s159
      $region32: #{shortcut_rrdb_forward.1} parent=27 // pred_fallthru
        _
    $region28: #{shortcut_rrdb_forward.1} parent=5 // pred_fallthru
      _
    %p161 = scmp.le.s32.totalorder 1, %s10
    %p162 = scmp.lt.s32.totalorder %s10, 3
    %p163 = pnand %p161, %p162
    %p164 = pneg %p163
    // Predicated region
    $region33: #{shortcut_rrdb_forward.1} parent=5 // pred_check
      _
    $region34: #{shortcut_rrdb_forward.1} parent=5 // pred_check_branch
      %166 = sbr.rel (%p163) target = $region36
    $region35: #{shortcut_rrdb_forward.1} parent=5 // pred_region
      %s167 = ssub.s32 %s10, 1
      %p168 = scmp.lt.s32.totalorder %s15, 1
      %s169 = scalar_select %p168, %s15, 1
      %s170 = smul.addr %s169, 2
      %s171 = smul.addr %s170, 4
      %s172 = scalar_lea.vmem %s0, %s171
      %p173 = pneg %p36
      %p174 = pneg %p33
      %p175 = pneg %p57
      %p176 = pneg %p54
      %p177 = pneg %p78
      %p178 = pneg %p75
      %p179 = pneg %p99
      %p180 = pneg %p96
      %p181 = pneg %p125
      %p182 = pneg %p122
      %p183 = scmp.lt.s32.totalorder %s15, 1
      %s184 = scalar_select %p183, %s15, 1
      %s185 = smul.addr %s184, 2
      %s186 = smul.addr %s185, 4
      %s187 = scalar_lea.vmem %s4, %s186
      %p188 = scmp.lt.s32.totalorder %s15, 1
      %s189 = scalar_select %p188, %s15, 1
      %s190 = smul.addr %s189, 2
      %s191 = smul.addr %s190, 4
      %s192 = scalar_lea.vmem %s0, %s191
      %p193 = scmp.lt.s32.totalorder %s15, 1
      %s194 = scalar_select %p193, %s15, 1
      %s195 = smul.addr %s194, 2
      %s196 = smul.addr %s195, 4
      %s197 = scalar_lea.vmem %s4, %s196
      %v198 = vld [vmem:[%s3] ss:$2 sm:$0x3]
      %s199 = scalar_lea.vmem %s3, 1
      %v200 = vld [vmem:[%s199] ss:$2 sm:$0x3]
      %v201 = vld [vmem:[%s192] sm:$0xff]
      %v203 = vcombine.high %v201, %v201
      %v206 = vlaneseq
      %v207 = vshrl.u32 %v206, 7
      %v208 = vsub.s32 0, %v207
      %v209 = vrot.slane %v198, %v208
      %v210 = vlaneseq
      %v211 = vshrl.u32 %v210, 7
      %v212 = vsub.s32 1, %v211
      %v213 = vrot.slane %v198, %v212
      %214 = vrot.lane.b32.xlu0 %v209, 111
      %v215 = vpop.permute.xlu0 %214
      %216 = vrot.lane.b32.xlu0 %v213, 111
      %v217 = vpop.permute.xlu0 %216
      %vm218 = vcmask 908288
      %v219 = vsel %vm218, %v215, %v217
      %v223 = vmul.f32 %v215, 0.0
      %v224 = vmul.f32 %v201, %v219
      %v225 = vmul.f32 %v203, %v217
      %229 = vrot.lane.b32.xlu0 %v223, 17
      %v230 = vpop.permute.xlu0 %229
      %231 = vrot.lane.b32.xlu0 %v224, 17
      %v232 = vpop.permute.xlu0 %231
      %233 = vrot.lane.b32.xlu0 %v225, 17
      %v234 = vpop.permute.xlu0 %233
      %vm235 = vcmask 138240
      %v236 = vsel %vm235, %v230, %v232
      %v237 = vsel %vm235, %v232, %v234
      %240 = vst [vmem:[#allocation2] sm:$0xf] %v236
      %241 = vst [vmem:[#allocation2 + $0x8] sm:$0xf] %v237
      %v243 = vrot.slane 0.0, 4
      %v244 = vrot.slane %v201, 4
      %v245 = vrot.slane %v203, 4
      %246 = vrot.lane.b32.xlu0 %v243, 16
      %v247 = vpop.permute.xlu0 %246
      %248 = vrot.lane.b32.xlu0 %v244, 16
      %v249 = vpop.permute.xlu0 %248
      %250 = vrot.lane.b32.xlu0 %v245, 16
      %v251 = vpop.permute.xlu0 %250
      %vm252 = vcmask 130048
      %v253 = vsel %vm252, %v247, %v249
      %v254 = vsel %vm252, %v249, %v251
      %257 = vst [vmem:[#allocation2] sm:$0xf0] %v253
      %258 = vst [vmem:[#allocation2 + $0x8] sm:$0xf0] %v254
      %v260 = vlaneseq
      %v261 = vshrl.u32 %v260, 7
      %v262 = vsub.s32 0, %v261
      %v263 = vrot.slane %v200, %v262
      %v264 = vlaneseq
      %v265 = vshrl.u32 %v264, 7
      %v266 = vsub.s32 1, %v265
      %v267 = vrot.slane %v200, %v266
      %268 = vrot.lane.b32.xlu0 %v263, 113
      %v269 = vpop.permute.xlu0 %268
      %270 = vrot.lane.b32.xlu0 %v267, 113
      %v271 = vpop.permute.xlu0 %270
      %vm272 = vcmask 924672
      %v273 = vsel %vm272, %v269, %v271
      %v277 = vmul.f32 %v269, 0.0
      %v278 = vmul.f32 %v201, %v273
      %v279 = vmul.f32 %v203, %v271
      %283 = vrot.lane.b32.xlu0 %v277, 15
      %v284 = vpop.permute.xlu0 %283
      %285 = vrot.lane.b32.xlu0 %v278, 15
      %v286 = vpop.permute.xlu0 %285
      %287 = vrot.lane.b32.xlu0 %v279, 15
      %v288 = vpop.permute.xlu0 %287
      %vm289 = vcmask 121856
      %v290 = vsel %vm289, %v284, %v286
      %v291 = vsel %vm289, %v286, %v288
      %294 = vst [vmem:[#allocation2 + $0x10] sm:$0xf] %v290
      %295 = vst [vmem:[#allocation2 + $0x18] sm:$0xf] %v291
      %296 = vrot.lane.b32.xlu0 %v209, 127
      %v297 = vpop.permute.xlu0 %296
      %298 = vrot.lane.b32.xlu0 %v213, 127
      %v299 = vpop.permute.xlu0 %298
      %vm300 = vcmask 1039360
      %v301 = vsel %vm300, %v297, %v299
      %v305 = vmul.f32 %v297, 0.0
      %v306 = vmul.f32 %v201, %v301
      %v307 = vmul.f32 %v203, %v299
      %v311 = vrot.slane %v305, 4
      %v312 = vrot.slane %v306, 4
      %v313 = vrot.slane %v307, 4
      %314 = vrot.lane.b32.xlu0 %v311, 1
      %v315 = vpop.permute.xlu0 %314
      %316 = vrot.lane.b32.xlu0 %v312, 1
      %v317 = vpop.permute.xlu0 %316
      %318 = vrot.lane.b32.xlu0 %v313, 1
      %v319 = vpop.permute.xlu0 %318
      %vm320 = vcmask 7168
      %v321 = vsel %vm320, %v315, %v317
      %v322 = vsel %vm320, %v317, %v319
      %325 = vst [vmem:[#allocation2 + $0x10] sm:$0xf0] %v321
      %326 = vst [vmem:[#allocation2 + $0x18] sm:$0xf0] %v322
      %327 = vst [vmem:[#allocation2 + $0x20] sm:$0xf] %v201
      %328 = vst [vmem:[#allocation2 + $0x28] sm:$0xf] %v203
      %329 = vrot.lane.b32.xlu0 %v263, 1
      %v330 = vpop.permute.xlu0 %329
      %331 = vrot.lane.b32.xlu0 %v267, 1
      %v332 = vpop.permute.xlu0 %331
      %v333 = vsel %vm320, %v330, %v332
      %v337 = vmul.f32 %v201, %v330
      %v338 = vmul.f32 %v203, %v333
      %v339 = vmul.f32 %v332, 0.0
      %v343 = vrot.slane %v337, 4
      %v344 = vrot.slane %v338, 4
      %v345 = vrot.slane %v339, 4
      %346 = vrot.lane.b32.xlu0 %v343, 127
      %v347 = vpop.permute.xlu0 %346
      %348 = vrot.lane.b32.xlu0 %v344, 127
      %v349 = vpop.permute.xlu0 %348
      %350 = vrot.lane.b32.xlu0 %v345, 127
      %v351 = vpop.permute.xlu0 %350
      %v352 = vsel %vm300, %v347, %v349
      %v353 = vsel %vm300, %v349, %v351
      %356 = vst [vmem:[#allocation2 + $0x20] sm:$0xf0] %v352
      %357 = vst [vmem:[#allocation2 + $0x28] sm:$0xf0] %v353
      %358 = vrot.lane.b32.xlu0 %v209, 15
      %v359 = vpop.permute.xlu0 %358
      %360 = vrot.lane.b32.xlu0 %v213, 15
      %v361 = vpop.permute.xlu0 %360
      %v362 = vsel %vm289, %v359, %v361
      %v366 = vmul.f32 %v201, %v359
      %v367 = vmul.f32 %v203, %v362
      %v368 = vmul.f32 %v361, 0.0
      %372 = vrot.lane.b32.xlu0 %v366, 113
      %v373 = vpop.permute.xlu0 %372
      %374 = vrot.lane.b32.xlu0 %v367, 113
      %v375 = vpop.permute.xlu0 %374
      %376 = vrot.lane.b32.xlu0 %v368, 113
      %v377 = vpop.permute.xlu0 %376
      %v378 = vsel %vm272, %v373, %v375
      %v379 = vsel %vm272, %v375, %v377
      %382 = vst [vmem:[#allocation2 + $0x30] sm:$0xf] %v378
      %383 = vst [vmem:[#allocation2 + $0x38] sm:$0xf] %v379
      %384 = vrot.lane.b32.xlu0 %v244, 112
      %v385 = vpop.permute.xlu0 %384
      %386 = vrot.lane.b32.xlu0 %v245, 112
      %v387 = vpop.permute.xlu0 %386
      %388 = vrot.lane.b32.xlu0 %v243, 112
      %v389 = vpop.permute.xlu0 %388
      %vm390 = vcmask 916480
      %v391 = vsel %vm390, %v385, %v387
      %v392 = vsel %vm390, %v387, %v389
      %395 = vst [vmem:[#allocation2 + $0x30] sm:$0xf0] %v391
      %396 = vst [vmem:[#allocation2 + $0x38] sm:$0xf0] %v392
      %397 = vrot.lane.b32.xlu0 %v263, 17
      %v398 = vpop.permute.xlu0 %397
      %399 = vrot.lane.b32.xlu0 %v267, 17
      %v400 = vpop.permute.xlu0 %399
      %v401 = vsel %vm235, %v398, %v400
      %v405 = vmul.f32 %v201, %v398
      %v406 = vmul.f32 %v203, %v401
      %v407 = vmul.f32 %v400, 0.0
      %411 = vrot.lane.b32.xlu0 %v405, 111
      %v412 = vpop.permute.xlu0 %411
      %413 = vrot.lane.b32.xlu0 %v406, 111
      %v414 = vpop.permute.xlu0 %413
      %415 = vrot.lane.b32.xlu0 %v407, 111
      %v416 = vpop.permute.xlu0 %415
      %v417 = vsel %vm218, %v412, %v414
      %v418 = vsel %vm218, %v414, %v416
      %421 = vst [vmem:[#allocation2 + $0x40] sm:$0xf] %v417
      %422 = vst [vmem:[#allocation2 + $0x48] sm:$0xf] %v418
      %v423 = vld [vmem:[%s1] sm:$0xff]
      %v424 = vld [vmem:[#allocation2] sm:$0xff]
      %v425 = vld [vmem:[#allocation2 + $0x8] sm:$0xff]
      %v426 = vld [vmem:[#allocation2 + $0x10] sm:$0xff]
      %v427 = vld [vmem:[#allocation2 + $0x18] sm:$0xff]
      %v428 = vld [vmem:[#allocation2 + $0x20] sm:$0xff]
      %v429 = vld [vmem:[#allocation2 + $0x28] sm:$0xff]
      %v430 = vld [vmem:[#allocation2 + $0x30] sm:$0xff]
      %v431 = vld [vmem:[#allocation2 + $0x38] sm:$0xff]
      %v432 = vld [vmem:[#allocation2 + $0x40] sm:$0xf]
      %v433 = vld [vmem:[#allocation2 + $0x48] sm:$0xf]
      %v434 = vld [vmem:[%s2] sm:$0xf]
      %436 = vset.pattern.permute.xlu0 0
      %437 = vperm.xlu0 %436, %v434
      %v438 = vpop.permute.xlu0 %437
      %vm440 = vcmask 293888
      %v442 = vsel %vm440, %v423, 0
      %vm444 = vcmask 1043456
      %v446 = vsel %vm444, %v432, 0
      %v449 = vsel %vm444, %v433, 0
      %451 = vmatprep.subr.mxu0 %v425
      %452 = vmatpush1.msra.mxu0 %v424
      %453 = vmatprep.subr.mxu0 %v427
      %454 = vmatpush1.msra.mxu0 %v426
      %455 = vmatprep.subr.mxu0 %v429
      %456 = vmatpush1.msra.mxu0 %v428
      %457 = vmatprep.subr.mxu0 %v431
      %458 = vmatpush1.msra.mxu0 %v430
      %459 = vmatprep.subr.mxu0 %v449
      %460 = vmatpush1.msra.mxu0 %v446
      %461 = vmatprep.subr.mxu0 0.0
      %462 = vmatpush1.msra.mxu0 0.0
      %463 = vmatprep.subr.mxu0 0.0
      %464 = vmatpush1.msra.mxu0 0.0
      %465 = vmatprep.subr.mxu0 0.0
      %466 = vmatpush1.msra.mxu0 0.0
      %467 = vmatprep.subr.mxu0 0.0
      %468 = vmatpush1.msra.mxu0 0.0
      %469 = vmatprep.subr.mxu0 0.0
      %470 = vmatpush1.msra.mxu0 0.0
      %471 = vmatprep.subr.mxu0 0.0
      %472 = vmatpush1.msra.mxu0 0.0
      %473 = vmatprep.subr.mxu0 0.0
      %474 = vmatpush1.msra.mxu0 0.0
      %475 = vmatprep.subr.mxu0 0.0
      %476 = vmatpush1.msra.mxu0 0.0
      %477 = vmatprep.subr.mxu0 0.0
      %478 = vmatpush1.msra.mxu0 0.0
      %479 = vmatprep.subr.mxu0 0.0
      %480 = vmatpush1.msra.mxu0 0.0
      %481 = vmatprep.subr.mxu0 0.0
      %482 = vmatpush1.msra.mxu0 0.0
      %483 = vmatprep.subr.mxu0 0.0
      %484 = vmatpush1.msra.mxu0 0.0
      %485 = vmatprep.subr.mxu0 0.0
      %486 = vmatpush1.msra.mxu0 0.0
      %487 = vmatprep.subr.mxu0 0.0
      %488 = vmatpush1.msra.mxu0 0.0
      %489 = vmatprep.subr.mxu0 0.0
      %490 = vmatpush1.msra.mxu0 0.0
      %491 = vmatprep.subr.mxu0 0.0
      %492 = vmatpush1.msra.mxu0 0.0
      %493 = vmatprep.subr.mxu0 0.0
      %494 = vmatpush1.msra.mxu0 0.0
      %495 = vmatprep.subr.mxu0 0.0
      %496 = vmatpush1.msra.mxu0 0.0
      %497 = vmatprep.subr.mxu0 0.0
      %498 = vmatpush1.msra.mxu0 0.0
      %499 = vmatprep.subr.mxu0 0.0
      %500 = vmatpush1.msra.mxu0 0.0
      %501 = vmatprep.subr.mxu0 0.0
      %502 = vmatpush1.msra.mxu0 0.0
      %503 = vmatprep.subr.mxu0 0.0
      %504 = vmatpush1.msra.mxu0 0.0
      %505 = vmatprep.subr.mxu0 0.0
      %506 = vmatpush1.msra.mxu0 0.0
      %507 = vmatprep.subr.mxu0 0.0
      %508 = vmatpush1.msra.mxu0 0.0
      %509 = vmatprep.subr.mxu0 0.0
      %510 = vmatpush1.msra.mxu0 0.0
      %511 = vmatprep.subr.mxu0 0.0
      %512 = vmatpush1.msra.mxu0 0.0
      %513 = vmatprep.subr.mxu0 0.0
      %514 = vmatpush1.msra.mxu0 0.0
      %515 = vmatprep.mubr.f32.mxu0 0.0
      %516 = vmatmul.mubr.f32.gmra.mrb[0].mxu0 %v442
      %v517 = vpop.f32.mrb[0].mxu0
      %v518 = vadd.f32 %v438, %v517
      %v519 = vpop.f32.mrb[0].mxu0
      %v520 = vadd.f32 %v438, %v519
      %521 = vdwg.mxu0
      %vm522 = vcmp.ge.f32.partialorder %v518, 0.0
      %vm523 = vcmp.ge.f32.partialorder %v520, 0.0
      %v524 = vmul.f32 %v518, 0.01
      %v525 = vmul.f32 %v520, 0.01
      %v526 = vsel %vm522, %v518, %v524
      %v527 = vsel %vm523, %v520, %v525
      %v528 = vmul.f32 %v526, %v219
      %v529 = vmul.f32 %v527, %v217
      %v532 = vrot.slane %v223, 4
      %v533 = vrot.slane %v528, 4
      %v534 = vrot.slane %v529, 4
      %535 = vrot.lane.b32.xlu0 %v532, 17
      %v536 = vpop.permute.xlu0 %535
      %537 = vrot.lane.b32.xlu0 %v533, 17
      %v538 = vpop.permute.xlu0 %537
      %539 = vrot.lane.b32.xlu0 %v534, 17
      %v540 = vpop.permute.xlu0 %539
      %v541 = vsel %vm235, %v536, %v538
      %v542 = vsel %vm235, %v538, %v540
      %545 = vst [vmem:[#allocation2 + $0x40] sm:$0xf0] %v541
      %546 = vst [vmem:[#allocation2 + $0x48] sm:$0xf0] %v542
      %549 = vrot.lane.b32.xlu0 0.0, 16
      %v550 = vpop.permute.xlu0 %549
      %551 = vrot.lane.b32.xlu0 %v526, 16
      %v552 = vpop.permute.xlu0 %551
      %553 = vrot.lane.b32.xlu0 %v527, 16
      %v554 = vpop.permute.xlu0 %553
      %v555 = vsel %vm252, %v550, %v552
      %v556 = vsel %vm252, %v552, %v554
      %559 = vst [vmem:[#allocation2 + $0x50] sm:$0xf] %v555
      %560 = vst [vmem:[#allocation2 + $0x58] sm:$0xf] %v556
      %v561 = vmul.f32 %v526, %v273
      %v562 = vmul.f32 %v527, %v271
      %v565 = vrot.slane %v277, 4
      %v566 = vrot.slane %v561, 4
      %v567 = vrot.slane %v562, 4
      %568 = vrot.lane.b32.xlu0 %v565, 15
      %v569 = vpop.permute.xlu0 %568
      %570 = vrot.lane.b32.xlu0 %v566, 15
      %v571 = vpop.permute.xlu0 %570
      %572 = vrot.lane.b32.xlu0 %v567, 15
      %v573 = vpop.permute.xlu0 %572
      %v574 = vsel %vm289, %v569, %v571
      %v575 = vsel %vm289, %v571, %v573
      %578 = vst [vmem:[#allocation2 + $0x50] sm:$0xf0] %v574
      %579 = vst [vmem:[#allocation2 + $0x58] sm:$0xf0] %v575
      %v580 = vmul.f32 %v526, %v301
      %v581 = vmul.f32 %v527, %v299
      %584 = vrot.lane.b32.xlu0 %v305, 1
      %v585 = vpop.permute.xlu0 %584
      %586 = vrot.lane.b32.xlu0 %v580, 1
      %v587 = vpop.permute.xlu0 %586
      %588 = vrot.lane.b32.xlu0 %v581, 1
      %v589 = vpop.permute.xlu0 %588
      %v590 = vsel %vm320, %v585, %v587
      %v591 = vsel %vm320, %v587, %v589
      %594 = vst [vmem:[#allocation2 + $0x60] sm:$0xf] %v590
      %595 = vst [vmem:[#allocation2 + $0x68] sm:$0xf] %v591
      %v596 = vrot.slane %v526, 4
      %v597 = vrot.slane %v527, 4
      %600 = vst [vmem:[#allocation2 + $0x60] sm:$0xf0] %v596
      %601 = vst [vmem:[#allocation2 + $0x68] sm:$0xf0] %v597
      %v602 = vmul.f32 %v526, %v330
      %v603 = vmul.f32 %v527, %v333
      %606 = vrot.lane.b32.xlu0 %v602, 127
      %v607 = vpop.permute.xlu0 %606
      %608 = vrot.lane.b32.xlu0 %v603, 127
      %v609 = vpop.permute.xlu0 %608
      %610 = vrot.lane.b32.xlu0 %v339, 127
      %v611 = vpop.permute.xlu0 %610
      %v612 = vsel %vm300, %v607, %v609
      %v613 = vsel %vm300, %v609, %v611
      %616 = vst [vmem:[#allocation2 + $0x70] sm:$0xf] %v612
      %617 = vst [vmem:[#allocation2 + $0x78] sm:$0xf] %v613
      %v618 = vmul.f32 %v526, %v359
      %v619 = vmul.f32 %v527, %v362
      %v622 = vrot.slane %v618, 4
      %v623 = vrot.slane %v619, 4
      %v624 = vrot.slane %v368, 4
      %625 = vrot.lane.b32.xlu0 %v622, 113
      %v626 = vpop.permute.xlu0 %625
      %627 = vrot.lane.b32.xlu0 %v623, 113
      %v628 = vpop.permute.xlu0 %627
      %629 = vrot.lane.b32.xlu0 %v624, 113
      %v630 = vpop.permute.xlu0 %629
      %v631 = vsel %vm272, %v626, %v628
      %v632 = vsel %vm272, %v628, %v630
      %635 = vst [vmem:[#allocation2 + $0x70] sm:$0xf0] %v631
      %636 = vst [vmem:[#allocation2 + $0x78] sm:$0xf0] %v632
      %637 = vrot.lane.b32.xlu0 %v526, 112
      %v638 = vpop.permute.xlu0 %637
      %639 = vrot.lane.b32.xlu0 %v527, 112
      %v640 = vpop.permute.xlu0 %639
      %641 = vrot.lane.b32.xlu0 0.0, 112
      %v642 = vpop.permute.xlu0 %641
      %v643 = vsel %vm390, %v638, %v640
      %v644 = vsel %vm390, %v640, %v642
      %647 = vst [vmem:[#allocation2 + $0x80] sm:$0xf] %v643
      %648 = vst [vmem:[#allocation2 + $0x88] sm:$0xf] %v644
      %v649 = vmul.f32 %v526, %v398
      %v650 = vmul.f32 %v527, %v401
      %v653 = vrot.slane %v649, 4
      %v654 = vrot.slane %v650, 4
      %v655 = vrot.slane %v407, 4
      %656 = vrot.lane.b32.xlu0 %v653, 111
      %v657 = vpop.permute.xlu0 %656
      %658 = vrot.lane.b32.xlu0 %v654, 111
      %v659 = vpop.permute.xlu0 %658
      %660 = vrot.lane.b32.xlu0 %v655, 111
      %v661 = vpop.permute.xlu0 %660
      %v662 = vsel %vm218, %v657, %v659
      %v663 = vsel %vm218, %v659, %v661
      %666 = vst [vmem:[#allocation2 + $0x80] sm:$0xf0] %v662
      %667 = vst [vmem:[#allocation2 + $0x88] sm:$0xf0] %v663
      %s668 = scalar_lea.vmem %s1, 8
      %v669 = vld [vmem:[%s668] sm:$0xff]
      %v670 = vld [vmem:[#allocation2] sm:$0xff]
      %v671 = vld [vmem:[#allocation2 + $0x8] sm:$0xff]
      %v672 = vld [vmem:[#allocation2 + $0x10] sm:$0xff]
      %v673 = vld [vmem:[#allocation2 + $0x18] sm:$0xff]
      %v674 = vld [vmem:[#allocation2 + $0x20] sm:$0xff]
      %v675 = vld [vmem:[#allocation2 + $0x28] sm:$0xff]
      %v676 = vld [vmem:[#allocation2 + $0x30] sm:$0xff]
      %v677 = vld [vmem:[#allocation2 + $0x38] sm:$0xff]
      %v678 = vld [vmem:[#allocation2 + $0x40] sm:$0xff]
      %v679 = vld [vmem:[#allocation2 + $0x48] sm:$0xff]
      %v680 = vld [vmem:[#allocation2 + $0x50] sm:$0xff]
      %v681 = vld [vmem:[#allocation2 + $0x58] sm:$0xff]
      %v682 = vld [vmem:[#allocation2 + $0x60] sm:$0xff]
      %v683 = vld [vmem:[#allocation2 + $0x68] sm:$0xff]
      %v684 = vld [vmem:[#allocation2 + $0x70] sm:$0xff]
      %v685 = vld [vmem:[#allocation2 + $0x78] sm:$0xff]
      %v686 = vld [vmem:[#allocation2 + $0x80] sm:$0xff]
      %v687 = vld [vmem:[#allocation2 + $0x88] sm:$0xff]
      %s688 = scalar_lea.vmem %s2, 4
      %v689 = vld [vmem:[%s688] sm:$0xf]
      %691 = vset.pattern.permute.xlu0 0
      %692 = vperm.xlu0 %691, %v689
      %v693 = vpop.permute.xlu0 %692
      %vm695 = vcmask 588800
      %v697 = vsel %vm695, %v669, 0
      %699 = vmatprep.subr.mxu0 %v671
      %700 = vmatpush1.msra.mxu0 %v670
      %701 = vmatprep.subr.mxu0 %v673
      %702 = vmatpush1.msra.mxu0 %v672
      %703 = vmatprep.subr.mxu0 %v675
      %704 = vmatpush1.msra.mxu0 %v674
      %705 = vmatprep.subr.mxu0 %v677
      %706 = vmatpush1.msra.mxu0 %v676
      %707 = vmatprep.subr.mxu0 %v679
      %708 = vmatpush1.msra.mxu0 %v678
      %709 = vmatprep.subr.mxu0 %v681
      %710 = vmatpush1.msra.mxu0 %v680
      %711 = vmatprep.subr.mxu0 %v683
      %712 = vmatpush1.msra.mxu0 %v682
      %713 = vmatprep.subr.mxu0 %v685
      %714 = vmatpush1.msra.mxu0 %v684
      %715 = vmatprep.subr.mxu0 %v687
      %716 = vmatpush1.msra.mxu0 %v686
      %717 = vmatprep.subr.mxu0 0.0
      %718 = vmatpush1.msra.mxu0 0.0
      %719 = vmatprep.subr.mxu0 0.0
      %720 = vmatpush1.msra.mxu0 0.0
      %721 = vmatprep.subr.mxu0 0.0
      %722 = vmatpush1.msra.mxu0 0.0
      %723 = vmatprep.subr.mxu0 0.0
      %724 = vmatpush1.msra.mxu0 0.0
      %725 = vmatprep.subr.mxu0 0.0
      %726 = vmatpush1.msra.mxu0 0.0
      %727 = vmatprep.subr.mxu0 0.0
      %728 = vmatpush1.msra.mxu0 0.0
      %729 = vmatprep.subr.mxu0 0.0
      %730 = vmatpush1.msra.mxu0 0.0
      %731 = vmatprep.subr.mxu0 0.0
      %732 = vmatpush1.msra.mxu0 0.0
      %733 = vmatprep.subr.mxu0 0.0
      %734 = vmatpush1.msra.mxu0 0.0
      %735 = vmatprep.subr.mxu0 0.0
      %736 = vmatpush1.msra.mxu0 0.0
      %737 = vmatprep.subr.mxu0 0.0
      %738 = vmatpush1.msra.mxu0 0.0
      %739 = vmatprep.subr.mxu0 0.0
      %740 = vmatpush1.msra.mxu0 0.0
      %741 = vmatprep.subr.mxu0 0.0
      %742 = vmatpush1.msra.mxu0 0.0
      %743 = vmatprep.subr.mxu0 0.0
      %744 = vmatpush1.msra.mxu0 0.0
      %745 = vmatprep.subr.mxu0 0.0
      %746 = vmatpush1.msra.mxu0 0.0
      %747 = vmatprep.subr.mxu0 0.0
      %748 = vmatpush1.msra.mxu0 0.0
      %749 = vmatprep.subr.mxu0 0.0
      %750 = vmatpush1.msra.mxu0 0.0
      %751 = vmatprep.subr.mxu0 0.0
      %752 = vmatpush1.msra.mxu0 0.0
      %753 = vmatprep.subr.mxu0 0.0
      %754 = vmatpush1.msra.mxu0 0.0
      %755 = vmatprep.subr.mxu0 0.0
      %756 = vmatpush1.msra.mxu0 0.0
      %757 = vmatprep.subr.mxu0 0.0
      %758 = vmatpush1.msra.mxu0 0.0
      %759 = vmatprep.subr.mxu0 0.0
      %760 = vmatpush1.msra.mxu0 0.0
      %761 = vmatprep.subr.mxu0 0.0
      %762 = vmatpush1.msra.mxu0 0.0
      %763 = vmatprep.mubr.f32.mxu0 0.0
      %764 = vmatmul.mubr.f32.gmra.mrb[0].mxu0 %v697
      %v765 = vpop.f32.mrb[0].mxu0
      %v766 = vadd.f32 %v693, %v765
      %v767 = vpop.f32.mrb[0].mxu0
      %v768 = vadd.f32 %v693, %v767
      %769 = vdwg.mxu0
      %vm770 = vcmp.ge.f32.partialorder %v766, 0.0
      %vm771 = vcmp.ge.f32.partialorder %v768, 0.0
      %v772 = vmul.f32 %v766, 0.01
      %v773 = vmul.f32 %v768, 0.01
      %v774 = vsel %vm770, %v766, %v772
      %v775 = vsel %vm771, %v768, %v773
      %v776 = vmul.f32 %v774, %v219
      %v777 = vmul.f32 %v775, %v217
      %780 = vrot.lane.b32.xlu0 %v776, 17
      %v781 = vpop.permute.xlu0 %780
      %782 = vrot.lane.b32.xlu0 %v777, 17
      %v783 = vpop.permute.xlu0 %782
      %v784 = vsel %vm235, %v230, %v781
      %v785 = vsel %vm235, %v781, %v783
      %788 = vst [vmem:[#allocation2 + $0x90] sm:$0xf] %v784
      %789 = vst [vmem:[#allocation2 + $0x98] sm:$0xf] %v785
      %v792 = vrot.slane %v774, 4
      %v793 = vrot.slane %v775, 4
      %794 = vrot.lane.b32.xlu0 %v792, 16
      %v795 = vpop.permute.xlu0 %794
      %796 = vrot.lane.b32.xlu0 %v793, 16
      %v797 = vpop.permute.xlu0 %796
      %v798 = vsel %vm252, %v247, %v795
      %v799 = vsel %vm252, %v795, %v797
      %802 = vst [vmem:[#allocation2 + $0x90] sm:$0xf0] %v798
      %803 = vst [vmem:[#allocation2 + $0x98] sm:$0xf0] %v799
      %v804 = vmul.f32 %v774, %v273
      %v805 = vmul.f32 %v775, %v271
      %808 = vrot.lane.b32.xlu0 %v804, 15
      %v809 = vpop.permute.xlu0 %808
      %810 = vrot.lane.b32.xlu0 %v805, 15
      %v811 = vpop.permute.xlu0 %810
      %v812 = vsel %vm289, %v284, %v809
      %v813 = vsel %vm289, %v809, %v811
      %816 = vst [vmem:[#allocation2 + $0xa0] sm:$0xf] %v812
      %817 = vst [vmem:[#allocation2 + $0xa8] sm:$0xf] %v813
      %v818 = vmul.f32 %v774, %v301
      %v819 = vmul.f32 %v775, %v299
      %v822 = vrot.slane %v818, 4
      %v823 = vrot.slane %v819, 4
      %824 = vrot.lane.b32.xlu0 %v822, 1
      %v825 = vpop.permute.xlu0 %824
      %826 = vrot.lane.b32.xlu0 %v823, 1
      %v827 = vpop.permute.xlu0 %826
      %v828 = vsel %vm320, %v315, %v825
      %v829 = vsel %vm320, %v825, %v827
      %832 = vst [vmem:[#allocation2 + $0xa0] sm:$0xf0] %v828
      %833 = vst [vmem:[#allocation2 + $0xa8] sm:$0xf0] %v829
      %834 = vst [vmem:[#allocation2 + $0xb0] sm:$0xf] %v774
      %835 = vst [vmem:[#allocation2 + $0xb8] sm:$0xf] %v775
      %v836 = vmul.f32 %v774, %v330
      %v837 = vmul.f32 %v775, %v333
      %v840 = vrot.slane %v836, 4
      %v841 = vrot.slane %v837, 4
      %842 = vrot.lane.b32.xlu0 %v840, 127
      %v843 = vpop.permute.xlu0 %842
      %844 = vrot.lane.b32.xlu0 %v841, 127
      %v845 = vpop.permute.xlu0 %844
      %v846 = vsel %vm300, %v843, %v845
      %v847 = vsel %vm300, %v845, %v351
      %850 = vst [vmem:[#allocation2 + $0xb0] sm:$0xf0] %v846
      %851 = vst [vmem:[#allocation2 + $0xb8] sm:$0xf0] %v847
      %v852 = vmul.f32 %v774, %v359
      %v853 = vmul.f32 %v775, %v362
      %856 = vrot.lane.b32.xlu0 %v852, 113
      %v857 = vpop.permute.xlu0 %856
      %858 = vrot.lane.b32.xlu0 %v853, 113
      %v859 = vpop.permute.xlu0 %858
      %v860 = vsel %vm272, %v857, %v859
      %v861 = vsel %vm272, %v859, %v377
      %864 = vst [vmem:[#allocation2 + $0xc0] sm:$0xf] %v860
      %865 = vst [vmem:[#allocation2 + $0xc8] sm:$0xf] %v861
      %866 = vrot.lane.b32.xlu0 %v792, 112
      %v867 = vpop.permute.xlu0 %866
      %868 = vrot.lane.b32.xlu0 %v793, 112
      %v869 = vpop.permute.xlu0 %868
      %v870 = vsel %vm390, %v867, %v869
      %v871 = vsel %vm390, %v869, %v389
      %874 = vst [vmem:[#allocation2 + $0xc0] sm:$0xf0] %v870
      %875 = vst [vmem:[#allocation2 + $0xc8] sm:$0xf0] %v871
      %v876 = vmul.f32 %v774, %v398
      %v877 = vmul.f32 %v775, %v401
      %880 = vrot.lane.b32.xlu0 %v876, 111
      %v881 = vpop.permute.xlu0 %880
      %882 = vrot.lane.b32.xlu0 %v877, 111
      %v883 = vpop.permute.xlu0 %882
      %v884 = vsel %vm218, %v881, %v883
      %v885 = vsel %vm218, %v883, %v416
      %888 = vst [vmem:[#allocation2 + $0xd0] sm:$0xf] %v884
      %889 = vst [vmem:[#allocation2 + $0xd8] sm:$0xf] %v885
      %s890 = scalar_lea.vmem %s1, 16
      %v891 = vld [vmem:[%s890] sm:$0xff]
      %v892 = vld [vmem:[#allocation2] sm:$0xff]
      %v893 = vld [vmem:[#allocation2 + $0x8] sm:$0xff]
      %v894 = vld [vmem:[#allocation2 + $0x10] sm:$0xff]
      %v895 = vld [vmem:[#allocation2 + $0x18] sm:$0xff]
      %v896 = vld [vmem:[#allocation2 + $0x20] sm:$0xff]
      %v897 = vld [vmem:[#allocation2 + $0x28] sm:$0xff]
      %v898 = vld [vmem:[#allocation2 + $0x30] sm:$0xff]
      %v899 = vld [vmem:[#allocation2 + $0x38] sm:$0xff]
      %v900 = vld [vmem:[#allocation2 + $0x40] sm:$0xff]
      %v901 = vld [vmem:[#allocation2 + $0x48] sm:$0xff]
      %v902 = vld [vmem:[#allocation2 + $0x50] sm:$0xff]
      %v903 = vld [vmem:[#allocation2 + $0x58] sm:$0xff]
      %v904 = vld [vmem:[#allocation2 + $0x60] sm:$0xff]
      %v905 = vld [vmem:[#allocation2 + $0x68] sm:$0xff]
      %v906 = vld [vmem:[#allocation2 + $0x70] sm:$0xff]
      %v907 = vld [vmem:[#allocation2 + $0x78] sm:$0xff]
      %v908 = vld [vmem:[#allocation2 + $0x80] sm:$0xff]
      %v909 = vld [vmem:[#allocation2 + $0x88] sm:$0xff]
      %v910 = vld [vmem:[#allocation2 + $0x90] sm:$0xff]
      %v911 = vld [vmem:[#allocation2 + $0x98] sm:$0xff]
      %v912 = vld [vmem:[#allocation2 + $0xa0] sm:$0xff]
      %v913 = vld [vmem:[#allocation2 + $0xa8] sm:$0xff]
      %v914 = vld [vmem:[#allocation2 + $0xb0] sm:$0xff]
      %v915 = vld [vmem:[#allocation2 + $0xb8] sm:$0xff]
      %v916 = vld [vmem:[#allocation2 + $0xc0] sm:$0xff]
      %v917 = vld [vmem:[#allocation2 + $0xc8] sm:$0xff]
      %v918 = vld [vmem:[#allocation2 + $0xd0] sm:$0xf]
      %v919 = vld [vmem:[#allocation2 + $0xd8] sm:$0xf]
      %s920 = scalar_lea.vmem %s2, 8
      %v921 = vld [vmem:[%s920] sm:$0xf]
      %923 = vset.pattern.permute.xlu0 0
      %924 = vperm.xlu0 %923, %v921
      %v925 = vpop.permute.xlu0 %924
      %vm927 = vcmask 883712
      %v929 = vsel %vm927, %v891, 0
      %v932 = vsel %vm444, %v918, 0
      %v935 = vsel %vm444, %v919, 0
      %937 = vmatprep.subr.mxu0 %v893
      %938 = vmatpush1.msra.mxu0 %v892
      %939 = vmatprep.subr.mxu0 %v895
      %940 = vmatpush1.msra.mxu0 %v894
      %941 = vmatprep.subr.mxu0 %v897
      %942 = vmatpush1.msra.mxu0 %v896
      %943 = vmatprep.subr.mxu0 %v899
      %944 = vmatpush1.msra.mxu0 %v898
      %945 = vmatprep.subr.mxu0 %v901
      %946 = vmatpush1.msra.mxu0 %v900
      %947 = vmatprep.subr.mxu0 %v903
      %948 = vmatpush1.msra.mxu0 %v902
      %949 = vmatprep.subr.mxu0 %v905
      %950 = vmatpush1.msra.mxu0 %v904
      %951 = vmatprep.subr.mxu0 %v907
      %952 = vmatpush1.msra.mxu0 %v906
      %953 = vmatprep.subr.mxu0 %v909
      %954 = vmatpush1.msra.mxu0 %v908
      %955 = vmatprep.subr.mxu0 %v911
      %956 = vmatpush1.msra.mxu0 %v910
      %957 = vmatprep.subr.mxu0 %v913
      %958 = vmatpush1.msra.mxu0 %v912
      %959 = vmatprep.subr.mxu0 %v915
      %960 = vmatpush1.msra.mxu0 %v914
      %961 = vmatprep.subr.mxu0 %v917
      %962 = vmatpush1.msra.mxu0 %v916
      %963 = vmatprep.subr.mxu0 %v935
      %964 = vmatpush1.msra.mxu0 %v932
      %965 = vmatprep.subr.mxu0 0.0
      %966 = vmatpush1.msra.mxu0 0.0
      %967 = vmatprep.subr.mxu0 0.0
      %968 = vmatpush1.msra.mxu0 0.0
      %969 = vmatprep.subr.mxu0 0.0
      %970 = vmatpush1.msra.mxu0 0.0
      %971 = vmatprep.subr.mxu0 0.0
      %972 = vmatpush1.msra.mxu0 0.0
      %973 = vmatprep.subr.mxu0 0.0
      %974 = vmatpush1.msra.mxu0 0.0
      %975 = vmatprep.subr.mxu0 0.0
      %976 = vmatpush1.msra.mxu0 0.0
      %977 = vmatprep.subr.mxu0 0.0
      %978 = vmatpush1.msra.mxu0 0.0
      %979 = vmatprep.subr.mxu0 0.0
      %980 = vmatpush1.msra.mxu0 0.0
      %981 = vmatprep.subr.mxu0 0.0
      %982 = vmatpush1.msra.mxu0 0.0
      %983 = vmatprep.subr.mxu0 0.0
      %984 = vmatpush1.msra.mxu0 0.0
      %985 = vmatprep.subr.mxu0 0.0
      %986 = vmatpush1.msra.mxu0 0.0
      %987 = vmatprep.subr.mxu0 0.0
      %988 = vmatpush1.msra.mxu0 0.0
      %989 = vmatprep.subr.mxu0 0.0
      %990 = vmatpush1.msra.mxu0 0.0
      %991 = vmatprep.subr.mxu0 0.0
      %992 = vmatpush1.msra.mxu0 0.0
      %993 = vmatprep.subr.mxu0 0.0
      %994 = vmatpush1.msra.mxu0 0.0
      %995 = vmatprep.subr.mxu0 0.0
      %996 = vmatpush1.msra.mxu0 0.0
      %997 = vmatprep.subr.mxu0 0.0
      %998 = vmatpush1.msra.mxu0 0.0
      %999 = vmatprep.subr.mxu0 0.0
      %1000 = vmatpush1.msra.mxu0 0.0
      %1001 = vmatprep.mubr.f32.mxu0 0.0
      %1002 = vmatmul.mubr.f32.gmra.mrb[0].mxu0 %v929
      %v1003 = vpop.f32.mrb[0].mxu0
      %v1004 = vadd.f32 %v925, %v1003
      %v1005 = vpop.f32.mrb[0].mxu0
      %v1006 = vadd.f32 %v925, %v1005
      %1007 = vdwg.mxu0
      %vm1008 = vcmp.ge.f32.partialorder %v1004, 0.0
      %vm1009 = vcmp.ge.f32.partialorder %v1006, 0.0
      %v1010 = vmul.f32 %v1004, 0.01
      %v1011 = vmul.f32 %v1006, 0.01
      %v1012 = vsel %vm1008, %v1004, %v1010
      %v1013 = vsel %vm1009, %v1006, %v1011
      %v1014 = vmul.f32 %v1012, %v219
      %v1015 = vmul.f32 %v1013, %v217
      %v1018 = vrot.slane %v1014, 4
      %v1019 = vrot.slane %v1015, 4
      %1020 = vrot.lane.b32.xlu0 %v1018, 17
      %v1021 = vpop.permute.xlu0 %1020
      %1022 = vrot.lane.b32.xlu0 %v1019, 17
      %v1023 = vpop.permute.xlu0 %1022
      %v1024 = vsel %vm235, %v536, %v1021
      %v1025 = vsel %vm235, %v1021, %v1023
      %1028 = vst [vmem:[#allocation2 + $0xd0] sm:$0xf0] %v1024
      %1029 = vst [vmem:[#allocation2 + $0xd8] sm:$0xf0] %v1025
      %1032 = vrot.lane.b32.xlu0 %v1012, 16
      %v1033 = vpop.permute.xlu0 %1032
      %1034 = vrot.lane.b32.xlu0 %v1013, 16
      %v1035 = vpop.permute.xlu0 %1034
      %v1036 = vsel %vm252, %v550, %v1033
      %v1037 = vsel %vm252, %v1033, %v1035
      %1040 = vst [vmem:[#allocation2 + $0xe0] sm:$0xf] %v1036
      %1041 = vst [vmem:[#allocation2 + $0xe8] sm:$0xf] %v1037
      %v1042 = vmul.f32 %v1012, %v273
      %v1043 = vmul.f32 %v1013, %v271
      %v1046 = vrot.slane %v1042, 4
      %v1047 = vrot.slane %v1043, 4
      %1048 = vrot.lane.b32.xlu0 %v1046, 15
      %v1049 = vpop.permute.xlu0 %1048
      %1050 = vrot.lane.b32.xlu0 %v1047, 15
      %v1051 = vpop.permute.xlu0 %1050
      %v1052 = vsel %vm289, %v569, %v1049
      %v1053 = vsel %vm289, %v1049, %v1051
      %1056 = vst [vmem:[#allocation2 + $0xe0] sm:$0xf0] %v1052
      %1057 = vst [vmem:[#allocation2 + $0xe8] sm:$0xf0] %v1053
      %v1058 = vmul.f32 %v1012, %v301
      %v1059 = vmul.f32 %v1013, %v299
      %1062 = vrot.lane.b32.xlu0 %v1058, 1
      %v1063 = vpop.permute.xlu0 %1062
      %1064 = vrot.lane.b32.xlu0 %v1059, 1
      %v1065 = vpop.permute.xlu0 %1064
      %v1066 = vsel %vm320, %v585, %v1063
      %v1067 = vsel %vm320, %v1063, %v1065
      %1070 = vst [vmem:[#allocation2 + $0xf0] sm:$0xf] %v1066
      %1071 = vst [vmem:[#allocation2 + $0xf8] sm:$0xf] %v1067
      %v1072 = vrot.slane %v1012, 4
      %v1073 = vrot.slane %v1013, 4
      %1076 = vst [vmem:[#allocation2 + $0xf0] sm:$0xf0] %v1072
      %1077 = vst [vmem:[#allocation2 + $0xf8] sm:$0xf0] %v1073
      %v1078 = vmul.f32 %v1012, %v330
      %v1079 = vmul.f32 %v1013, %v333
      %1082 = vrot.lane.b32.xlu0 %v1078, 127
      %v1083 = vpop.permute.xlu0 %1082
      %1084 = vrot.lane.b32.xlu0 %v1079, 127
      %v1085 = vpop.permute.xlu0 %1084
      %v1086 = vsel %vm300, %v1083, %v1085
      %v1087 = vsel %vm300, %v1085, %v611
      %1090 = vst [vmem:[#allocation2 + $0x100] sm:$0xf] %v1086
      %1091 = vst [vmem:[#allocation2 + $0x108] sm:$0xf] %v1087
      %v1092 = vmul.f32 %v1012, %v359
      %v1093 = vmul.f32 %v1013, %v362
      %v1096 = vrot.slane %v1092, 4
      %v1097 = vrot.slane %v1093, 4
      %1098 = vrot.lane.b32.xlu0 %v1096, 113
      %v1099 = vpop.permute.xlu0 %1098
      %1100 = vrot.lane.b32.xlu0 %v1097, 113
      %v1101 = vpop.permute.xlu0 %1100
      %v1102 = vsel %vm272, %v1099, %v1101
      %v1103 = vsel %vm272, %v1101, %v630
      %1106 = vst [vmem:[#allocation2 + $0x100] sm:$0xf0] %v1102
      %1107 = vst [vmem:[#allocation2 + $0x108] sm:$0xf0] %v1103
      %1108 = vrot.lane.b32.xlu0 %v1012, 112
      %v1109 = vpop.permute.xlu0 %1108
      %1110 = vrot.lane.b32.xlu0 %v1013, 112
      %v1111 = vpop.permute.xlu0 %1110
      %v1112 = vsel %vm390, %v1109, %v1111
      %v1113 = vsel %vm390, %v1111, %v642
      %1116 = vst [vmem:[#allocation2 + $0x110] sm:$0xf] %v1112
      %1117 = vst [vmem:[#allocation2 + $0x118] sm:$0xf] %v1113
      %v1118 = vmul.f32 %v1012, %v398
      %v1119 = vmul.f32 %v1013, %v401
      %v1122 = vrot.slane %v1118, 4
      %v1123 = vrot.slane %v1119, 4
      %1124 = vrot.lane.b32.xlu0 %v1122, 111
      %v1125 = vpop.permute.xlu0 %1124
      %1126 = vrot.lane.b32.xlu0 %v1123, 111
      %v1127 = vpop.permute.xlu0 %1126
      %v1128 = vsel %vm218, %v1125, %v1127
      %v1129 = vsel %vm218, %v1127, %v661
      %1132 = vst [vmem:[#allocation2 + $0x110] sm:$0xf0] %v1128
      %1133 = vst [vmem:[#allocation2 + $0x118] sm:$0xf0] %v1129
      %s1134 = scalar_lea.vmem %s1, 24
      %v1135 = vld [vmem:[%s1134] sm:$0xff]
      %v1136 = vld [vmem:[#allocation2] sm:$0xff]
      %v1137 = vld [vmem:[#allocation2 + $0x8] sm:$0xff]
      %v1138 = vld [vmem:[#allocation2 + $0x10] sm:$0xff]
      %v1139 = vld [vmem:[#allocation2 + $0x18] sm:$0xff]
      %v1140 = vld [vmem:[#allocation2 + $0x20] sm:$0xff]
      %v1141 = vld [vmem:[#allocation2 + $0x28] sm:$0xff]
      %v1142 = vld [vmem:[#allocation2 + $0x30] sm:$0xff]
      %v1143 = vld [vmem:[#allocation2 + $0x38] sm:$0xff]
      %v1144 = vld [vmem:[#allocation2 + $0x40] sm:$0xff]
      %v1145 = vld [vmem:[#allocation2 + $0x48] sm:$0xff]
      %v1146 = vld [vmem:[#allocation2 + $0x50] sm:$0xff]
      %v1147 = vld [vmem:[#allocation2 + $0x58] sm:$0xff]
      %v1148 = vld [vmem:[#allocation2 + $0x60] sm:$0xff]
      %v1149 = vld [vmem:[#allocation2 + $0x68] sm:$0xff]
      %v1150 = vld [vmem:[#allocation2 + $0x70] sm:$0xff]
      %v1151 = vld [vmem:[#allocation2 + $0x78] sm:$0xff]
      %v1152 = vld [vmem:[#allocation2 + $0x80] sm:$0xff]
      %v1153 = vld [vmem:[#allocation2 + $0x88] sm:$0xff]
      %v1154 = vld [vmem:[#allocation2 + $0x90] sm:$0xff]
      %v1155 = vld [vmem:[#allocation2 + $0x98] sm:$0xff]
      %v1156 = vld [vmem:[#allocation2 + $0xa0] sm:$0xff]
      %v1157 = vld [vmem:[#allocation2 + $0xa8] sm:$0xff]
      %v1158 = vld [vmem:[#allocation2 + $0xb0] sm:$0xff]
      %v1159 = vld [vmem:[#allocation2 + $0xb8] sm:$0xff]
      %v1160 = vld [vmem:[#allocation2 + $0xc0] sm:$0xff]
      %v1161 = vld [vmem:[#allocation2 + $0xc8] sm:$0xff]
      %v1162 = vld [vmem:[#allocation2 + $0xd0] sm:$0xff]
      %v1163 = vld [vmem:[#allocation2 + $0xd8] sm:$0xff]
      %v1164 = vld [vmem:[#allocation2 + $0xe0] sm:$0xff]
      %v1165 = vld [vmem:[#allocation2 + $0xe8] sm:$0xff]
      %v1166 = vld [vmem:[#allocation2 + $0xf0] sm:$0xff]
      %v1167 = vld [vmem:[#allocation2 + $0xf8] sm:$0xff]
      %v1168 = vld [vmem:[#allocation2 + $0x100] sm:$0xff]
      %v1169 = vld [vmem:[#allocation2 + $0x108] sm:$0xff]
      %v1170 = vld [vmem:[#allocation2 + $0x110] sm:$0xff]
      %v1171 = vld [vmem:[#allocation2 + $0x118] sm:$0xff]
      %s1172 = scalar_lea.vmem %s2, 12
      %v1173 = vld [vmem:[%s1172] sm:$0xf]
      %1175 = vset.pattern.permute.xlu0 0
      %1176 = vperm.xlu0 %1175, %v1173
      %v1177 = vpop.permute.xlu0 %1176
      %v1180 = vcombine.high %v1135, %v1135
      %v1181 = vsel %vm252, %v1180, 0
      %1183 = vmatprep.subr.mxu0 %v1137
      %1184 = vmatpush1.msra.mxu0 %v1136
      %1185 = vmatprep.subr.mxu0 %v1139
      %1186 = vmatpush1.msra.mxu0 %v1138
      %1187 = vmatprep.subr.mxu0 %v1141
      %1188 = vmatpush1.msra.mxu0 %v1140
      %1189 = vmatprep.subr.mxu0 %v1143
      %1190 = vmatpush1.msra.mxu0 %v1142
      %1191 = vmatprep.subr.mxu0 %v1145
      %1192 = vmatpush1.msra.mxu0 %v1144
      %1193 = vmatprep.subr.mxu0 %v1147
      %1194 = vmatpush1.msra.mxu0 %v1146
      %1195 = vmatprep.subr.mxu0 %v1149
      %1196 = vmatpush1.msra.mxu0 %v1148
      %1197 = vmatprep.subr.mxu0 %v1151
      %1198 = vmatpush1.msra.mxu0 %v1150
      %1199 = vmatprep.subr.mxu0 %v1153
      %1200 = vmatpush1.msra.mxu0 %v1152
      %1201 = vmatprep.subr.mxu0 %v1155
      %1202 = vmatpush1.msra.mxu0 %v1154
      %1203 = vmatprep.subr.mxu0 %v1157
      %1204 = vmatpush1.msra.mxu0 %v1156
      %1205 = vmatprep.subr.mxu0 %v1159
      %1206 = vmatpush1.msra.mxu0 %v1158
      %1207 = vmatprep.subr.mxu0 %v1161
      %1208 = vmatpush1.msra.mxu0 %v1160
      %1209 = vmatprep.subr.mxu0 %v1163
      %1210 = vmatpush1.msra.mxu0 %v1162
      %1211 = vmatprep.subr.mxu0 %v1165
      %1212 = vmatpush1.msra.mxu0 %v1164
      %1213 = vmatprep.subr.mxu0 %v1167
      %1214 = vmatpush1.msra.mxu0 %v1166
      %1215 = vmatprep.subr.mxu0 %v1169
      %1216 = vmatpush1.msra.mxu0 %v1168
      %1217 = vmatprep.subr.mxu0 %v1171
      %1218 = vmatpush1.msra.mxu0 %v1170
      %1219 = vmatprep.subr.mxu0 0.0
      %1220 = vmatpush1.msra.mxu0 0.0
      %1221 = vmatprep.subr.mxu0 0.0
      %1222 = vmatpush1.msra.mxu0 0.0
      %1223 = vmatprep.subr.mxu0 0.0
      %1224 = vmatpush1.msra.mxu0 0.0
      %1225 = vmatprep.subr.mxu0 0.0
      %1226 = vmatpush1.msra.mxu0 0.0
      %1227 = vmatprep.subr.mxu0 0.0
      %1228 = vmatpush1.msra.mxu0 0.0
      %1229 = vmatprep.subr.mxu0 0.0
      %1230 = vmatpush1.msra.mxu0 0.0
      %1231 = vmatprep.subr.mxu0 0.0
      %1232 = vmatpush1.msra.mxu0 0.0
      %1233 = vmatprep.subr.mxu0 0.0
      %1234 = vmatpush1.msra.mxu0 0.0
      %1235 = vmatprep.subr.mxu0 0.0
      %1236 = vmatpush1.msra.mxu0 0.0
      %1237 = vmatprep.subr.mxu0 0.0
      %1238 = vmatpush1.msra.mxu0 0.0
      %1239 = vmatprep.subr.mxu0 0.0
      %1240 = vmatpush1.msra.mxu0 0.0
      %1241 = vmatprep.subr.mxu0 0.0
      %1242 = vmatpush1.msra.mxu0 0.0
      %1243 = vmatprep.subr.mxu0 0.0
      %1244 = vmatpush1.msra.mxu0 0.0
      %1245 = vmatprep.subr.mxu0 0.0
      %1246 = vmatpush1.msra.mxu0 0.0
      %1247 = vmatprep.mubr.f32.mxu0 %v1181
      %1248 = vmatmul.mubr.f32.gmra.mrb[0].mxu0 %v1135
      %v1249 = vpop.f32.mrb[0].mxu0
      %v1250 = vadd.f32 %v1177, %v1249
      %v1251 = vpop.f32.mrb[0].mxu0
      %v1252 = vadd.f32 %v1177, %v1251
      %1253 = vdwg.mxu0
      %vm1254 = vcmp.ge.f32.partialorder %v1250, 0.0
      %vm1255 = vcmp.ge.f32.partialorder %v1252, 0.0
      %v1256 = vmul.f32 %v1250, 0.01
      %v1257 = vmul.f32 %v1252, 0.01
      %v1258 = vsel %vm1254, %v1250, %v1256
      %v1259 = vsel %vm1255, %v1252, %v1257
      %v1260 = vmul.f32 %v1258, %v219
      %v1261 = vmul.f32 %v1259, %v217
      %1264 = vrot.lane.b32.xlu0 %v1260, 17
      %v1265 = vpop.permute.xlu0 %1264
      %1266 = vrot.lane.b32.xlu0 %v1261, 17
      %v1267 = vpop.permute.xlu0 %1266
      %v1268 = vsel %vm235, %v230, %v1265
      %v1269 = vsel %vm235, %v1265, %v1267
      %1272 = vst [vmem:[#allocation2 + $0x120] sm:$0xf] %v1268
      %1273 = vst [vmem:[#allocation2 + $0x128] sm:$0xf] %v1269
      %v1276 = vrot.slane %v1258, 4
      %v1277 = vrot.slane %v1259, 4
      %1278 = vrot.lane.b32.xlu0 %v1276, 16
      %v1279 = vpop.permute.xlu0 %1278
      %1280 = vrot.lane.b32.xlu0 %v1277, 16
      %v1281 = vpop.permute.xlu0 %1280
      %v1282 = vsel %vm252, %v247, %v1279
      %v1283 = vsel %vm252, %v1279, %v1281
      %1286 = vst [vmem:[#allocation2 + $0x120] sm:$0xf0] %v1282
      %1287 = vst [vmem:[#allocation2 + $0x128] sm:$0xf0] %v1283
      %v1288 = vmul.f32 %v1258, %v273
      %v1289 = vmul.f32 %v1259, %v271
      %1292 = vrot.lane.b32.xlu0 %v1288, 15
      %v1293 = vpop.permute.xlu0 %1292
      %1294 = vrot.lane.b32.xlu0 %v1289, 15
      %v1295 = vpop.permute.xlu0 %1294
      %v1296 = vsel %vm289, %v284, %v1293
      %v1297 = vsel %vm289, %v1293, %v1295
      %1300 = vst [vmem:[#allocation2 + $0x130] sm:$0xf] %v1296
      %1301 = vst [vmem:[#allocation2 + $0x138] sm:$0xf] %v1297
      %v1302 = vmul.f32 %v1258, %v301
      %v1303 = vmul.f32 %v1259, %v299
      %v1306 = vrot.slane %v1302, 4
      %v1307 = vrot.slane %v1303, 4
      %1308 = vrot.lane.b32.xlu0 %v1306, 1
      %v1309 = vpop.permute.xlu0 %1308
      %1310 = vrot.lane.b32.xlu0 %v1307, 1
      %v1311 = vpop.permute.xlu0 %1310
      %v1312 = vsel %vm320, %v315, %v1309
      %v1313 = vsel %vm320, %v1309, %v1311
      %1316 = vst [vmem:[#allocation2 + $0x130] sm:$0xf0] %v1312
      %1317 = vst [vmem:[#allocation2 + $0x138] sm:$0xf0] %v1313
      %1318 = vst [vmem:[#allocation2 + $0x140] sm:$0xf] %v1258
      %1319 = vst [vmem:[#allocation2 + $0x148] sm:$0xf] %v1259
      %v1320 = vmul.f32 %v1258, %v330
      %v1321 = vmul.f32 %v1259, %v333
      %v1324 = vrot.slane %v1320, 4
      %v1325 = vrot.slane %v1321, 4
      %1326 = vrot.lane.b32.xlu0 %v1324, 127
      %v1327 = vpop.permute.xlu0 %1326
      %1328 = vrot.lane.b32.xlu0 %v1325, 127
      %v1329 = vpop.permute.xlu0 %1328
      %v1330 = vsel %vm300, %v1327, %v1329
      %v1331 = vsel %vm300, %v1329, %v351
      %1334 = vst [vmem:[#allocation2 + $0x140] sm:$0xf0] %v1330
      %1335 = vst [vmem:[#allocation2 + $0x148] sm:$0xf0] %v1331
      %v1336 = vmul.f32 %v1258, %v359
      %v1337 = vmul.f32 %v1259, %v362
      %1340 = vrot.lane.b32.xlu0 %v1336, 113
      %v1341 = vpop.permute.xlu0 %1340
      %1342 = vrot.lane.b32.xlu0 %v1337, 113
      %v1343 = vpop.permute.xlu0 %1342
      %v1344 = vsel %vm272, %v1341, %v1343
      %v1345 = vsel %vm272, %v1343, %v377
      %1348 = vst [vmem:[#allocation2 + $0x150] sm:$0xf] %v1344
      %1349 = vst [vmem:[#allocation2 + $0x158] sm:$0xf] %v1345
      %1350 = vrot.lane.b32.xlu0 %v1276, 112
      %v1351 = vpop.permute.xlu0 %1350
      %1352 = vrot.lane.b32.xlu0 %v1277, 112
      %v1353 = vpop.permute.xlu0 %1352
      %v1354 = vsel %vm390, %v1351, %v1353
      %v1355 = vsel %vm390, %v1353, %v389
      %1358 = vst [vmem:[#allocation2 + $0x150] sm:$0xf0] %v1354
      %1359 = vst [vmem:[#allocation2 + $0x158] sm:$0xf0] %v1355
      %v1360 = vmul.f32 %v1258, %v398
      %v1361 = vmul.f32 %v1259, %v401
      %1364 = vrot.lane.b32.xlu0 %v1360, 111
      %v1365 = vpop.permute.xlu0 %1364
      %1366 = vrot.lane.b32.xlu0 %v1361, 111
      %v1367 = vpop.permute.xlu0 %1366
      %v1368 = vsel %vm218, %v1365, %v1367
      %v1369 = vsel %vm218, %v1367, %v416
      %1372 = vst [vmem:[#allocation2 + $0x160] sm:$0xf] %v1368
      %1373 = vst [vmem:[#allocation2 + $0x168] sm:$0xf] %v1369
      %s1374 = scalar_lea.vmem %s1, 32
      %v1375 = vld [vmem:[%s1374] sm:$0xff]
      %v1376 = vld [vmem:[#allocation2] sm:$0xff]
      %v1377 = vld [vmem:[#allocation2 + $0x8] sm:$0xff]
      %v1378 = vld [vmem:[#allocation2 + $0x10] sm:$0xff]
      %v1379 = vld [vmem:[#allocation2 + $0x18] sm:$0xff]
      %v1380 = vld [vmem:[#allocation2 + $0x20] sm:$0xff]
      %v1381 = vld [vmem:[#allocation2 + $0x28] sm:$0xff]
      %v1382 = vld [vmem:[#allocation2 + $0x30] sm:$0xff]
      %v1383 = vld [vmem:[#allocation2 + $0x38] sm:$0xff]
      %v1384 = vld [vmem:[#allocation2 + $0x40] sm:$0xff]
      %v1385 = vld [vmem:[#allocation2 + $0x48] sm:$0xff]
      %v1386 = vld [vmem:[#allocation2 + $0x50] sm:$0xff]
      %v1387 = vld [vmem:[#allocation2 + $0x58] sm:$0xff]
      %v1388 = vld [vmem:[#allocation2 + $0x60] sm:$0xff]
      %v1389 = vld [vmem:[#allocation2 + $0x68] sm:$0xff]
      %v1390 = vld [vmem:[#allocation2 + $0x70] sm:$0xff]
      %v1391 = vld [vmem:[#allocation2 + $0x78] sm:$0xff]
      %v1392 = vld [vmem:[#allocation2 + $0x80] sm:$0xff]
      %v1393 = vld [vmem:[#allocation2 + $0x88] sm:$0xff]
      %v1394 = vld [vmem:[#allocation2 + $0x90] sm:$0xff]
      %v1395 = vld [vmem:[#allocation2 + $0x98] sm:$0xff]
      %v1396 = vld [vmem:[#allocation2 + $0xa0] sm:$0xff]
      %v1397 = vld [vmem:[#allocation2 + $0xa8] sm:$0xff]
      %v1398 = vld [vmem:[#allocation2 + $0xb0] sm:$0xff]
      %v1399 = vld [vmem:[#allocation2 + $0xb8] sm:$0xff]
      %v1400 = vld [vmem:[#allocation2 + $0xc0] sm:$0xff]
      %v1401 = vld [vmem:[#allocation2 + $0xc8] sm:$0xff]
      %v1402 = vld [vmem:[#allocation2 + $0xd0] sm:$0xff]
      %v1403 = vld [vmem:[#allocation2 + $0xd8] sm:$0xff]
      %v1404 = vld [vmem:[#allocation2 + $0xe0] sm:$0xff]
      %v1405 = vld [vmem:[#allocation2 + $0xe8] sm:$0xff]
      %v1406 = vld [vmem:[#allocation2 + $0xf0] sm:$0xff]
      %v1407 = vld [vmem:[#allocation2 + $0xf8] sm:$0xff]
      %v1408 = vld [vmem:[#allocation2 + $0x100] sm:$0xff]
      %v1409 = vld [vmem:[#allocation2 + $0x108] sm:$0xff]
      %v1410 = vld [vmem:[#allocation2 + $0x110] sm:$0xff]
      %v1411 = vld [vmem:[#allocation2 + $0x118] sm:$0xff]
      %v1412 = vld [vmem:[#allocation2 + $0x120] sm:$0xff]
      %v1413 = vld [vmem:[#allocation2 + $0x128] sm:$0xff]
      %v1414 = vld [vmem:[#allocation2 + $0x130] sm:$0xff]
      %v1415 = vld [vmem:[#allocation2 + $0x138] sm:$0xff]
      %v1416 = vld [vmem:[#allocation2 + $0x140] sm:$0xff]
      %v1417 = vld [vmem:[#allocation2 + $0x148] sm:$0xff]
      %v1418 = vld [vmem:[#allocation2 + $0x150] sm:$0xff]
      %v1419 = vld [vmem:[#allocation2 + $0x158] sm:$0xff]
      %v1420 = vld [vmem:[#allocation2 + $0x160] sm:$0xf]
      %v1421 = vld [vmem:[#allocation2 + $0x168] sm:$0xf]
      %s1422 = scalar_lea.vmem %s2, 16
      %v1423 = vld [vmem:[%s1422] sm:$0xf]
      %1425 = vset.pattern.permute.xlu0 0
      %1426 = vperm.xlu0 %1425, %v1423
      %v1427 = vpop.permute.xlu0 %1426
      %v1430 = vcombine.high %v1375, %v1375
      %vm1431 = vcmask 424960
      %v1432 = vsel %vm1431, %v1430, 0
      %v1435 = vsel %vm444, %v1420, 0
      %v1438 = vsel %vm444, %v1421, 0
      %1440 = vmatprep.subr.mxu0 %v1377
      %1441 = vmatpush1.msra.mxu0 %v1376
      %1442 = vmatprep.subr.mxu0 %v1379
      %1443 = vmatpush1.msra.mxu0 %v1378
      %1444 = vmatprep.subr.mxu0 %v1381
      %1445 = vmatpush1.msra.mxu0 %v1380
      %1446 = vmatprep.subr.mxu0 %v1383
      %1447 = vmatpush1.msra.mxu0 %v1382
      %1448 = vmatprep.subr.mxu0 %v1385
      %1449 = vmatpush1.msra.mxu0 %v1384
      %1450 = vmatprep.subr.mxu0 %v1387
      %1451 = vmatpush1.msra.mxu0 %v1386
      %1452 = vmatprep.subr.mxu0 %v1389
      %1453 = vmatpush1.msra.mxu0 %v1388
      %1454 = vmatprep.subr.mxu0 %v1391
      %1455 = vmatpush1.msra.mxu0 %v1390
      %1456 = vmatprep.subr.mxu0 %v1393
      %1457 = vmatpush1.msra.mxu0 %v1392
      %1458 = vmatprep.subr.mxu0 %v1395
      %1459 = vmatpush1.msra.mxu0 %v1394
      %1460 = vmatprep.subr.mxu0 %v1397
      %1461 = vmatpush1.msra.mxu0 %v1396
      %1462 = vmatprep.subr.mxu0 %v1399
      %1463 = vmatpush1.msra.mxu0 %v1398
      %1464 = vmatprep.subr.mxu0 %v1401
      %1465 = vmatpush1.msra.mxu0 %v1400
      %1466 = vmatprep.subr.mxu0 %v1403
      %1467 = vmatpush1.msra.mxu0 %v1402
      %1468 = vmatprep.subr.mxu0 %v1405
      %1469 = vmatpush1.msra.mxu0 %v1404
      %1470 = vmatprep.subr.mxu0 %v1407
      %1471 = vmatpush1.msra.mxu0 %v1406
      %1472 = vmatprep.subr.mxu0 %v1409
      %1473 = vmatpush1.msra.mxu0 %v1408
      %1474 = vmatprep.subr.mxu0 %v1411
      %1475 = vmatpush1.msra.mxu0 %v1410
      %1476 = vmatprep.subr.mxu0 %v1413
      %1477 = vmatpush1.msra.mxu0 %v1412
      %1478 = vmatprep.subr.mxu0 %v1415
      %1479 = vmatpush1.msra.mxu0 %v1414
      %1480 = vmatprep.subr.mxu0 %v1417
      %1481 = vmatpush1.msra.mxu0 %v1416
      %1482 = vmatprep.subr.mxu0 %v1419
      %1483 = vmatpush1.msra.mxu0 %v1418
      %1484 = vmatprep.subr.mxu0 %v1438
      %1485 = vmatpush1.msra.mxu0 %v1435
      %1486 = vmatprep.subr.mxu0 0.0
      %1487 = vmatpush1.msra.mxu0 0.0
      %1488 = vmatprep.subr.mxu0 0.0
      %1489 = vmatpush1.msra.mxu0 0.0
      %1490 = vmatprep.subr.mxu0 0.0
      %1491 = vmatpush1.msra.mxu0 0.0
      %1492 = vmatprep.subr.mxu0 0.0
      %1493 = vmatpush1.msra.mxu0 0.0
      %1494 = vmatprep.subr.mxu0 0.0
      %1495 = vmatpush1.msra.mxu0 0.0
      %1496 = vmatprep.subr.mxu0 0.0
      %1497 = vmatpush1.msra.mxu0 0.0
      %1498 = vmatprep.subr.mxu0 0.0
      %1499 = vmatpush1.msra.mxu0 0.0
      %1500 = vmatprep.subr.mxu0 0.0
      %1501 = vmatpush1.msra.mxu0 0.0
      %1502 = vmatprep.subr.mxu0 0.0
      %1503 = vmatpush1.msra.mxu0 0.0
      %1504 = vmatprep.mubr.f32.mxu0 %v1432
      %1505 = vmatmul.mubr.f32.gmra.mrb[0].mxu0 %v1375
      %v1506 = vpop.f32.mrb[0].mxu0
      %v1507 = vadd.f32 %v1427, %v1506
      %v1508 = vpop.f32.mrb[0].mxu0
      %v1509 = vadd.f32 %v1427, %v1508
      %1510 = vdwg.mxu0
      %v1511 = vmul.f32 %v1507, 0.2
      %v1512 = vmul.f32 %v1509, 0.2
      %v1513 = vadd.f32 %v1511, %v201
      %v1514 = vadd.f32 %v1512, %v203
      %v1515 = vmul.f32 %v1513, %v219
      %v1516 = vmul.f32 %v1514, %v217
      %1519 = vrot.lane.b32.xlu0 %v1515, 17
      %v1520 = vpop.permute.xlu0 %1519
      %1521 = vrot.lane.b32.xlu0 %v1516, 17
      %v1522 = vpop.permute.xlu0 %1521
      %v1523 = vsel %vm235, %v230, %v1520
      %v1524 = vsel %vm235, %v1520, %v1522
      %1527 = vst [vmem:[#allocation2] sm:$0xf] %v1523
      %1528 = vst [vmem:[#allocation2 + $0x8] sm:$0xf] %v1524
      %v1531 = vrot.slane %v1513, 4
      %v1532 = vrot.slane %v1514, 4
      %1533 = vrot.lane.b32.xlu0 %v1531, 16
      %v1534 = vpop.permute.xlu0 %1533
      %1535 = vrot.lane.b32.xlu0 %v1532, 16
      %v1536 = vpop.permute.xlu0 %1535
      %v1537 = vsel %vm252, %v247, %v1534
      %v1538 = vsel %vm252, %v1534, %v1536
      %1541 = vst [vmem:[#allocation2] sm:$0xf0] %v1537
      %1542 = vst [vmem:[#allocation2 + $0x8] sm:$0xf0] %v1538
      %v1543 = vmul.f32 %v1513, %v273
      %v1544 = vmul.f32 %v1514, %v271
      %1547 = vrot.lane.b32.xlu0 %v1543, 15
      %v1548 = vpop.permute.xlu0 %1547
      %1549 = vrot.lane.b32.xlu0 %v1544, 15
      %v1550 = vpop.permute.xlu0 %1549
      %v1551 = vsel %vm289, %v284, %v1548
      %v1552 = vsel %vm289, %v1548, %v1550
      %1555 = vst [vmem:[#allocation2 + $0x10] sm:$0xf] %v1551
      %1556 = vst [vmem:[#allocation2 + $0x18] sm:$0xf] %v1552
      %v1557 = vmul.f32 %v1513, %v301
      %v1558 = vmul.f32 %v1514, %v299
      %v1561 = vrot.slane %v1557, 4
      %v1562 = vrot.slane %v1558, 4
      %1563 = vrot.lane.b32.xlu0 %v1561, 1
      %v1564 = vpop.permute.xlu0 %1563
      %1565 = vrot.lane.b32.xlu0 %v1562, 1
      %v1566 = vpop.permute.xlu0 %1565
      %v1567 = vsel %vm320, %v315, %v1564
      %v1568 = vsel %vm320, %v1564, %v1566
      %1571 = vst [vmem:[#allocation2 + $0x10] sm:$0xf0] %v1567
      %1572 = vst [vmem:[#allocation2 + $0x18] sm:$0xf0] %v1568
      %1573 = vst [vmem:[#allocation2 + $0x20] sm:$0xf] %v1513
      %1574 = vst [vmem:[#allocation2 + $0x28] sm:$0xf] %v1514
      %v1575 = vmul.f32 %v1513, %v330
      %v1576 = vmul.f32 %v1514, %v333
      %v1579 = vrot.slane %v1575, 4
      %v1580 = vrot.slane %v1576, 4
      %1581 = vrot.lane.b32.xlu0 %v1579, 127
      %v1582 = vpop.permute.xlu0 %1581
      %1583 = vrot.lane.b32.xlu0 %v1580, 127
      %v1584 = vpop.permute.xlu0 %1583
      %v1585 = vsel %vm300, %v1582, %v1584
      %v1586 = vsel %vm300, %v1584, %v351
      %1589 = vst [vmem:[#allocation2 + $0x20] sm:$0xf0] %v1585
      %1590 = vst [vmem:[#allocation2 + $0x28] sm:$0xf0] %v1586
      %v1591 = vmul.f32 %v1513, %v359
      %v1592 = vmul.f32 %v1514, %v362
      %1595 = vrot.lane.b32.xlu0 %v1591, 113
      %v1596 = vpop.permute.xlu0 %1595
      %1597 = vrot.lane.b32.xlu0 %v1592, 113
      %v1598 = vpop.permute.xlu0 %1597
      %v1599 = vsel %vm272, %v1596, %v1598
      %v1600 = vsel %vm272, %v1598, %v377
      %1603 = vst [vmem:[#allocation2 + $0x30] sm:$0xf] %v1599
      %1604 = vst [vmem:[#allocation2 + $0x38] sm:$0xf] %v1600
      %1605 = vrot.lane.b32.xlu0 %v1531, 112
      %v1606 = vpop.permute.xlu0 %1605
      %1607 = vrot.lane.b32.xlu0 %v1532, 112
      %v1608 = vpop.permute.xlu0 %1607
      %v1609 = vsel %vm390, %v1606, %v1608
      %v1610 = vsel %vm390, %v1608, %v389
      %1613 = vst [vmem:[#allocation2 + $0x30] sm:$0xf0] %v1609
      %1614 = vst [vmem:[#allocation2 + $0x38] sm:$0xf0] %v1610
      %v1615 = vmul.f32 %v1513, %v398
      %v1616 = vmul.f32 %v1514, %v401
      %1619 = vrot.lane.b32.xlu0 %v1615, 111
      %v1620 = vpop.permute.xlu0 %1619
      %1621 = vrot.lane.b32.xlu0 %v1616, 111
      %v1622 = vpop.permute.xlu0 %1621
      %v1623 = vsel %vm218, %v1620, %v1622
      %v1624 = vsel %vm218, %v1622, %v416
      %1627 = vst [vmem:[#allocation2 + $0x40] sm:$0xf] %v1623
      %1628 = vst [vmem:[#allocation2 + $0x48] sm:$0xf] %v1624
      %s1629 = scalar_lea.vmem %s1, 40
      %v1630 = vld [vmem:[%s1629] sm:$0xff]
      %v1631 = vld [vmem:[#allocation2] sm:$0xff]
      %v1632 = vld [vmem:[#allocation2 + $0x8] sm:$0xff]
      %v1633 = vld [vmem:[#allocation2 + $0x10] sm:$0xff]
      %v1634 = vld [vmem:[#allocation2 + $0x18] sm:$0xff]
      %v1635 = vld [vmem:[#allocation2 + $0x20] sm:$0xff]
      %v1636 = vld [vmem:[#allocation2 + $0x28] sm:$0xff]
      %v1637 = vld [vmem:[#allocation2 + $0x30] sm:$0xff]
      %v1638 = vld [vmem:[#allocation2 + $0x38] sm:$0xff]
      %v1639 = vld [vmem:[#allocation2 + $0x40] sm:$0xf]
      %v1640 = vld [vmem:[#allocation2 + $0x48] sm:$0xf]
      %s1641 = scalar_lea.vmem %s2, 20
      %v1642 = vld [vmem:[%s1641] sm:$0xf]
      %1644 = vset.pattern.permute.xlu0 0
      %1645 = vperm.xlu0 %1644, %v1642
      %v1646 = vpop.permute.xlu0 %1645
      %v1649 = vsel %vm440, %v1630, 0
      %v1652 = vsel %vm444, %v1639, 0
      %v1655 = vsel %vm444, %v1640, 0
      %1657 = vmatprep.subr.mxu0 %v1632
      %1658 = vmatpush1.msra.mxu0 %v1631
      %1659 = vmatprep.subr.mxu0 %v1634
      %1660 = vmatpush1.msra.mxu0 %v1633
      %1661 = vmatprep.subr.mxu0 %v1636
      %1662 = vmatpush1.msra.mxu0 %v1635
      %1663 = vmatprep.subr.mxu0 %v1638
      %1664 = vmatpush1.msra.mxu0 %v1637
      %1665 = vmatprep.subr.mxu0 %v1655
      %1666 = vmatpush1.msra.mxu0 %v1652
      %1667 = vmatprep.subr.mxu0 0.0
      %1668 = vmatpush1.msra.mxu0 0.0
      %1669 = vmatprep.subr.mxu0 0.0
      %1670 = vmatpush1.msra.mxu0 0.0
      %1671 = vmatprep.subr.mxu0 0.0
      %1672 = vmatpush1.msra.mxu0 0.0
      %1673 = vmatprep.subr.mxu0 0.0
      %1674 = vmatpush1.msra.mxu0 0.0
      %1675 = vmatprep.subr.mxu0 0.0
      %1676 = vmatpush1.msra.mxu0 0.0
      %1677 = vmatprep.subr.mxu0 0.0
      %1678 = vmatpush1.msra.mxu0 0.0
      %1679 = vmatprep.subr.mxu0 0.0
      %1680 = vmatpush1.msra.mxu0 0.0
      %1681 = vmatprep.subr.mxu0 0.0
      %1682 = vmatpush1.msra.mxu0 0.0
      %1683 = vmatprep.subr.mxu0 0.0
      %1684 = vmatpush1.msra.mxu0 0.0
      %1685 = vmatprep.subr.mxu0 0.0
      %1686 = vmatpush1.msra.mxu0 0.0
      %1687 = vmatprep.subr.mxu0 0.0
      %1688 = vmatpush1.msra.mxu0 0.0
      %1689 = vmatprep.subr.mxu0 0.0
      %1690 = vmatpush1.msra.mxu0 0.0
      %1691 = vmatprep.subr.mxu0 0.0
      %1692 = vmatpush1.msra.mxu0 0.0
      %1693 = vmatprep.subr.mxu0 0.0
      %1694 = vmatpush1.msra.mxu0 0.0
      %1695 = vmatprep.subr.mxu0 0.0
      %1696 = vmatpush1.msra.mxu0 0.0
      %1697 = vmatprep.subr.mxu0 0.0
      %1698 = vmatpush1.msra.mxu0 0.0
      %1699 = vmatprep.subr.mxu0 0.0
      %1700 = vmatpush1.msra.mxu0 0.0
      %1701 = vmatprep.subr.mxu0 0.0
      %1702 = vmatpush1.msra.mxu0 0.0
      %1703 = vmatprep.subr.mxu0 0.0
      %1704 = vmatpush1.msra.mxu0 0.0
      %1705 = vmatprep.subr.mxu0 0.0
      %1706 = vmatpush1.msra.mxu0 0.0
      %1707 = vmatprep.subr.mxu0 0.0
      %1708 = vmatpush1.msra.mxu0 0.0
      %1709 = vmatprep.subr.mxu0 0.0
      %1710 = vmatpush1.msra.mxu0 0.0
      %1711 = vmatprep.subr.mxu0 0.0
      %1712 = vmatpush1.msra.mxu0 0.0
      %1713 = vmatprep.subr.mxu0 0.0
      %1714 = vmatpush1.msra.mxu0 0.0
      %1715 = vmatprep.subr.mxu0 0.0
      %1716 = vmatpush1.msra.mxu0 0.0
      %1717 = vmatprep.subr.mxu0 0.0
      %1718 = vmatpush1.msra.mxu0 0.0
      %1719 = vmatprep.subr.mxu0 0.0
      %1720 = vmatpush1.msra.mxu0 0.0
      %1721 = vmatprep.mubr.f32.mxu0 0.0
      %1722 = vmatmul.mubr.f32.gmra.mrb[0].mxu0 %v1649
      %v1723 = vpop.f32.mrb[0].mxu0
      %v1724 = vadd.f32 %v1646, %v1723
      %v1725 = vpop.f32.mrb[0].mxu0
      %v1726 = vadd.f32 %v1646, %v1725
      %1727 = vdwg.mxu0
      %vm1728 = vcmp.ge.f32.partialorder %v1724, 0.0
      %vm1729 = vcmp.ge.f32.partialorder %v1726, 0.0
      %v1730 = vmul.f32 %v1724, 0.01
      %v1731 = vmul.f32 %v1726, 0.01
      %v1732 = vsel %vm1728, %v1724, %v1730
      %v1733 = vsel %vm1729, %v1726, %v1731
      %v1734 = vmul.f32 %v1732, %v219
      %v1735 = vmul.f32 %v1733, %v217
      %v1738 = vrot.slane %v1734, 4
      %v1739 = vrot.slane %v1735, 4
      %1740 = vrot.lane.b32.xlu0 %v1738, 17
      %v1741 = vpop.permute.xlu0 %1740
      %1742 = vrot.lane.b32.xlu0 %v1739, 17
      %v1743 = vpop.permute.xlu0 %1742
      %v1744 = vsel %vm235, %v536, %v1741
      %v1745 = vsel %vm235, %v1741, %v1743
      %1748 = vst [vmem:[#allocation2 + $0x40] sm:$0xf0] %v1744
      %1749 = vst [vmem:[#allocation2 + $0x48] sm:$0xf0] %v1745
      %1752 = vrot.lane.b32.xlu0 %v1732, 16
      %v1753 = vpop.permute.xlu0 %1752
      %1754 = vrot.lane.b32.xlu0 %v1733, 16
      %v1755 = vpop.permute.xlu0 %1754
      %v1756 = vsel %vm252, %v550, %v1753
      %v1757 = vsel %vm252, %v1753, %v1755
      %1760 = vst [vmem:[#allocation2 + $0x50] sm:$0xf] %v1756
      %1761 = vst [vmem:[#allocation2 + $0x58] sm:$0xf] %v1757
      %v1762 = vmul.f32 %v1732, %v273
      %v1763 = vmul.f32 %v1733, %v271
      %v1766 = vrot.slane %v1762, 4
      %v1767 = vrot.slane %v1763, 4
      %1768 = vrot.lane.b32.xlu0 %v1766, 15
      %v1769 = vpop.permute.xlu0 %1768
      %1770 = vrot.lane.b32.xlu0 %v1767, 15
      %v1771 = vpop.permute.xlu0 %1770
      %v1772 = vsel %vm289, %v569, %v1769
      %v1773 = vsel %vm289, %v1769, %v1771
      %1776 = vst [vmem:[#allocation2 + $0x50] sm:$0xf0] %v1772
      %1777 = vst [vmem:[#allocation2 + $0x58] sm:$0xf0] %v1773
      %v1778 = vmul.f32 %v1732, %v301
      %v1779 = vmul.f32 %v1733, %v299
      %1782 = vrot.lane.b32.xlu0 %v1778, 1
      %v1783 = vpop.permute.xlu0 %1782
      %1784 = vrot.lane.b32.xlu0 %v1779, 1
      %v1785 = vpop.permute.xlu0 %1784
      %v1786 = vsel %vm320, %v585, %v1783
      %v1787 = vsel %vm320, %v1783, %v1785
      %1790 = vst [vmem:[#allocation2 + $0x60] sm:$0xf] %v1786
      %1791 = vst [vmem:[#allocation2 + $0x68] sm:$0xf] %v1787
      %v1792 = vrot.slane %v1732, 4
      %v1793 = vrot.slane %v1733, 4
      %1796 = vst [vmem:[#allocation2 + $0x60] sm:$0xf0] %v1792
      %1797 = vst [vmem:[#allocation2 + $0x68] sm:$0xf0] %v1793
      %v1798 = vmul.f32 %v1732, %v330
      %v1799 = vmul.f32 %v1733, %v333
      %1802 = vrot.lane.b32.xlu0 %v1798, 127
      %v1803 = vpop.permute.xlu0 %1802
      %1804 = vrot.lane.b32.xlu0 %v1799, 127
      %v1805 = vpop.permute.xlu0 %1804
      %v1806 = vsel %vm300, %v1803, %v1805
      %v1807 = vsel %vm300, %v1805, %v611
      %1810 = vst [vmem:[#allocation2 + $0x70] sm:$0xf] %v1806
      %1811 = vst [vmem:[#allocation2 + $0x78] sm:$0xf] %v1807
      %v1812 = vmul.f32 %v1732, %v359
      %v1813 = vmul.f32 %v1733, %v362
      %v1816 = vrot.slane %v1812, 4
      %v1817 = vrot.slane %v1813, 4
      %1818 = vrot.lane.b32.xlu0 %v1816, 113
      %v1819 = vpop.permute.xlu0 %1818
      %1820 = vrot.lane.b32.xlu0 %v1817, 113
      %v1821 = vpop.permute.xlu0 %1820
      %v1822 = vsel %vm272, %v1819, %v1821
      %v1823 = vsel %vm272, %v1821, %v630
      %1826 = vst [vmem:[#allocation2 + $0x70] sm:$0xf0] %v1822
      %1827 = vst [vmem:[#allocation2 + $0x78] sm:$0xf0] %v1823
      %1828 = vrot.lane.b32.xlu0 %v1732, 112
      %v1829 = vpop.permute.xlu0 %1828
      %1830 = vrot.lane.b32.xlu0 %v1733, 112
      %v1831 = vpop.permute.xlu0 %1830
      %v1832 = vsel %vm390, %v1829, %v1831
      %v1833 = vsel %vm390, %v1831, %v642
      %1836 = vst [vmem:[#allocation2 + $0x80] sm:$0xf] %v1832
      %1837 = vst [vmem:[#allocation2 + $0x88] sm:$0xf] %v1833
      %v1838 = vmul.f32 %v1732, %v398
      %v1839 = vmul.f32 %v1733, %v401
      %v1842 = vrot.slane %v1838, 4
      %v1843 = vrot.slane %v1839, 4
      %1844 = vrot.lane.b32.xlu0 %v1842, 111
      %v1845 = vpop.permute.xlu0 %1844
      %1846 = vrot.lane.b32.xlu0 %v1843, 111
      %v1847 = vpop.permute.xlu0 %1846
      %v1848 = vsel %vm218, %v1845, %v1847
      %v1849 = vsel %vm218, %v1847, %v661
      %1852 = vst [vmem:[#allocation2 + $0x80] sm:$0xf0] %v1848
      %1853 = vst [vmem:[#allocation2 + $0x88] sm:$0xf0] %v1849
      %s1854 = scalar_lea.vmem %s1, 48
      %v1855 = vld [vmem:[%s1854] sm:$0xff]
      %v1856 = vld [vmem:[#allocation2] sm:$0xff]
      %v1857 = vld [vmem:[#allocation2 + $0x8] sm:$0xff]
      %v1858 = vld [vmem:[#allocation2 + $0x10] sm:$0xff]
      %v1859 = vld [vmem:[#allocation2 + $0x18] sm:$0xff]
      %v1860 = vld [vmem:[#allocation2 + $0x20] sm:$0xff]
      %v1861 = vld [vmem:[#allocation2 + $0x28] sm:$0xff]
      %v1862 = vld [vmem:[#allocation2 + $0x30] sm:$0xff]
      %v1863 = vld [vmem:[#allocation2 + $0x38] sm:$0xff]
      %v1864 = vld [vmem:[#allocation2 + $0x40] sm:$0xff]
      %v1865 = vld [vmem:[#allocation2 + $0x48] sm:$0xff]
      %v1866 = vld [vmem:[#allocation2 + $0x50] sm:$0xff]
      %v1867 = vld [vmem:[#allocation2 + $0x58] sm:$0xff]
      %v1868 = vld [vmem:[#allocation2 + $0x60] sm:$0xff]
      %v1869 = vld [vmem:[#allocation2 + $0x68] sm:$0xff]
      %v1870 = vld [vmem:[#allocation2 + $0x70] sm:$0xff]
      %v1871 = vld [vmem:[#allocation2 + $0x78] sm:$0xff]
      %v1872 = vld [vmem:[#allocation2 + $0x80] sm:$0xff]
      %v1873 = vld [vmem:[#allocation2 + $0x88] sm:$0xff]
      %s1874 = scalar_lea.vmem %s2, 24
      %v1875 = vld [vmem:[%s1874] sm:$0xf]
      %1877 = vset.pattern.permute.xlu0 0
      %1878 = vperm.xlu0 %1877, %v1875
      %v1879 = vpop.permute.xlu0 %1878
      %v1882 = vsel %vm695, %v1855, 0
      %1884 = vmatprep.subr.mxu0 %v1857
      %1885 = vmatpush1.msra.mxu0 %v1856
      %1886 = vmatprep.subr.mxu0 %v1859
      %1887 = vmatpush1.msra.mxu0 %v1858
      %1888 = vmatprep.subr.mxu0 %v1861
      %1889 = vmatpush1.msra.mxu0 %v1860
      %1890 = vmatprep.subr.mxu0 %v1863
      %1891 = vmatpush1.msra.mxu0 %v1862
      %1892 = vmatprep.subr.mxu0 %v1865
      %1893 = vmatpush1.msra.mxu0 %v1864
      %1894 = vmatprep.subr.mxu0 %v1867
      %1895 = vmatpush1.msra.mxu0 %v1866
      %1896 = vmatprep.subr.mxu0 %v1869
      %1897 = vmatpush1.msra.mxu0 %v1868
      %1898 = vmatprep.subr.mxu0 %v1871
      %1899 = vmatpush1.msra.mxu0 %v1870
      %1900 = vmatprep.subr.mxu0 %v1873
      %1901 = vmatpush1.msra.mxu0 %v1872
      %1902 = vmatprep.subr.mxu0 0.0
      %1903 = vmatpush1.msra.mxu0 0.0
      %1904 = vmatprep.subr.mxu0 0.0
      %1905 = vmatpush1.msra.mxu0 0.0
      %1906 = vmatprep.subr.mxu0 0.0
      %1907 = vmatpush1.msra.mxu0 0.0
      %1908 = vmatprep.subr.mxu0 0.0
      %1909 = vmatpush1.msra.mxu0 0.0
      %1910 = vmatprep.subr.mxu0 0.0
      %1911 = vmatpush1.msra.mxu0 0.0
      %1912 = vmatprep.subr.mxu0 0.0
      %1913 = vmatpush1.msra.mxu0 0.0
      %1914 = vmatprep.subr.mxu0 0.0
      %1915 = vmatpush1.msra.mxu0 0.0
      %1916 = vmatprep.subr.mxu0 0.0
      %1917 = vmatpush1.msra.mxu0 0.0
      %1918 = vmatprep.subr.mxu0 0.0
      %1919 = vmatpush1.msra.mxu0 0.0
      %1920 = vmatprep.subr.mxu0 0.0
      %1921 = vmatpush1.msra.mxu0 0.0
      %1922 = vmatprep.subr.mxu0 0.0
      %1923 = vmatpush1.msra.mxu0 0.0
      %1924 = vmatprep.subr.mxu0 0.0
      %1925 = vmatpush1.msra.mxu0 0.0
      %1926 = vmatprep.subr.mxu0 0.0
      %1927 = vmatpush1.msra.mxu0 0.0
      %1928 = vmatprep.subr.mxu0 0.0
      %1929 = vmatpush1.msra.mxu0 0.0
      %1930 = vmatprep.subr.mxu0 0.0
      %1931 = vmatpush1.msra.mxu0 0.0
      %1932 = vmatprep.subr.mxu0 0.0
      %1933 = vmatpush1.msra.mxu0 0.0
      %1934 = vmatprep.subr.mxu0 0.0
      %1935 = vmatpush1.msra.mxu0 0.0
      %1936 = vmatprep.subr.mxu0 0.0
      %1937 = vmatpush1.msra.mxu0 0.0
      %1938 = vmatprep.subr.mxu0 0.0
      %1939 = vmatpush1.msra.mxu0 0.0
      %1940 = vmatprep.subr.mxu0 0.0
      %1941 = vmatpush1.msra.mxu0 0.0
      %1942 = vmatprep.subr.mxu0 0.0
      %1943 = vmatpush1.msra.mxu0 0.0
      %1944 = vmatprep.subr.mxu0 0.0
      %1945 = vmatpush1.msra.mxu0 0.0
      %1946 = vmatprep.subr.mxu0 0.0
      %1947 = vmatpush1.msra.mxu0 0.0
      %1948 = vmatprep.mubr.f32.mxu0 0.0
      %1949 = vmatmul.mubr.f32.gmra.mrb[0].mxu0 %v1882
      %v1950 = vpop.f32.mrb[0].mxu0
      %v1951 = vadd.f32 %v1879, %v1950
      %v1952 = vpop.f32.mrb[0].mxu0
      %v1953 = vadd.f32 %v1879, %v1952
      %1954 = vdwg.mxu0
      %vm1955 = vcmp.ge.f32.partialorder %v1951, 0.0
      %vm1956 = vcmp.ge.f32.partialorder %v1953, 0.0
      %v1957 = vmul.f32 %v1951, 0.01
      %v1958 = vmul.f32 %v1953, 0.01
      %v1959 = vsel %vm1955, %v1951, %v1957
      %v1960 = vsel %vm1956, %v1953, %v1958
      %v1961 = vmul.f32 %v1959, %v219
      %v1962 = vmul.f32 %v1960, %v217
      %1965 = vrot.lane.b32.xlu0 %v1961, 17
      %v1966 = vpop.permute.xlu0 %1965
      %1967 = vrot.lane.b32.xlu0 %v1962, 17
      %v1968 = vpop.permute.xlu0 %1967
      %v1969 = vsel %vm235, %v230, %v1966
      %v1970 = vsel %vm235, %v1966, %v1968
      %1973 = vst [vmem:[#allocation2 + $0x90] sm:$0xf] %v1969
      %1974 = vst [vmem:[#allocation2 + $0x98] sm:$0xf] %v1970
      %v1977 = vrot.slane %v1959, 4
      %v1978 = vrot.slane %v1960, 4
      %1979 = vrot.lane.b32.xlu0 %v1977, 16
      %v1980 = vpop.permute.xlu0 %1979
      %1981 = vrot.lane.b32.xlu0 %v1978, 16
      %v1982 = vpop.permute.xlu0 %1981
      %v1983 = vsel %vm252, %v247, %v1980
      %v1984 = vsel %vm252, %v1980, %v1982
      %1987 = vst [vmem:[#allocation2 + $0x90] sm:$0xf0] %v1983
      %1988 = vst [vmem:[#allocation2 + $0x98] sm:$0xf0] %v1984
      %v1989 = vmul.f32 %v1959, %v273
      %v1990 = vmul.f32 %v1960, %v271
      %1993 = vrot.lane.b32.xlu0 %v1989, 15
      %v1994 = vpop.permute.xlu0 %1993
      %1995 = vrot.lane.b32.xlu0 %v1990, 15
      %v1996 = vpop.permute.xlu0 %1995
      %v1997 = vsel %vm289, %v284, %v1994
      %v1998 = vsel %vm289, %v1994, %v1996
      %2001 = vst [vmem:[#allocation2 + $0xa0] sm:$0xf] %v1997
      %2002 = vst [vmem:[#allocation2 + $0xa8] sm:$0xf] %v1998
      %v2003 = vmul.f32 %v1959, %v301
      %v2004 = vmul.f32 %v1960, %v299
      %v2007 = vrot.slane %v2003, 4
      %v2008 = vrot.slane %v2004, 4
      %2009 = vrot.lane.b32.xlu0 %v2007, 1
      %v2010 = vpop.permute.xlu0 %2009
      %2011 = vrot.lane.b32.xlu0 %v2008, 1
      %v2012 = vpop.permute.xlu0 %2011
      %v2013 = vsel %vm320, %v315, %v2010
      %v2014 = vsel %vm320, %v2010, %v2012
      %2017 = vst [vmem:[#allocation2 + $0xa0] sm:$0xf0] %v2013
      %2018 = vst [vmem:[#allocation2 + $0xa8] sm:$0xf0] %v2014
      %2019 = vst [vmem:[#allocation2 + $0xb0] sm:$0xf] %v1959
      %2020 = vst [vmem:[#allocation2 + $0xb8] sm:$0xf] %v1960
      %v2021 = vmul.f32 %v1959, %v330
      %v2022 = vmul.f32 %v1960, %v333
      %v2025 = vrot.slane %v2021, 4
      %v2026 = vrot.slane %v2022, 4
      %2027 = vrot.lane.b32.xlu0 %v2025, 127
      %v2028 = vpop.permute.xlu0 %2027
      %2029 = vrot.lane.b32.xlu0 %v2026, 127
      %v2030 = vpop.permute.xlu0 %2029
      %v2031 = vsel %vm300, %v2028, %v2030
      %v2032 = vsel %vm300, %v2030, %v351
      %2035 = vst [vmem:[#allocation2 + $0xb0] sm:$0xf0] %v2031
      %2036 = vst [vmem:[#allocation2 + $0xb8] sm:$0xf0] %v2032
      %v2037 = vmul.f32 %v1959, %v359
      %v2038 = vmul.f32 %v1960, %v362
      %2041 = vrot.lane.b32.xlu0 %v2037, 113
      %v2042 = vpop.permute.xlu0 %2041
      %2043 = vrot.lane.b32.xlu0 %v2038, 113
      %v2044 = vpop.permute.xlu0 %2043
      %v2045 = vsel %vm272, %v2042, %v2044
      %v2046 = vsel %vm272, %v2044, %v377
      %2049 = vst [vmem:[#allocation2 + $0xc0] sm:$0xf] %v2045
      %2050 = vst [vmem:[#allocation2 + $0xc8] sm:$0xf] %v2046
      %2051 = vrot.lane.b32.xlu0 %v1977, 112
      %v2052 = vpop.permute.xlu0 %2051
      %2053 = vrot.lane.b32.xlu0 %v1978, 112
      %v2054 = vpop.permute.xlu0 %2053
      %v2055 = vsel %vm390, %v2052, %v2054
      %v2056 = vsel %vm390, %v2054, %v389
      %2059 = vst [vmem:[#allocation2 + $0xc0] sm:$0xf0] %v2055
      %2060 = vst [vmem:[#allocation2 + $0xc8] sm:$0xf0] %v2056
      %v2061 = vmul.f32 %v1959, %v398
      %v2062 = vmul.f32 %v1960, %v401
      %2065 = vrot.lane.b32.xlu0 %v2061, 111
      %v2066 = vpop.permute.xlu0 %2065
      %2067 = vrot.lane.b32.xlu0 %v2062, 111
      %v2068 = vpop.permute.xlu0 %2067
      %v2069 = vsel %vm218, %v2066, %v2068
      %v2070 = vsel %vm218, %v2068, %v416
      %2073 = vst [vmem:[#allocation2 + $0xd0] sm:$0xf] %v2069
      %2074 = vst [vmem:[#allocation2 + $0xd8] sm:$0xf] %v2070
      %s2075 = scalar_lea.vmem %s1, 56
      %v2076 = vld [vmem:[%s2075] sm:$0xff]
      %v2077 = vld [vmem:[#allocation2] sm:$0xff]
      %v2078 = vld [vmem:[#allocation2 + $0x8] sm:$0xff]
      %v2079 = vld [vmem:[#allocation2 + $0x10] sm:$0xff]
      %v2080 = vld [vmem:[#allocation2 + $0x18] sm:$0xff]
      %v2081 = vld [vmem:[#allocation2 + $0x20] sm:$0xff]
      %v2082 = vld [vmem:[#allocation2 + $0x28] sm:$0xff]
      %v2083 = vld [vmem:[#allocation2 + $0x30] sm:$0xff]
      %v2084 = vld [vmem:[#allocation2 + $0x38] sm:$0xff]
      %v2085 = vld [vmem:[#allocation2 + $0x40] sm:$0xff]
      %v2086 = vld [vmem:[#allocation2 + $0x48] sm:$0xff]
      %v2087 = vld [vmem:[#allocation2 + $0x50] sm:$0xff]
      %v2088 = vld [vmem:[#allocation2 + $0x58] sm:$0xff]
      %v2089 = vld [vmem:[#allocation2 + $0x60] sm:$0xff]
      %v2090 = vld [vmem:[#allocation2 + $0x68] sm:$0xff]
      %v2091 = vld [vmem:[#allocation2 + $0x70] sm:$0xff]
      %v2092 = vld [vmem:[#allocation2 + $0x78] sm:$0xff]
      %v2093 = vld [vmem:[#allocation2 + $0x80] sm:$0xff]
      %v2094 = vld [vmem:[#allocation2 + $0x88] sm:$0xff]
      %v2095 = vld [vmem:[#allocation2 + $0x90] sm:$0xff]
      %v2096 = vld [vmem:[#allocation2 + $0x98] sm:$0xff]
      %v2097 = vld [vmem:[#allocation2 + $0xa0] sm:$0xff]
      %v2098 = vld [vmem:[#allocation2 + $0xa8] sm:$0xff]
      %v2099 = vld [vmem:[#allocation2 + $0xb0] sm:$0xff]
      %v2100 = vld [vmem:[#allocation2 + $0xb8] sm:$0xff]
      %v2101 = vld [vmem:[#allocation2 + $0xc0] sm:$0xff]
      %v2102 = vld [vmem:[#allocation2 + $0xc8] sm:$0xff]
      %v2103 = vld [vmem:[#allocation2 + $0xd0] sm:$0xf]
      %v2104 = vld [vmem:[#allocation2 + $0xd8] sm:$0xf]
      %s2105 = scalar_lea.vmem %s2, 28
      %v2106 = vld [vmem:[%s2105] sm:$0xf]
      %2108 = vset.pattern.permute.xlu0 0
      %2109 = vperm.xlu0 %2108, %v2106
      %v2110 = vpop.permute.xlu0 %2109
      %v2113 = vsel %vm927, %v2076, 0
      %v2116 = vsel %vm444, %v2103, 0
      %v2119 = vsel %vm444, %v2104, 0
      %2121 = vmatprep.subr.mxu0 %v2078
      %2122 = vmatpush1.msra.mxu0 %v2077
      %2123 = vmatprep.subr.mxu0 %v2080
      %2124 = vmatpush1.msra.mxu0 %v2079
      %2125 = vmatprep.subr.mxu0 %v2082
      %2126 = vmatpush1.msra.mxu0 %v2081
      %2127 = vmatprep.subr.mxu0 %v2084
      %2128 = vmatpush1.msra.mxu0 %v2083
      %2129 = vmatprep.subr.mxu0 %v2086
      %2130 = vmatpush1.msra.mxu0 %v2085
      %2131 = vmatprep.subr.mxu0 %v2088
      %2132 = vmatpush1.msra.mxu0 %v2087
      %2133 = vmatprep.subr.mxu0 %v2090
      %2134 = vmatpush1.msra.mxu0 %v2089
      %2135 = vmatprep.subr.mxu0 %v2092
      %2136 = vmatpush1.msra.mxu0 %v2091
      %2137 = vmatprep.subr.mxu0 %v2094
      %2138 = vmatpush1.msra.mxu0 %v2093
      %2139 = vmatprep.subr.mxu0 %v2096
      %2140 = vmatpush1.msra.mxu0 %v2095
      %2141 = vmatprep.subr.mxu0 %v2098
      %2142 = vmatpush1.msra.mxu0 %v2097
      %2143 = vmatprep.subr.mxu0 %v2100
      %2144 = vmatpush1.msra.mxu0 %v2099
      %2145 = vmatprep.subr.mxu0 %v2102
      %2146 = vmatpush1.msra.mxu0 %v2101
      %2147 = vmatprep.subr.mxu0 %v2119
      %2148 = vmatpush1.msra.mxu0 %v2116
      %2149 = vmatprep.subr.mxu0 0.0
      %2150 = vmatpush1.msra.mxu0 0.0
      %2151 = vmatprep.subr.mxu0 0.0
      %2152 = vmatpush1.msra.mxu0 0.0
      %2153 = vmatprep.subr.mxu0 0.0
      %2154 = vmatpush1.msra.mxu0 0.0
      %2155 = vmatprep.subr.mxu0 0.0
      %2156 = vmatpush1.msra.mxu0 0.0
      %2157 = vmatprep.subr.mxu0 0.0
      %2158 = vmatpush1.msra.mxu0 0.0
      %2159 = vmatprep.subr.mxu0 0.0
      %2160 = vmatpush1.msra.mxu0 0.0
      %2161 = vmatprep.subr.mxu0 0.0
      %2162 = vmatpush1.msra.mxu0 0.0
      %2163 = vmatprep.subr.mxu0 0.0
      %2164 = vmatpush1.msra.mxu0 0.0
      %2165 = vmatprep.subr.mxu0 0.0
      %2166 = vmatpush1.msra.mxu0 0.0
      %2167 = vmatprep.subr.mxu0 0.0
      %2168 = vmatpush1.msra.mxu0 0.0
      %2169 = vmatprep.subr.mxu0 0.0
      %2170 = vmatpush1.msra.mxu0 0.0
      %2171 = vmatprep.subr.mxu0 0.0
      %2172 = vmatpush1.msra.mxu0 0.0
      %2173 = vmatprep.subr.mxu0 0.0
      %2174 = vmatpush1.msra.mxu0 0.0
      %2175 = vmatprep.subr.mxu0 0.0
      %2176 = vmatpush1.msra.mxu0 0.0
      %2177 = vmatprep.subr.mxu0 0.0
      %2178 = vmatpush1.msra.mxu0 0.0
      %2179 = vmatprep.subr.mxu0 0.0
      %2180 = vmatpush1.msra.mxu0 0.0
      %2181 = vmatprep.subr.mxu0 0.0
      %2182 = vmatpush1.msra.mxu0 0.0
      %2183 = vmatprep.subr.mxu0 0.0
      %2184 = vmatpush1.msra.mxu0 0.0
      %2185 = vmatprep.mubr.f32.mxu0 0.0
      %2186 = vmatmul.mubr.f32.gmra.mrb[0].mxu0 %v2113
      %v2187 = vpop.f32.mrb[0].mxu0
      %v2188 = vadd.f32 %v2110, %v2187
      %v2189 = vpop.f32.mrb[0].mxu0
      %v2190 = vadd.f32 %v2110, %v2189
      %2191 = vdwg.mxu0
      %vm2192 = vcmp.ge.f32.partialorder %v2188, 0.0
      %vm2193 = vcmp.ge.f32.partialorder %v2190, 0.0
      %v2194 = vmul.f32 %v2188, 0.01
      %v2195 = vmul.f32 %v2190, 0.01
      %v2196 = vsel %vm2192, %v2188, %v2194
      %v2197 = vsel %vm2193, %v2190, %v2195
      %v2198 = vmul.f32 %v2196, %v219
      %v2199 = vmul.f32 %v2197, %v217
      %v2202 = vrot.slane %v2198, 4
      %v2203 = vrot.slane %v2199, 4
      %2204 = vrot.lane.b32.xlu0 %v2202, 17
      %v2205 = vpop.permute.xlu0 %2204
      %2206 = vrot.lane.b32.xlu0 %v2203, 17
      %v2207 = vpop.permute.xlu0 %2206
      %v2208 = vsel %vm235, %v536, %v2205
      %v2209 = vsel %vm235, %v2205, %v2207
      %2212 = vst [vmem:[#allocation2 + $0xd0] sm:$0xf0] %v2208
      %2213 = vst [vmem:[#allocation2 + $0xd8] sm:$0xf0] %v2209
      %2216 = vrot.lane.b32.xlu0 %v2196, 16
      %v2217 = vpop.permute.xlu0 %2216
      %2218 = vrot.lane.b32.xlu0 %v2197, 16
      %v2219 = vpop.permute.xlu0 %2218
      %v2220 = vsel %vm252, %v550, %v2217
      %v2221 = vsel %vm252, %v2217, %v2219
      %2224 = vst [vmem:[#allocation2 + $0xe0] sm:$0xf] %v2220
      %2225 = vst [vmem:[#allocation2 + $0xe8] sm:$0xf] %v2221
      %v2226 = vmul.f32 %v2196, %v273
      %v2227 = vmul.f32 %v2197, %v271
      %v2230 = vrot.slane %v2226, 4
      %v2231 = vrot.slane %v2227, 4
      %2232 = vrot.lane.b32.xlu0 %v2230, 15
      %v2233 = vpop.permute.xlu0 %2232
      %2234 = vrot.lane.b32.xlu0 %v2231, 15
      %v2235 = vpop.permute.xlu0 %2234
      %v2236 = vsel %vm289, %v569, %v2233
      %v2237 = vsel %vm289, %v2233, %v2235
      %2240 = vst [vmem:[#allocation2 + $0xe0] sm:$0xf0] %v2236
      %2241 = vst [vmem:[#allocation2 + $0xe8] sm:$0xf0] %v2237
      %v2242 = vmul.f32 %v2196, %v301
      %v2243 = vmul.f32 %v2197, %v299
      %2246 = vrot.lane.b32.xlu0 %v2242, 1
      %v2247 = vpop.permute.xlu0 %2246
      %2248 = vrot.lane.b32.xlu0 %v2243, 1
      %v2249 = vpop.permute.xlu0 %2248
      %v2250 = vsel %vm320, %v585, %v2247
      %v2251 = vsel %vm320, %v2247, %v2249
      %2254 = vst [vmem:[#allocation2 + $0xf0] sm:$0xf] %v2250
      %2255 = vst [vmem:[#allocation2 + $0xf8] sm:$0xf] %v2251
      %v2256 = vrot.slane %v2196, 4
      %v2257 = vrot.slane %v2197, 4
      %2260 = vst [vmem:[#allocation2 + $0xf0] sm:$0xf0] %v2256
      %2261 = vst [vmem:[#allocation2 + $0xf8] sm:$0xf0] %v2257
      %v2262 = vmul.f32 %v2196, %v330
      %v2263 = vmul.f32 %v2197, %v333
      %2266 = vrot.lane.b32.xlu0 %v2262, 127
      %v2267 = vpop.permute.xlu0 %2266
      %2268 = vrot.lane.b32.xlu0 %v2263, 127
      %v2269 = vpop.permute.xlu0 %2268
      %v2270 = vsel %vm300, %v2267, %v2269
      %v2271 = vsel %vm300, %v2269, %v611
      %2274 = vst [vmem:[#allocation2 + $0x100] sm:$0xf] %v2270
      %2275 = vst [vmem:[#allocation2 + $0x108] sm:$0xf] %v2271
      %v2276 = vmul.f32 %v2196, %v359
      %v2277 = vmul.f32 %v2197, %v362
      %v2280 = vrot.slane %v2276, 4
      %v2281 = vrot.slane %v2277, 4
      %2282 = vrot.lane.b32.xlu0 %v2280, 113
      %v2283 = vpop.permute.xlu0 %2282
      %2284 = vrot.lane.b32.xlu0 %v2281, 113
      %v2285 = vpop.permute.xlu0 %2284
      %v2286 = vsel %vm272, %v2283, %v2285
      %v2287 = vsel %vm272, %v2285, %v630
      %2290 = vst [vmem:[#allocation2 + $0x100] sm:$0xf0] %v2286
      %2291 = vst [vmem:[#allocation2 + $0x108] sm:$0xf0] %v2287
      %2292 = vrot.lane.b32.xlu0 %v2196, 112
      %v2293 = vpop.permute.xlu0 %2292
      %2294 = vrot.lane.b32.xlu0 %v2197, 112
      %v2295 = vpop.permute.xlu0 %2294
      %v2296 = vsel %vm390, %v2293, %v2295
      %v2297 = vsel %vm390, %v2295, %v642
      %2300 = vst [vmem:[#allocation2 + $0x110] sm:$0xf] %v2296
      %2301 = vst [vmem:[#allocation2 + $0x118] sm:$0xf] %v2297
      %v2302 = vmul.f32 %v2196, %v398
      %v2303 = vmul.f32 %v2197, %v401
      %v2306 = vrot.slane %v2302, 4
      %v2307 = vrot.slane %v2303, 4
      %2308 = vrot.lane.b32.xlu0 %v2306, 111
      %v2309 = vpop.permute.xlu0 %2308
      %2310 = vrot.lane.b32.xlu0 %v2307, 111
      %v2311 = vpop.permute.xlu0 %2310
      %v2312 = vsel %vm218, %v2309, %v2311
      %v2313 = vsel %vm218, %v2311, %v661
      %2316 = vst [vmem:[#allocation2 + $0x110] sm:$0xf0] %v2312
      %2317 = vst [vmem:[#allocation2 + $0x118] sm:$0xf0] %v2313
      %s2318 = scalar_lea.vmem %s1, 64
      %v2319 = vld [vmem:[%s2318] sm:$0xff]
      %v2320 = vld [vmem:[#allocation2] sm:$0xff]
      %v2321 = vld [vmem:[#allocation2 + $0x8] sm:$0xff]
      %v2322 = vld [vmem:[#allocation2 + $0x10] sm:$0xff]
      %v2323 = vld [vmem:[#allocation2 + $0x18] sm:$0xff]
      %v2324 = vld [vmem:[#allocation2 + $0x20] sm:$0xff]
      %v2325 = vld [vmem:[#allocation2 + $0x28] sm:$0xff]
      %v2326 = vld [vmem:[#allocation2 + $0x30] sm:$0xff]
      %v2327 = vld [vmem:[#allocation2 + $0x38] sm:$0xff]
      %v2328 = vld [vmem:[#allocation2 + $0x40] sm:$0xff]
      %v2329 = vld [vmem:[#allocation2 + $0x48] sm:$0xff]
      %v2330 = vld [vmem:[#allocation2 + $0x50] sm:$0xff]
      %v2331 = vld [vmem:[#allocation2 + $0x58] sm:$0xff]
      %v2332 = vld [vmem:[#allocation2 + $0x60] sm:$0xff]
      %v2333 = vld [vmem:[#allocation2 + $0x68] sm:$0xff]
      %v2334 = vld [vmem:[#allocation2 + $0x70] sm:$0xff]
      %v2335 = vld [vmem:[#allocation2 + $0x78] sm:$0xff]
      %v2336 = vld [vmem:[#allocation2 + $0x80] sm:$0xff]
      %v2337 = vld [vmem:[#allocation2 + $0x88] sm:$0xff]
      %v2338 = vld [vmem:[#allocation2 + $0x90] sm:$0xff]
      %v2339 = vld [vmem:[#allocation2 + $0x98] sm:$0xff]
      %v2340 = vld [vmem:[#allocation2 + $0xa0] sm:$0xff]
      %v2341 = vld [vmem:[#allocation2 + $0xa8] sm:$0xff]
      %v2342 = vld [vmem:[#allocation2 + $0xb0] sm:$0xff]
      %v2343 = vld [vmem:[#allocation2 + $0xb8] sm:$0xff]
      %v2344 = vld [vmem:[#allocation2 + $0xc0] sm:$0xff]
      %v2345 = vld [vmem:[#allocation2 + $0xc8] sm:$0xff]
      %v2346 = vld [vmem:[#allocation2 + $0xd0] sm:$0xff]
      %v2347 = vld [vmem:[#allocation2 + $0xd8] sm:$0xff]
      %v2348 = vld [vmem:[#allocation2 + $0xe0] sm:$0xff]
      %v2349 = vld [vmem:[#allocation2 + $0xe8] sm:$0xff]
      %v2350 = vld [vmem:[#allocation2 + $0xf0] sm:$0xff]
      %v2351 = vld [vmem:[#allocation2 + $0xf8] sm:$0xff]
      %v2352 = vld [vmem:[#allocation2 + $0x100] sm:$0xff]
      %v2353 = vld [vmem:[#allocation2 + $0x108] sm:$0xff]
      %v2354 = vld [vmem:[#allocation2 + $0x110] sm:$0xff]
      %v2355 = vld [vmem:[#allocation2 + $0x118] sm:$0xff]
      %s2356 = scalar_lea.vmem %s2, 32
      %v2357 = vld [vmem:[%s2356] sm:$0xf]
      %2359 = vset.pattern.permute.xlu0 0
      %2360 = vperm.xlu0 %2359, %v2357
      %v2361 = vpop.permute.xlu0 %2360
      %v2364 = vcombine.high %v2319, %v2319
      %v2365 = vsel %vm252, %v2364, 0
      %2367 = vmatprep.subr.mxu0 %v2321
      %2368 = vmatpush1.msra.mxu0 %v2320
      %2369 = vmatprep.subr.mxu0 %v2323
      %2370 = vmatpush1.msra.mxu0 %v2322
      %2371 = vmatprep.subr.mxu0 %v2325
      %2372 = vmatpush1.msra.mxu0 %v2324
      %2373 = vmatprep.subr.mxu0 %v2327
      %2374 = vmatpush1.msra.mxu0 %v2326
      %2375 = vmatprep.subr.mxu0 %v2329
      %2376 = vmatpush1.msra.mxu0 %v2328
      %2377 = vmatprep.subr.mxu0 %v2331
      %2378 = vmatpush1.msra.mxu0 %v2330
      %2379 = vmatprep.subr.mxu0 %v2333
      %2380 = vmatpush1.msra.mxu0 %v2332
      %2381 = vmatprep.subr.mxu0 %v2335
      %2382 = vmatpush1.msra.mxu0 %v2334
      %2383 = vmatprep.subr.mxu0 %v2337
      %2384 = vmatpush1.msra.mxu0 %v2336
      %2385 = vmatprep.subr.mxu0 %v2339
      %2386 = vmatpush1.msra.mxu0 %v2338
      %2387 = vmatprep.subr.mxu0 %v2341
      %2388 = vmatpush1.msra.mxu0 %v2340
      %2389 = vmatprep.subr.mxu0 %v2343
      %2390 = vmatpush1.msra.mxu0 %v2342
      %2391 = vmatprep.subr.mxu0 %v2345
      %2392 = vmatpush1.msra.mxu0 %v2344
      %2393 = vmatprep.subr.mxu0 %v2347
      %2394 = vmatpush1.msra.mxu0 %v2346
      %2395 = vmatprep.subr.mxu0 %v2349
      %2396 = vmatpush1.msra.mxu0 %v2348
      %2397 = vmatprep.subr.mxu0 %v2351
      %2398 = vmatpush1.msra.mxu0 %v2350
      %2399 = vmatprep.subr.mxu0 %v2353
      %2400 = vmatpush1.msra.mxu0 %v2352
      %2401 = vmatprep.subr.mxu0 %v2355
      %2402 = vmatpush1.msra.mxu0 %v2354
      %2403 = vmatprep.subr.mxu0 0.0
      %2404 = vmatpush1.msra.mxu0 0.0
      %2405 = vmatprep.subr.mxu0 0.0
      %2406 = vmatpush1.msra.mxu0 0.0
      %2407 = vmatprep.subr.mxu0 0.0
      %2408 = vmatpush1.msra.mxu0 0.0
      %2409 = vmatprep.subr.mxu0 0.0
      %2410 = vmatpush1.msra.mxu0 0.0
      %2411 = vmatprep.subr.mxu0 0.0
      %2412 = vmatpush1.msra.mxu0 0.0
      %2413 = vmatprep.subr.mxu0 0.0
      %2414 = vmatpush1.msra.mxu0 0.0
      %2415 = vmatprep.subr.mxu0 0.0
      %2416 = vmatpush1.msra.mxu0 0.0
      %2417 = vmatprep.subr.mxu0 0.0
      %2418 = vmatpush1.msra.mxu0 0.0
      %2419 = vmatprep.subr.mxu0 0.0
      %2420 = vmatpush1.msra.mxu0 0.0
      %2421 = vmatprep.subr.mxu0 0.0
      %2422 = vmatpush1.msra.mxu0 0.0
      %2423 = vmatprep.subr.mxu0 0.0
      %2424 = vmatpush1.msra.mxu0 0.0
      %2425 = vmatprep.subr.mxu0 0.0
      %2426 = vmatpush1.msra.mxu0 0.0
      %2427 = vmatprep.subr.mxu0 0.0
      %2428 = vmatpush1.msra.mxu0 0.0
      %2429 = vmatprep.subr.mxu0 0.0
      %2430 = vmatpush1.msra.mxu0 0.0
      %2431 = vmatprep.mubr.f32.mxu0 %v2365
      %2432 = vmatmul.mubr.f32.gmra.mrb[0].mxu0 %v2319
      %v2433 = vpop.f32.mrb[0].mxu0
      %v2434 = vadd.f32 %v2361, %v2433
      %v2435 = vpop.f32.mrb[0].mxu0
      %v2436 = vadd.f32 %v2361, %v2435
      %2437 = vdwg.mxu0
      %vm2438 = vcmp.ge.f32.partialorder %v2434, 0.0
      %vm2439 = vcmp.ge.f32.partialorder %v2436, 0.0
      %v2440 = vmul.f32 %v2434, 0.01
      %v2441 = vmul.f32 %v2436, 0.01
      %v2442 = vsel %vm2438, %v2434, %v2440
      %v2443 = vsel %vm2439, %v2436, %v2441
      %v2444 = vmul.f32 %v2442, %v219
      %v2445 = vmul.f32 %v2443, %v217
      %2448 = vrot.lane.b32.xlu0 %v2444, 17
      %v2449 = vpop.permute.xlu0 %2448
      %2450 = vrot.lane.b32.xlu0 %v2445, 17
      %v2451 = vpop.permute.xlu0 %2450
      %v2452 = vsel %vm235, %v230, %v2449
      %v2453 = vsel %vm235, %v2449, %v2451
      %2456 = vst [vmem:[#allocation2 + $0x120] sm:$0xf] %v2452
      %2457 = vst [vmem:[#allocation2 + $0x128] sm:$0xf] %v2453
      %v2460 = vrot.slane %v2442, 4
      %v2461 = vrot.slane %v2443, 4
      %2462 = vrot.lane.b32.xlu0 %v2460, 16
      %v2463 = vpop.permute.xlu0 %2462
      %2464 = vrot.lane.b32.xlu0 %v2461, 16
      %v2465 = vpop.permute.xlu0 %2464
      %v2466 = vsel %vm252, %v247, %v2463
      %v2467 = vsel %vm252, %v2463, %v2465
      %2470 = vst [vmem:[#allocation2 + $0x120] sm:$0xf0] %v2466
      %2471 = vst [vmem:[#allocation2 + $0x128] sm:$0xf0] %v2467
      %v2472 = vmul.f32 %v2442, %v273
      %v2473 = vmul.f32 %v2443, %v271
      %2476 = vrot.lane.b32.xlu0 %v2472, 15
      %v2477 = vpop.permute.xlu0 %2476
      %2478 = vrot.lane.b32.xlu0 %v2473, 15
      %v2479 = vpop.permute.xlu0 %2478
      %v2480 = vsel %vm289, %v284, %v2477
      %v2481 = vsel %vm289, %v2477, %v2479
      %2484 = vst [vmem:[#allocation2 + $0x130] sm:$0xf] %v2480
      %2485 = vst [vmem:[#allocation2 + $0x138] sm:$0xf] %v2481
      %v2486 = vmul.f32 %v2442, %v301
      %v2487 = vmul.f32 %v2443, %v299
      %v2490 = vrot.slane %v2486, 4
      %v2491 = vrot.slane %v2487, 4
      %2492 = vrot.lane.b32.xlu0 %v2490, 1
      %v2493 = vpop.permute.xlu0 %2492
      %2494 = vrot.lane.b32.xlu0 %v2491, 1
      %v2495 = vpop.permute.xlu0 %2494
      %v2496 = vsel %vm320, %v315, %v2493
      %v2497 = vsel %vm320, %v2493, %v2495
      %2500 = vst [vmem:[#allocation2 + $0x130] sm:$0xf0] %v2496
      %2501 = vst [vmem:[#allocation2 + $0x138] sm:$0xf0] %v2497
      %2502 = vst [vmem:[#allocation2 + $0x140] sm:$0xf] %v2442
      %2503 = vst [vmem:[#allocation2 + $0x148] sm:$0xf] %v2443
      %v2504 = vmul.f32 %v2442, %v330
      %v2505 = vmul.f32 %v2443, %v333
      %v2508 = vrot.slane %v2504, 4
      %v2509 = vrot.slane %v2505, 4
      %2510 = vrot.lane.b32.xlu0 %v2508, 127
      %v2511 = vpop.permute.xlu0 %2510
      %2512 = vrot.lane.b32.xlu0 %v2509, 127
      %v2513 = vpop.permute.xlu0 %2512
      %v2514 = vsel %vm300, %v2511, %v2513
      %v2515 = vsel %vm300, %v2513, %v351
      %2518 = vst [vmem:[#allocation2 + $0x140] sm:$0xf0] %v2514
      %2519 = vst [vmem:[#allocation2 + $0x148] sm:$0xf0] %v2515
      %v2520 = vmul.f32 %v2442, %v359
      %v2521 = vmul.f32 %v2443, %v362
      %2524 = vrot.lane.b32.xlu0 %v2520, 113
      %v2525 = vpop.permute.xlu0 %2524
      %2526 = vrot.lane.b32.xlu0 %v2521, 113
      %v2527 = vpop.permute.xlu0 %2526
      %v2528 = vsel %vm272, %v2525, %v2527
      %v2529 = vsel %vm272, %v2527, %v377
      %2532 = vst [vmem:[#allocation2 + $0x150] sm:$0xf] %v2528
      %2533 = vst [vmem:[#allocation2 + $0x158] sm:$0xf] %v2529
      %2534 = vrot.lane.b32.xlu0 %v2460, 112
      %v2535 = vpop.permute.xlu0 %2534
      %2536 = vrot.lane.b32.xlu0 %v2461, 112
      %v2537 = vpop.permute.xlu0 %2536
      %v2538 = vsel %vm390, %v2535, %v2537
      %v2539 = vsel %vm390, %v2537, %v389
      %2542 = vst [vmem:[#allocation2 + $0x150] sm:$0xf0] %v2538
      %2543 = vst [vmem:[#allocation2 + $0x158] sm:$0xf0] %v2539
      %v2544 = vmul.f32 %v2442, %v398
      %v2545 = vmul.f32 %v2443, %v401
      %2548 = vrot.lane.b32.xlu0 %v2544, 111
      %v2549 = vpop.permute.xlu0 %2548
      %2550 = vrot.lane.b32.xlu0 %v2545, 111
      %v2551 = vpop.permute.xlu0 %2550
      %v2552 = vsel %vm218, %v2549, %v2551
      %v2553 = vsel %vm218, %v2551, %v416
      %2556 = vst [vmem:[#allocation2 + $0x160] sm:$0xf] %v2552
      %2557 = vst [vmem:[#allocation2 + $0x168] sm:$0xf] %v2553
      %s2558 = scalar_lea.vmem %s1, 72
      %v2559 = vld [vmem:[%s2558] sm:$0xff]
      %v2560 = vld [vmem:[#allocation2] sm:$0xff]
      %v2561 = vld [vmem:[#allocation2 + $0x8] sm:$0xff]
      %v2562 = vld [vmem:[#allocation2 + $0x10] sm:$0xff]
      %v2563 = vld [vmem:[#allocation2 + $0x18] sm:$0xff]
      %v2564 = vld [vmem:[#allocation2 + $0x20] sm:$0xff]
      %v2565 = vld [vmem:[#allocation2 + $0x28] sm:$0xff]
      %v2566 = vld [vmem:[#allocation2 + $0x30] sm:$0xff]
      %v2567 = vld [vmem:[#allocation2 + $0x38] sm:$0xff]
      %v2568 = vld [vmem:[#allocation2 + $0x40] sm:$0xff]
      %v2569 = vld [vmem:[#allocation2 + $0x48] sm:$0xff]
      %v2570 = vld [vmem:[#allocation2 + $0x50] sm:$0xff]
      %v2571 = vld [vmem:[#allocation2 + $0x58] sm:$0xff]
      %v2572 = vld [vmem:[#allocation2 + $0x60] sm:$0xff]
      %v2573 = vld [vmem:[#allocation2 + $0x68] sm:$0xff]
      %v2574 = vld [vmem:[#allocation2 + $0x70] sm:$0xff]
      %v2575 = vld [vmem:[#allocation2 + $0x78] sm:$0xff]
      %v2576 = vld [vmem:[#allocation2 + $0x80] sm:$0xff]
      %v2577 = vld [vmem:[#allocation2 + $0x88] sm:$0xff]
      %v2578 = vld [vmem:[#allocation2 + $0x90] sm:$0xff]
      %v2579 = vld [vmem:[#allocation2 + $0x98] sm:$0xff]
      %v2580 = vld [vmem:[#allocation2 + $0xa0] sm:$0xff]
      %v2581 = vld [vmem:[#allocation2 + $0xa8] sm:$0xff]
      %v2582 = vld [vmem:[#allocation2 + $0xb0] sm:$0xff]
      %v2583 = vld [vmem:[#allocation2 + $0xb8] sm:$0xff]
      %v2584 = vld [vmem:[#allocation2 + $0xc0] sm:$0xff]
      %v2585 = vld [vmem:[#allocation2 + $0xc8] sm:$0xff]
      %v2586 = vld [vmem:[#allocation2 + $0xd0] sm:$0xff]
      %v2587 = vld [vmem:[#allocation2 + $0xd8] sm:$0xff]
      %v2588 = vld [vmem:[#allocation2 + $0xe0] sm:$0xff]
      %v2589 = vld [vmem:[#allocation2 + $0xe8] sm:$0xff]
      %v2590 = vld [vmem:[#allocation2 + $0xf0] sm:$0xff]
      %v2591 = vld [vmem:[#allocation2 + $0xf8] sm:$0xff]
      %v2592 = vld [vmem:[#allocation2 + $0x100] sm:$0xff]
      %v2593 = vld [vmem:[#allocation2 + $0x108] sm:$0xff]
      %v2594 = vld [vmem:[#allocation2 + $0x110] sm:$0xff]
      %v2595 = vld [vmem:[#allocation2 + $0x118] sm:$0xff]
      %v2596 = vld [vmem:[#allocation2 + $0x120] sm:$0xff]
      %v2597 = vld [vmem:[#allocation2 + $0x128] sm:$0xff]
      %v2598 = vld [vmem:[#allocation2 + $0x130] sm:$0xff]
      %v2599 = vld [vmem:[#allocation2 + $0x138] sm:$0xff]
      %v2600 = vld [vmem:[#allocation2 + $0x140] sm:$0xff]
      %v2601 = vld [vmem:[#allocation2 + $0x148] sm:$0xff]
      %v2602 = vld [vmem:[#allocation2 + $0x150] sm:$0xff]
      %v2603 = vld [vmem:[#allocation2 + $0x158] sm:$0xff]
      %v2604 = vld [vmem:[#allocation2 + $0x160] sm:$0xf]
      %v2605 = vld [vmem:[#allocation2 + $0x168] sm:$0xf]
      %s2606 = scalar_lea.vmem %s2, 36
      %v2607 = vld [vmem:[%s2606] sm:$0xf]
      %2609 = vset.pattern.permute.xlu0 0
      %2610 = vperm.xlu0 %2609, %v2607
      %v2611 = vpop.permute.xlu0 %2610
      %v2614 = vcombine.high %v2559, %v2559
      %v2615 = vsel %vm1431, %v2614, 0
      %v2618 = vsel %vm444, %v2604, 0
      %v2621 = vsel %vm444, %v2605, 0
      %2623 = vmatprep.subr.mxu0 %v2561
      %2624 = vmatpush1.msra.mxu0 %v2560
      %2625 = vmatprep.subr.mxu0 %v2563
      %2626 = vmatpush1.msra.mxu0 %v2562
      %2627 = vmatprep.subr.mxu0 %v2565
      %2628 = vmatpush1.msra.mxu0 %v2564
      %2629 = vmatprep.subr.mxu0 %v2567
      %2630 = vmatpush1.msra.mxu0 %v2566
      %2631 = vmatprep.subr.mxu0 %v2569
      %2632 = vmatpush1.msra.mxu0 %v2568
      %2633 = vmatprep.subr.mxu0 %v2571
      %2634 = vmatpush1.msra.mxu0 %v2570
      %2635 = vmatprep.subr.mxu0 %v2573
      %2636 = vmatpush1.msra.mxu0 %v2572
      %2637 = vmatprep.subr.mxu0 %v2575
      %2638 = vmatpush1.msra.mxu0 %v2574
      %2639 = vmatprep.subr.mxu0 %v2577
      %2640 = vmatpush1.msra.mxu0 %v2576
      %2641 = vmatprep.subr.mxu0 %v2579
      %2642 = vmatpush1.msra.mxu0 %v2578
      %2643 = vmatprep.subr.mxu0 %v2581
      %2644 = vmatpush1.msra.mxu0 %v2580
      %2645 = vmatprep.subr.mxu0 %v2583
      %2646 = vmatpush1.msra.mxu0 %v2582
      %2647 = vmatprep.subr.mxu0 %v2585
      %2648 = vmatpush1.msra.mxu0 %v2584
      %2649 = vmatprep.subr.mxu0 %v2587
      %2650 = vmatpush1.msra.mxu0 %v2586
      %2651 = vmatprep.subr.mxu0 %v2589
      %2652 = vmatpush1.msra.mxu0 %v2588
      %2653 = vmatprep.subr.mxu0 %v2591
      %2654 = vmatpush1.msra.mxu0 %v2590
      %2655 = vmatprep.subr.mxu0 %v2593
      %2656 = vmatpush1.msra.mxu0 %v2592
      %2657 = vmatprep.subr.mxu0 %v2595
      %2658 = vmatpush1.msra.mxu0 %v2594
      %2659 = vmatprep.subr.mxu0 %v2597
      %2660 = vmatpush1.msra.mxu0 %v2596
      %2661 = vmatprep.subr.mxu0 %v2599
      %2662 = vmatpush1.msra.mxu0 %v2598
      %2663 = vmatprep.subr.mxu0 %v2601
      %2664 = vmatpush1.msra.mxu0 %v2600
      %2665 = vmatprep.subr.mxu0 %v2603
      %2666 = vmatpush1.msra.mxu0 %v2602
      %2667 = vmatprep.subr.mxu0 %v2621
      %2668 = vmatpush1.msra.mxu0 %v2618
      %2669 = vmatprep.subr.mxu0 0.0
      %2670 = vmatpush1.msra.mxu0 0.0
      %2671 = vmatprep.subr.mxu0 0.0
      %2672 = vmatpush1.msra.mxu0 0.0
      %2673 = vmatprep.subr.mxu0 0.0
      %2674 = vmatpush1.msra.mxu0 0.0
      %2675 = vmatprep.subr.mxu0 0.0
      %2676 = vmatpush1.msra.mxu0 0.0
      %2677 = vmatprep.subr.mxu0 0.0
      %2678 = vmatpush1.msra.mxu0 0.0
      %2679 = vmatprep.subr.mxu0 0.0
      %2680 = vmatpush1.msra.mxu0 0.0
      %2681 = vmatprep.subr.mxu0 0.0
      %2682 = vmatpush1.msra.mxu0 0.0
      %2683 = vmatprep.subr.mxu0 0.0
      %2684 = vmatpush1.msra.mxu0 0.0
      %2685 = vmatprep.subr.mxu0 0.0
      %2686 = vmatpush1.msra.mxu0 0.0
      %2687 = vmatprep.mubr.f32.mxu0 %v2615
      %2688 = vmatmul.mubr.f32.gmra.mrb[0].mxu0 %v2559
      %v2689 = vpop.f32.mrb[0].mxu0
      %v2690 = vadd.f32 %v2611, %v2689
      %v2691 = vpop.f32.mrb[0].mxu0
      %v2692 = vadd.f32 %v2611, %v2691
      %2693 = vdwg.mxu0
      %v2694 = vmul.f32 %v2690, 0.2
      %v2695 = vmul.f32 %v2692, 0.2
      %v2696 = vadd.f32 %v2694, %v1513
      %v2697 = vadd.f32 %v2695, %v1514
      %v2698 = vmul.f32 %v2696, %v219
      %v2699 = vmul.f32 %v2697, %v217
      %2702 = vrot.lane.b32.xlu0 %v2698, 17
      %v2703 = vpop.permute.xlu0 %2702
      %2704 = vrot.lane.b32.xlu0 %v2699, 17
      %v2705 = vpop.permute.xlu0 %2704
      %v2706 = vsel %vm235, %v230, %v2703
      %v2707 = vsel %vm235, %v2703, %v2705
      %2710 = vst [vmem:[#allocation2] sm:$0xf] %v2706
      %2711 = vst [vmem:[#allocation2 + $0x8] sm:$0xf] %v2707
      %v2714 = vrot.slane %v2696, 4
      %v2715 = vrot.slane %v2697, 4
      %2716 = vrot.lane.b32.xlu0 %v2714, 16
      %v2717 = vpop.permute.xlu0 %2716
      %2718 = vrot.lane.b32.xlu0 %v2715, 16
      %v2719 = vpop.permute.xlu0 %2718
      %v2720 = vsel %vm252, %v247, %v2717
      %v2721 = vsel %vm252, %v2717, %v2719
      %2724 = vst [vmem:[#allocation2] sm:$0xf0] %v2720
      %2725 = vst [vmem:[#allocation2 + $0x8] sm:$0xf0] %v2721
      %v2726 = vmul.f32 %v2696, %v273
      %v2727 = vmul.f32 %v2697, %v271
      %2730 = vrot.lane.b32.xlu0 %v2726, 15
      %v2731 = vpop.permute.xlu0 %2730
      %2732 = vrot.lane.b32.xlu0 %v2727, 15
      %v2733 = vpop.permute.xlu0 %2732
      %v2734 = vsel %vm289, %v284, %v2731
      %v2735 = vsel %vm289, %v2731, %v2733
      %2738 = vst [vmem:[#allocation2 + $0x10] sm:$0xf] %v2734
      %2739 = vst [vmem:[#allocation2 + $0x18] sm:$0xf] %v2735
      %v2740 = vmul.f32 %v2696, %v301
      %v2741 = vmul.f32 %v2697, %v299
      %v2744 = vrot.slane %v2740, 4
      %v2745 = vrot.slane %v2741, 4
      %2746 = vrot.lane.b32.xlu0 %v2744, 1
      %v2747 = vpop.permute.xlu0 %2746
      %2748 = vrot.lane.b32.xlu0 %v2745, 1
      %v2749 = vpop.permute.xlu0 %2748
      %v2750 = vsel %vm320, %v315, %v2747
      %v2751 = vsel %vm320, %v2747, %v2749
      %2754 = vst [vmem:[#allocation2 + $0x10] sm:$0xf0] %v2750
      %2755 = vst [vmem:[#allocation2 + $0x18] sm:$0xf0] %v2751
      %2756 = vst [vmem:[#allocation2 + $0x20] sm:$0xf] %v2696
      %2757 = vst [vmem:[#allocation2 + $0x28] sm:$0xf] %v2697
      %v2758 = vmul.f32 %v2696, %v330
      %v2759 = vmul.f32 %v2697, %v333
      %v2762 = vrot.slane %v2758, 4
      %v2763 = vrot.slane %v2759, 4
      %2764 = vrot.lane.b32.xlu0 %v2762, 127
      %v2765 = vpop.permute.xlu0 %2764
      %2766 = vrot.lane.b32.xlu0 %v2763, 127
      %v2767 = vpop.permute.xlu0 %2766
      %v2768 = vsel %vm300, %v2765, %v2767
      %v2769 = vsel %vm300, %v2767, %v351
      %2772 = vst [vmem:[#allocation2 + $0x20] sm:$0xf0] %v2768
      %2773 = vst [vmem:[#allocation2 + $0x28] sm:$0xf0] %v2769
      %v2774 = vmul.f32 %v2696, %v359
      %v2775 = vmul.f32 %v2697, %v362
      %2778 = vrot.lane.b32.xlu0 %v2774, 113
      %v2779 = vpop.permute.xlu0 %2778
      %2780 = vrot.lane.b32.xlu0 %v2775, 113
      %v2781 = vpop.permute.xlu0 %2780
      %v2782 = vsel %vm272, %v2779, %v2781
      %v2783 = vsel %vm272, %v2781, %v377
      %2786 = vst [vmem:[#allocation2 + $0x30] sm:$0xf] %v2782
      %2787 = vst [vmem:[#allocation2 + $0x38] sm:$0xf] %v2783
      %2788 = vrot.lane.b32.xlu0 %v2714, 112
      %v2789 = vpop.permute.xlu0 %2788
      %2790 = vrot.lane.b32.xlu0 %v2715, 112
      %v2791 = vpop.permute.xlu0 %2790
      %v2792 = vsel %vm390, %v2789, %v2791
      %v2793 = vsel %vm390, %v2791, %v389
      %2796 = vst [vmem:[#allocation2 + $0x30] sm:$0xf0] %v2792
      %2797 = vst [vmem:[#allocation2 + $0x38] sm:$0xf0] %v2793
      %v2798 = vmul.f32 %v2696, %v398
      %v2799 = vmul.f32 %v2697, %v401
      %2802 = vrot.lane.b32.xlu0 %v2798, 111
      %v2803 = vpop.permute.xlu0 %2802
      %2804 = vrot.lane.b32.xlu0 %v2799, 111
      %v2805 = vpop.permute.xlu0 %2804
      %v2806 = vsel %vm218, %v2803, %v2805
      %v2807 = vsel %vm218, %v2805, %v416
      %2810 = vst [vmem:[#allocation2 + $0x40] sm:$0xf] %v2806
      %2811 = vst [vmem:[#allocation2 + $0x48] sm:$0xf] %v2807
      %s2812 = scalar_lea.vmem %s1, 80
      %v2813 = vld [vmem:[%s2812] sm:$0xff]
      %v2814 = vld [vmem:[#allocation2] sm:$0xff]
      %v2815 = vld [vmem:[#allocation2 + $0x8] sm:$0xff]
      %v2816 = vld [vmem:[#allocation2 + $0x10] sm:$0xff]
      %v2817 = vld [vmem:[#allocation2 + $0x18] sm:$0xff]
      %v2818 = vld [vmem:[#allocation2 + $0x20] sm:$0xff]
      %v2819 = vld [vmem:[#allocation2 + $0x28] sm:$0xff]
      %v2820 = vld [vmem:[#allocation2 + $0x30] sm:$0xff]
      %v2821 = vld [vmem:[#allocation2 + $0x38] sm:$0xff]
      %v2822 = vld [vmem:[#allocation2 + $0x40] sm:$0xf]
      %v2823 = vld [vmem:[#allocation2 + $0x48] sm:$0xf]
      %s2824 = scalar_lea.vmem %s2, 40
      %v2825 = vld [vmem:[%s2824] sm:$0xf]
      %2827 = vset.pattern.permute.xlu0 0
      %2828 = vperm.xlu0 %2827, %v2825
      %v2829 = vpop.permute.xlu0 %2828
      %v2832 = vsel %vm440, %v2813, 0
      %v2835 = vsel %vm444, %v2822, 0
      %v2838 = vsel %vm444, %v2823, 0
      %2840 = vmatprep.subr.mxu0 %v2815
      %2841 = vmatpush1.msra.mxu0 %v2814
      %2842 = vmatprep.subr.mxu0 %v2817
      %2843 = vmatpush1.msra.mxu0 %v2816
      %2844 = vmatprep.subr.mxu0 %v2819
      %2845 = vmatpush1.msra.mxu0 %v2818
      %2846 = vmatprep.subr.mxu0 %v2821
      %2847 = vmatpush1.msra.mxu0 %v2820
      %2848 = vmatprep.subr.mxu0 %v2838
      %2849 = vmatpush1.msra.mxu0 %v2835
      %2850 = vmatprep.subr.mxu0 0.0
      %2851 = vmatpush1.msra.mxu0 0.0
      %2852 = vmatprep.subr.mxu0 0.0
      %2853 = vmatpush1.msra.mxu0 0.0
      %2854 = vmatprep.subr.mxu0 0.0
      %2855 = vmatpush1.msra.mxu0 0.0
      %2856 = vmatprep.subr.mxu0 0.0
      %2857 = vmatpush1.msra.mxu0 0.0
      %2858 = vmatprep.subr.mxu0 0.0
      %2859 = vmatpush1.msra.mxu0 0.0
      %2860 = vmatprep.subr.mxu0 0.0
      %2861 = vmatpush1.msra.mxu0 0.0
      %2862 = vmatprep.subr.mxu0 0.0
      %2863 = vmatpush1.msra.mxu0 0.0
      %2864 = vmatprep.subr.mxu0 0.0
      %2865 = vmatpush1.msra.mxu0 0.0
      %2866 = vmatprep.subr.mxu0 0.0
      %2867 = vmatpush1.msra.mxu0 0.0
      %2868 = vmatprep.subr.mxu0 0.0
      %2869 = vmatpush1.msra.mxu0 0.0
      %2870 = vmatprep.subr.mxu0 0.0
      %2871 = vmatpush1.msra.mxu0 0.0
      %2872 = vmatprep.subr.mxu0 0.0
      %2873 = vmatpush1.msra.mxu0 0.0
      %2874 = vmatprep.subr.mxu0 0.0
      %2875 = vmatpush1.msra.mxu0 0.0
      %2876 = vmatprep.subr.mxu0 0.0
      %2877 = vmatpush1.msra.mxu0 0.0
      %2878 = vmatprep.subr.mxu0 0.0
      %2879 = vmatpush1.msra.mxu0 0.0
      %2880 = vmatprep.subr.mxu0 0.0
      %2881 = vmatpush1.msra.mxu0 0.0
      %2882 = vmatprep.subr.mxu0 0.0
      %2883 = vmatpush1.msra.mxu0 0.0
      %2884 = vmatprep.subr.mxu0 0.0
      %2885 = vmatpush1.msra.mxu0 0.0
      %2886 = vmatprep.subr.mxu0 0.0
      %2887 = vmatpush1.msra.mxu0 0.0
      %2888 = vmatprep.subr.mxu0 0.0
      %2889 = vmatpush1.msra.mxu0 0.0
      %2890 = vmatprep.subr.mxu0 0.0
      %2891 = vmatpush1.msra.mxu0 0.0
      %2892 = vmatprep.subr.mxu0 0.0
      %2893 = vmatpush1.msra.mxu0 0.0
      %2894 = vmatprep.subr.mxu0 0.0
      %2895 = vmatpush1.msra.mxu0 0.0
      %2896 = vmatprep.subr.mxu0 0.0
      %2897 = vmatpush1.msra.mxu0 0.0
      %2898 = vmatprep.subr.mxu0 0.0
      %2899 = vmatpush1.msra.mxu0 0.0
      %2900 = vmatprep.subr.mxu0 0.0
      %2901 = vmatpush1.msra.mxu0 0.0
      %2902 = vmatprep.subr.mxu0 0.0
      %2903 = vmatpush1.msra.mxu0 0.0
      %2904 = vmatprep.mubr.f32.mxu0 0.0
      %2905 = vmatmul.mubr.f32.gmra.mrb[0].mxu0 %v2832
      %v2906 = vpop.f32.mrb[0].mxu0
      %v2907 = vadd.f32 %v2829, %v2906
      %v2908 = vpop.f32.mrb[0].mxu0
      %v2909 = vadd.f32 %v2829, %v2908
      %2910 = vdwg.mxu0
      %vm2911 = vcmp.ge.f32.partialorder %v2907, 0.0
      %vm2912 = vcmp.ge.f32.partialorder %v2909, 0.0
      %v2913 = vmul.f32 %v2907, 0.01
      %v2914 = vmul.f32 %v2909, 0.01
      %v2915 = vsel %vm2911, %v2907, %v2913
      %v2916 = vsel %vm2912, %v2909, %v2914
      %v2917 = vmul.f32 %v2915, %v219
      %v2918 = vmul.f32 %v2916, %v217
      %v2921 = vrot.slane %v2917, 4
      %v2922 = vrot.slane %v2918, 4
      %2923 = vrot.lane.b32.xlu0 %v2921, 17
      %v2924 = vpop.permute.xlu0 %2923
      %2925 = vrot.lane.b32.xlu0 %v2922, 17
      %v2926 = vpop.permute.xlu0 %2925
      %v2927 = vsel %vm235, %v536, %v2924
      %v2928 = vsel %vm235, %v2924, %v2926
      %2931 = vst [vmem:[#allocation2 + $0x40] sm:$0xf0] %v2927
      %2932 = vst [vmem:[#allocation2 + $0x48] sm:$0xf0] %v2928
      %2935 = vrot.lane.b32.xlu0 %v2915, 16
      %v2936 = vpop.permute.xlu0 %2935
      %2937 = vrot.lane.b32.xlu0 %v2916, 16
      %v2938 = vpop.permute.xlu0 %2937
      %v2939 = vsel %vm252, %v550, %v2936
      %v2940 = vsel %vm252, %v2936, %v2938
      %2943 = vst [vmem:[#allocation2 + $0x50] sm:$0xf] %v2939
      %2944 = vst [vmem:[#allocation2 + $0x58] sm:$0xf] %v2940
      %v2945 = vmul.f32 %v2915, %v273
      %v2946 = vmul.f32 %v2916, %v271
      %v2949 = vrot.slane %v2945, 4
      %v2950 = vrot.slane %v2946, 4
      %2951 = vrot.lane.b32.xlu0 %v2949, 15
      %v2952 = vpop.permute.xlu0 %2951
      %2953 = vrot.lane.b32.xlu0 %v2950, 15
      %v2954 = vpop.permute.xlu0 %2953
      %v2955 = vsel %vm289, %v569, %v2952
      %v2956 = vsel %vm289, %v2952, %v2954
      %2959 = vst [vmem:[#allocation2 + $0x50] sm:$0xf0] %v2955
      %2960 = vst [vmem:[#allocation2 + $0x58] sm:$0xf0] %v2956
      %v2961 = vmul.f32 %v2915, %v301
      %v2962 = vmul.f32 %v2916, %v299
      %2965 = vrot.lane.b32.xlu0 %v2961, 1
      %v2966 = vpop.permute.xlu0 %2965
      %2967 = vrot.lane.b32.xlu0 %v2962, 1
      %v2968 = vpop.permute.xlu0 %2967
      %v2969 = vsel %vm320, %v585, %v2966
      %v2970 = vsel %vm320, %v2966, %v2968
      %2973 = vst [vmem:[#allocation2 + $0x60] sm:$0xf] %v2969
      %2974 = vst [vmem:[#allocation2 + $0x68] sm:$0xf] %v2970
      %v2975 = vrot.slane %v2915, 4
      %v2976 = vrot.slane %v2916, 4
      %2979 = vst [vmem:[#allocation2 + $0x60] sm:$0xf0] %v2975
      %2980 = vst [vmem:[#allocation2 + $0x68] sm:$0xf0] %v2976
      %v2981 = vmul.f32 %v2915, %v330
      %v2982 = vmul.f32 %v2916, %v333
      %2985 = vrot.lane.b32.xlu0 %v2981, 127
      %v2986 = vpop.permute.xlu0 %2985
      %2987 = vrot.lane.b32.xlu0 %v2982, 127
      %v2988 = vpop.permute.xlu0 %2987
      %v2989 = vsel %vm300, %v2986, %v2988
      %v2990 = vsel %vm300, %v2988, %v611
      %2993 = vst [vmem:[#allocation2 + $0x70] sm:$0xf] %v2989
      %2994 = vst [vmem:[#allocation2 + $0x78] sm:$0xf] %v2990
      %v2995 = vmul.f32 %v2915, %v359
      %v2996 = vmul.f32 %v2916, %v362
      %v2999 = vrot.slane %v2995, 4
      %v3000 = vrot.slane %v2996, 4
      %3001 = vrot.lane.b32.xlu0 %v2999, 113
      %v3002 = vpop.permute.xlu0 %3001
      %3003 = vrot.lane.b32.xlu0 %v3000, 113
      %v3004 = vpop.permute.xlu0 %3003
      %v3005 = vsel %vm272, %v3002, %v3004
      %v3006 = vsel %vm272, %v3004, %v630
      %3009 = vst [vmem:[#allocation2 + $0x70] sm:$0xf0] %v3005
      %3010 = vst [vmem:[#allocation2 + $0x78] sm:$0xf0] %v3006
      %3011 = vrot.lane.b32.xlu0 %v2915, 112
      %v3012 = vpop.permute.xlu0 %3011
      %3013 = vrot.lane.b32.xlu0 %v2916, 112
      %v3014 = vpop.permute.xlu0 %3013
      %v3015 = vsel %vm390, %v3012, %v3014
      %v3016 = vsel %vm390, %v3014, %v642
      %3019 = vst [vmem:[#allocation2 + $0x80] sm:$0xf] %v3015
      %3020 = vst [vmem:[#allocation2 + $0x88] sm:$0xf] %v3016
      %v3021 = vmul.f32 %v2915, %v398
      %v3022 = vmul.f32 %v2916, %v401
      %v3025 = vrot.slane %v3021, 4
      %v3026 = vrot.slane %v3022, 4
      %3027 = vrot.lane.b32.xlu0 %v3025, 111
      %v3028 = vpop.permute.xlu0 %3027
      %3029 = vrot.lane.b32.xlu0 %v3026, 111
      %v3030 = vpop.permute.xlu0 %3029
      %v3031 = vsel %vm218, %v3028, %v3030
      %v3032 = vsel %vm218, %v3030, %v661
      %3035 = vst [vmem:[#allocation2 + $0x80] sm:$0xf0] %v3031
      %3036 = vst [vmem:[#allocation2 + $0x88] sm:$0xf0] %v3032
      %s3037 = scalar_lea.vmem %s1, 88
      %v3038 = vld [vmem:[%s3037] sm:$0xff]
      %v3039 = vld [vmem:[#allocation2] sm:$0xff]
      %v3040 = vld [vmem:[#allocation2 + $0x8] sm:$0xff]
      %v3041 = vld [vmem:[#allocation2 + $0x10] sm:$0xff]
      %v3042 = vld [vmem:[#allocation2 + $0x18] sm:$0xff]
      %v3043 = vld [vmem:[#allocation2 + $0x20] sm:$0xff]
      %v3044 = vld [vmem:[#allocation2 + $0x28] sm:$0xff]
      %v3045 = vld [vmem:[#allocation2 + $0x30] sm:$0xff]
      %v3046 = vld [vmem:[#allocation2 + $0x38] sm:$0xff]
      %v3047 = vld [vmem:[#allocation2 + $0x40] sm:$0xff]
      %v3048 = vld [vmem:[#allocation2 + $0x48] sm:$0xff]
      %v3049 = vld [vmem:[#allocation2 + $0x50] sm:$0xff]
      %v3050 = vld [vmem:[#allocation2 + $0x58] sm:$0xff]
      %v3051 = vld [vmem:[#allocation2 + $0x60] sm:$0xff]
      %v3052 = vld [vmem:[#allocation2 + $0x68] sm:$0xff]
      %v3053 = vld [vmem:[#allocation2 + $0x70] sm:$0xff]
      %v3054 = vld [vmem:[#allocation2 + $0x78] sm:$0xff]
      %v3055 = vld [vmem:[#allocation2 + $0x80] sm:$0xff]
      %v3056 = vld [vmem:[#allocation2 + $0x88] sm:$0xff]
      %s3057 = scalar_lea.vmem %s2, 44
      %v3058 = vld [vmem:[%s3057] sm:$0xf]
      %3060 = vset.pattern.permute.xlu0 0
      %3061 = vperm.xlu0 %3060, %v3058
      %v3062 = vpop.permute.xlu0 %3061
      %v3065 = vsel %vm695, %v3038, 0
      %3067 = vmatprep.subr.mxu0 %v3040
      %3068 = vmatpush1.msra.mxu0 %v3039
      %3069 = vmatprep.subr.mxu0 %v3042
      %3070 = vmatpush1.msra.mxu0 %v3041
      %3071 = vmatprep.subr.mxu0 %v3044
      %3072 = vmatpush1.msra.mxu0 %v3043
      %3073 = vmatprep.subr.mxu0 %v3046
      %3074 = vmatpush1.msra.mxu0 %v3045
      %3075 = vmatprep.subr.mxu0 %v3048
      %3076 = vmatpush1.msra.mxu0 %v3047
      %3077 = vmatprep.subr.mxu0 %v3050
      %3078 = vmatpush1.msra.mxu0 %v3049
      %3079 = vmatprep.subr.mxu0 %v3052
      %3080 = vmatpush1.msra.mxu0 %v3051
      %3081 = vmatprep.subr.mxu0 %v3054
      %3082 = vmatpush1.msra.mxu0 %v3053
      %3083 = vmatprep.subr.mxu0 %v3056
      %3084 = vmatpush1.msra.mxu0 %v3055
      %3085 = vmatprep.subr.mxu0 0.0
      %3086 = vmatpush1.msra.mxu0 0.0
      %3087 = vmatprep.subr.mxu0 0.0
      %3088 = vmatpush1.msra.mxu0 0.0
      %3089 = vmatprep.subr.mxu0 0.0
      %3090 = vmatpush1.msra.mxu0 0.0
      %3091 = vmatprep.subr.mxu0 0.0
      %3092 = vmatpush1.msra.mxu0 0.0
      %3093 = vmatprep.subr.mxu0 0.0
      %3094 = vmatpush1.msra.mxu0 0.0
      %3095 = vmatprep.subr.mxu0 0.0
      %3096 = vmatpush1.msra.mxu0 0.0
      %3097 = vmatprep.subr.mxu0 0.0
      %3098 = vmatpush1.msra.mxu0 0.0
      %3099 = vmatprep.subr.mxu0 0.0
      %3100 = vmatpush1.msra.mxu0 0.0
      %3101 = vmatprep.subr.mxu0 0.0
      %3102 = vmatpush1.msra.mxu0 0.0
      %3103 = vmatprep.subr.mxu0 0.0
      %3104 = vmatpush1.msra.mxu0 0.0
      %3105 = vmatprep.subr.mxu0 0.0
      %3106 = vmatpush1.msra.mxu0 0.0
      %3107 = vmatprep.subr.mxu0 0.0
      %3108 = vmatpush1.msra.mxu0 0.0
      %3109 = vmatprep.subr.mxu0 0.0
      %3110 = vmatpush1.msra.mxu0 0.0
      %3111 = vmatprep.subr.mxu0 0.0
      %3112 = vmatpush1.msra.mxu0 0.0
      %3113 = vmatprep.subr.mxu0 0.0
      %3114 = vmatpush1.msra.mxu0 0.0
      %3115 = vmatprep.subr.mxu0 0.0
      %3116 = vmatpush1.msra.mxu0 0.0
      %3117 = vmatprep.subr.mxu0 0.0
      %3118 = vmatpush1.msra.mxu0 0.0
      %3119 = vmatprep.subr.mxu0 0.0
      %3120 = vmatpush1.msra.mxu0 0.0
      %3121 = vmatprep.subr.mxu0 0.0
      %3122 = vmatpush1.msra.mxu0 0.0
      %3123 = vmatprep.subr.mxu0 0.0
      %3124 = vmatpush1.msra.mxu0 0.0
      %3125 = vmatprep.subr.mxu0 0.0
      %3126 = vmatpush1.msra.mxu0 0.0
      %3127 = vmatprep.subr.mxu0 0.0
      %3128 = vmatpush1.msra.mxu0 0.0
      %3129 = vmatprep.subr.mxu0 0.0
      %3130 = vmatpush1.msra.mxu0 0.0
      %3131 = vmatprep.mubr.f32.mxu0 0.0
      %3132 = vmatmul.mubr.f32.gmra.mrb[0].mxu0 %v3065
      %v3133 = vpop.f32.mrb[0].mxu0
      %v3134 = vadd.f32 %v3062, %v3133
      %v3135 = vpop.f32.mrb[0].mxu0
      %v3136 = vadd.f32 %v3062, %v3135
      %3137 = vdwg.mxu0
      %vm3138 = vcmp.ge.f32.partialorder %v3134, 0.0
      %vm3139 = vcmp.ge.f32.partialorder %v3136, 0.0
      %v3140 = vmul.f32 %v3134, 0.01
      %v3141 = vmul.f32 %v3136, 0.01
      %v3142 = vsel %vm3138, %v3134, %v3140
      %v3143 = vsel %vm3139, %v3136, %v3141
      %v3144 = vmul.f32 %v3142, %v219
      %v3145 = vmul.f32 %v3143, %v217
      %3148 = vrot.lane.b32.xlu0 %v3144, 17
      %v3149 = vpop.permute.xlu0 %3148
      %3150 = vrot.lane.b32.xlu0 %v3145, 17
      %v3151 = vpop.permute.xlu0 %3150
      %v3152 = vsel %vm235, %v230, %v3149
      %v3153 = vsel %vm235, %v3149, %v3151
      %3156 = vst [vmem:[#allocation2 + $0x90] sm:$0xf] %v3152
      %3157 = vst [vmem:[#allocation2 + $0x98] sm:$0xf] %v3153
      %v3160 = vrot.slane %v3142, 4
      %v3161 = vrot.slane %v3143, 4
      %3162 = vrot.lane.b32.xlu0 %v3160, 16
      %v3163 = vpop.permute.xlu0 %3162
      %3164 = vrot.lane.b32.xlu0 %v3161, 16
      %v3165 = vpop.permute.xlu0 %3164
      %v3166 = vsel %vm252, %v247, %v3163
      %v3167 = vsel %vm252, %v3163, %v3165
      %3170 = vst [vmem:[#allocation2 + $0x90] sm:$0xf0] %v3166
      %3171 = vst [vmem:[#allocation2 + $0x98] sm:$0xf0] %v3167
      %v3172 = vmul.f32 %v3142, %v273
      %v3173 = vmul.f32 %v3143, %v271
      %3176 = vrot.lane.b32.xlu0 %v3172, 15
      %v3177 = vpop.permute.xlu0 %3176
      %3178 = vrot.lane.b32.xlu0 %v3173, 15
      %v3179 = vpop.permute.xlu0 %3178
      %v3180 = vsel %vm289, %v284, %v3177
      %v3181 = vsel %vm289, %v3177, %v3179
      %3184 = vst [vmem:[#allocation2 + $0xa0] sm:$0xf] %v3180
      %3185 = vst [vmem:[#allocation2 + $0xa8] sm:$0xf] %v3181
      %v3186 = vmul.f32 %v3142, %v301
      %v3187 = vmul.f32 %v3143, %v299
      %v3190 = vrot.slane %v3186, 4
      %v3191 = vrot.slane %v3187, 4
      %3192 = vrot.lane.b32.xlu0 %v3190, 1
      %v3193 = vpop.permute.xlu0 %3192
      %3194 = vrot.lane.b32.xlu0 %v3191, 1
      %v3195 = vpop.permute.xlu0 %3194
      %v3196 = vsel %vm320, %v315, %v3193
      %v3197 = vsel %vm320, %v3193, %v3195
      %3200 = vst [vmem:[#allocation2 + $0xa0] sm:$0xf0] %v3196
      %3201 = vst [vmem:[#allocation2 + $0xa8] sm:$0xf0] %v3197
      %3202 = vst [vmem:[#allocation2 + $0xb0] sm:$0xf] %v3142
      %3203 = vst [vmem:[#allocation2 + $0xb8] sm:$0xf] %v3143
      %v3204 = vmul.f32 %v3142, %v330
      %v3205 = vmul.f32 %v3143, %v333
      %v3208 = vrot.slane %v3204, 4
      %v3209 = vrot.slane %v3205, 4
      %3210 = vrot.lane.b32.xlu0 %v3208, 127
      %v3211 = vpop.permute.xlu0 %3210
      %3212 = vrot.lane.b32.xlu0 %v3209, 127
      %v3213 = vpop.permute.xlu0 %3212
      %v3214 = vsel %vm300, %v3211, %v3213
      %v3215 = vsel %vm300, %v3213, %v351
      %3218 = vst [vmem:[#allocation2 + $0xb0] sm:$0xf0] %v3214
      %3219 = vst [vmem:[#allocation2 + $0xb8] sm:$0xf0] %v3215
      %v3220 = vmul.f32 %v3142, %v359
      %v3221 = vmul.f32 %v3143, %v362
      %3224 = vrot.lane.b32.xlu0 %v3220, 113
      %v3225 = vpop.permute.xlu0 %3224
      %3226 = vrot.lane.b32.xlu0 %v3221, 113
      %v3227 = vpop.permute.xlu0 %3226
      %v3228 = vsel %vm272, %v3225, %v3227
      %v3229 = vsel %vm272, %v3227, %v377
      %3232 = vst [vmem:[#allocation2 + $0xc0] sm:$0xf] %v3228
      %3233 = vst [vmem:[#allocation2 + $0xc8] sm:$0xf] %v3229
      %3234 = vrot.lane.b32.xlu0 %v3160, 112
      %v3235 = vpop.permute.xlu0 %3234
      %3236 = vrot.lane.b32.xlu0 %v3161, 112
      %v3237 = vpop.permute.xlu0 %3236
      %v3238 = vsel %vm390, %v3235, %v3237
      %v3239 = vsel %vm390, %v3237, %v389
      %3242 = vst [vmem:[#allocation2 + $0xc0] sm:$0xf0] %v3238
      %3243 = vst [vmem:[#allocation2 + $0xc8] sm:$0xf0] %v3239
      %v3244 = vmul.f32 %v3142, %v398
      %v3245 = vmul.f32 %v3143, %v401
      %3248 = vrot.lane.b32.xlu0 %v3244, 111
      %v3249 = vpop.permute.xlu0 %3248
      %3250 = vrot.lane.b32.xlu0 %v3245, 111
      %v3251 = vpop.permute.xlu0 %3250
      %v3252 = vsel %vm218, %v3249, %v3251
      %v3253 = vsel %vm218, %v3251, %v416
      %3256 = vst [vmem:[#allocation2 + $0xd0] sm:$0xf] %v3252
      %3257 = vst [vmem:[#allocation2 + $0xd8] sm:$0xf] %v3253
      %s3258 = scalar_lea.vmem %s1, 96
      %v3259 = vld [vmem:[%s3258] sm:$0xff]
      %v3260 = vld [vmem:[#allocation2] sm:$0xff]
      %v3261 = vld [vmem:[#allocation2 + $0x8] sm:$0xff]
      %v3262 = vld [vmem:[#allocation2 + $0x10] sm:$0xff]
      %v3263 = vld [vmem:[#allocation2 + $0x18] sm:$0xff]
      %v3264 = vld [vmem:[#allocation2 + $0x20] sm:$0xff]
      %v3265 = vld [vmem:[#allocation2 + $0x28] sm:$0xff]
      %v3266 = vld [vmem:[#allocation2 + $0x30] sm:$0xff]
      %v3267 = vld [vmem:[#allocation2 + $0x38] sm:$0xff]
      %v3268 = vld [vmem:[#allocation2 + $0x40] sm:$0xff]
      %v3269 = vld [vmem:[#allocation2 + $0x48] sm:$0xff]
      %v3270 = vld [vmem:[#allocation2 + $0x50] sm:$0xff]
      %v3271 = vld [vmem:[#allocation2 + $0x58] sm:$0xff]
      %v3272 = vld [vmem:[#allocation2 + $0x60] sm:$0xff]
      %v3273 = vld [vmem:[#allocation2 + $0x68] sm:$0xff]
      %v3274 = vld [vmem:[#allocation2 + $0x70] sm:$0xff]
      %v3275 = vld [vmem:[#allocation2 + $0x78] sm:$0xff]
      %v3276 = vld [vmem:[#allocation2 + $0x80] sm:$0xff]
      %v3277 = vld [vmem:[#allocation2 + $0x88] sm:$0xff]
      %v3278 = vld [vmem:[#allocation2 + $0x90] sm:$0xff]
      %v3279 = vld [vmem:[#allocation2 + $0x98] sm:$0xff]
      %v3280 = vld [vmem:[#allocation2 + $0xa0] sm:$0xff]
      %v3281 = vld [vmem:[#allocation2 + $0xa8] sm:$0xff]
      %v3282 = vld [vmem:[#allocation2 + $0xb0] sm:$0xff]
      %v3283 = vld [vmem:[#allocation2 + $0xb8] sm:$0xff]
      %v3284 = vld [vmem:[#allocation2 + $0xc0] sm:$0xff]
      %v3285 = vld [vmem:[#allocation2 + $0xc8] sm:$0xff]
      %v3286 = vld [vmem:[#allocation2 + $0xd0] sm:$0xf]
      %v3287 = vld [vmem:[#allocation2 + $0xd8] sm:$0xf]
      %s3288 = scalar_lea.vmem %s2, 48
      %v3289 = vld [vmem:[%s3288] sm:$0xf]
      %3291 = vset.pattern.permute.xlu0 0
      %3292 = vperm.xlu0 %3291, %v3289
      %v3293 = vpop.permute.xlu0 %3292
      %v3296 = vsel %vm927, %v3259, 0
      %v3299 = vsel %vm444, %v3286, 0
      %v3302 = vsel %vm444, %v3287, 0
      %3304 = vmatprep.subr.mxu0 %v3261
      %3305 = vmatpush1.msra.mxu0 %v3260
      %3306 = vmatprep.subr.mxu0 %v3263
      %3307 = vmatpush1.msra.mxu0 %v3262
      %3308 = vmatprep.subr.mxu0 %v3265
      %3309 = vmatpush1.msra.mxu0 %v3264
      %3310 = vmatprep.subr.mxu0 %v3267
      %3311 = vmatpush1.msra.mxu0 %v3266
      %3312 = vmatprep.subr.mxu0 %v3269
      %3313 = vmatpush1.msra.mxu0 %v3268
      %3314 = vmatprep.subr.mxu0 %v3271
      %3315 = vmatpush1.msra.mxu0 %v3270
      %3316 = vmatprep.subr.mxu0 %v3273
      %3317 = vmatpush1.msra.mxu0 %v3272
      %3318 = vmatprep.subr.mxu0 %v3275
      %3319 = vmatpush1.msra.mxu0 %v3274
      %3320 = vmatprep.subr.mxu0 %v3277
      %3321 = vmatpush1.msra.mxu0 %v3276
      %3322 = vmatprep.subr.mxu0 %v3279
      %3323 = vmatpush1.msra.mxu0 %v3278
      %3324 = vmatprep.subr.mxu0 %v3281
      %3325 = vmatpush1.msra.mxu0 %v3280
      %3326 = vmatprep.subr.mxu0 %v3283
      %3327 = vmatpush1.msra.mxu0 %v3282
      %3328 = vmatprep.subr.mxu0 %v3285
      %3329 = vmatpush1.msra.mxu0 %v3284
      %3330 = vmatprep.subr.mxu0 %v3302
      %3331 = vmatpush1.msra.mxu0 %v3299
      %3332 = vmatprep.subr.mxu0 0.0
      %3333 = vmatpush1.msra.mxu0 0.0
      %3334 = vmatprep.subr.mxu0 0.0
      %3335 = vmatpush1.msra.mxu0 0.0
      %3336 = vmatprep.subr.mxu0 0.0
      %3337 = vmatpush1.msra.mxu0 0.0
      %3338 = vmatprep.subr.mxu0 0.0
      %3339 = vmatpush1.msra.mxu0 0.0
      %3340 = vmatprep.subr.mxu0 0.0
      %3341 = vmatpush1.msra.mxu0 0.0
      %3342 = vmatprep.subr.mxu0 0.0
      %3343 = vmatpush1.msra.mxu0 0.0
      %3344 = vmatprep.subr.mxu0 0.0
      %3345 = vmatpush1.msra.mxu0 0.0
      %3346 = vmatprep.subr.mxu0 0.0
      %3347 = vmatpush1.msra.mxu0 0.0
      %3348 = vmatprep.subr.mxu0 0.0
      %3349 = vmatpush1.msra.mxu0 0.0
      %3350 = vmatprep.subr.mxu0 0.0
      %3351 = vmatpush1.msra.mxu0 0.0
      %3352 = vmatprep.subr.mxu0 0.0
      %3353 = vmatpush1.msra.mxu0 0.0
      %3354 = vmatprep.subr.mxu0 0.0
      %3355 = vmatpush1.msra.mxu0 0.0
      %3356 = vmatprep.subr.mxu0 0.0
      %3357 = vmatpush1.msra.mxu0 0.0
      %3358 = vmatprep.subr.mxu0 0.0
      %3359 = vmatpush1.msra.mxu0 0.0
      %3360 = vmatprep.subr.mxu0 0.0
      %3361 = vmatpush1.msra.mxu0 0.0
      %3362 = vmatprep.subr.mxu0 0.0
      %3363 = vmatpush1.msra.mxu0 0.0
      %3364 = vmatprep.subr.mxu0 0.0
      %3365 = vmatpush1.msra.mxu0 0.0
      %3366 = vmatprep.subr.mxu0 0.0
      %3367 = vmatpush1.msra.mxu0 0.0
      %3368 = vmatprep.mubr.f32.mxu0 0.0
      %3369 = vmatmul.mubr.f32.gmra.mrb[0].mxu0 %v3296
      %v3370 = vpop.f32.mrb[0].mxu0
      %v3371 = vadd.f32 %v3293, %v3370
      %v3372 = vpop.f32.mrb[0].mxu0
      %v3373 = vadd.f32 %v3293, %v3372
      %3374 = vdwg.mxu0
      %vm3375 = vcmp.ge.f32.partialorder %v3371, 0.0
      %vm3376 = vcmp.ge.f32.partialorder %v3373, 0.0
      %v3377 = vmul.f32 %v3371, 0.01
      %v3378 = vmul.f32 %v3373, 0.01
      %v3379 = vsel %vm3375, %v3371, %v3377
      %v3380 = vsel %vm3376, %v3373, %v3378
      %v3381 = vmul.f32 %v3379, %v219
      %v3382 = vmul.f32 %v3380, %v217
      %v3385 = vrot.slane %v3381, 4
      %v3386 = vrot.slane %v3382, 4
      %3387 = vrot.lane.b32.xlu0 %v3385, 17
      %v3388 = vpop.permute.xlu0 %3387
      %3389 = vrot.lane.b32.xlu0 %v3386, 17
      %v3390 = vpop.permute.xlu0 %3389
      %v3391 = vsel %vm235, %v536, %v3388
      %v3392 = vsel %vm235, %v3388, %v3390
      %3395 = vst [vmem:[#allocation2 + $0xd0] sm:$0xf0] %v3391
      %3396 = vst [vmem:[#allocation2 + $0xd8] sm:$0xf0] %v3392
      %3399 = vrot.lane.b32.xlu0 %v3379, 16
      %v3400 = vpop.permute.xlu0 %3399
      %3401 = vrot.lane.b32.xlu0 %v3380, 16
      %v3402 = vpop.permute.xlu0 %3401
      %v3403 = vsel %vm252, %v550, %v3400
      %v3404 = vsel %vm252, %v3400, %v3402
      %3407 = vst [vmem:[#allocation2 + $0xe0] sm:$0xf] %v3403
      %3408 = vst [vmem:[#allocation2 + $0xe8] sm:$0xf] %v3404
      %v3409 = vmul.f32 %v3379, %v273
      %v3410 = vmul.f32 %v3380, %v271
      %v3413 = vrot.slane %v3409, 4
      %v3414 = vrot.slane %v3410, 4
      %3415 = vrot.lane.b32.xlu0 %v3413, 15
      %v3416 = vpop.permute.xlu0 %3415
      %3417 = vrot.lane.b32.xlu0 %v3414, 15
      %v3418 = vpop.permute.xlu0 %3417
      %v3419 = vsel %vm289, %v569, %v3416
      %v3420 = vsel %vm289, %v3416, %v3418
      %3423 = vst [vmem:[#allocation2 + $0xe0] sm:$0xf0] %v3419
      %3424 = vst [vmem:[#allocation2 + $0xe8] sm:$0xf0] %v3420
      %v3425 = vmul.f32 %v3379, %v301
      %v3426 = vmul.f32 %v3380, %v299
      %3429 = vrot.lane.b32.xlu0 %v3425, 1
      %v3430 = vpop.permute.xlu0 %3429
      %3431 = vrot.lane.b32.xlu0 %v3426, 1
      %v3432 = vpop.permute.xlu0 %3431
      %v3433 = vsel %vm320, %v585, %v3430
      %v3434 = vsel %vm320, %v3430, %v3432
      %3437 = vst [vmem:[#allocation2 + $0xf0] sm:$0xf] %v3433
      %3438 = vst [vmem:[#allocation2 + $0xf8] sm:$0xf] %v3434
      %v3439 = vrot.slane %v3379, 4
      %v3440 = vrot.slane %v3380, 4
      %3443 = vst [vmem:[#allocation2 + $0xf0] sm:$0xf0] %v3439
      %3444 = vst [vmem:[#allocation2 + $0xf8] sm:$0xf0] %v3440
      %v3445 = vmul.f32 %v3379, %v330
      %v3446 = vmul.f32 %v3380, %v333
      %3449 = vrot.lane.b32.xlu0 %v3445, 127
      %v3450 = vpop.permute.xlu0 %3449
      %3451 = vrot.lane.b32.xlu0 %v3446, 127
      %v3452 = vpop.permute.xlu0 %3451
      %v3453 = vsel %vm300, %v3450, %v3452
      %v3454 = vsel %vm300, %v3452, %v611
      %3457 = vst [vmem:[#allocation2 + $0x100] sm:$0xf] %v3453
      %3458 = vst [vmem:[#allocation2 + $0x108] sm:$0xf] %v3454
      %v3459 = vmul.f32 %v3379, %v359
      %v3460 = vmul.f32 %v3380, %v362
      %v3463 = vrot.slane %v3459, 4
      %v3464 = vrot.slane %v3460, 4
      %3465 = vrot.lane.b32.xlu0 %v3463, 113
      %v3466 = vpop.permute.xlu0 %3465
      %3467 = vrot.lane.b32.xlu0 %v3464, 113
      %v3468 = vpop.permute.xlu0 %3467
      %v3469 = vsel %vm272, %v3466, %v3468
      %v3470 = vsel %vm272, %v3468, %v630
      %3473 = vst [vmem:[#allocation2 + $0x100] sm:$0xf0] %v3469
      %3474 = vst [vmem:[#allocation2 + $0x108] sm:$0xf0] %v3470
      %3475 = vrot.lane.b32.xlu0 %v3379, 112
      %v3476 = vpop.permute.xlu0 %3475
      %3477 = vrot.lane.b32.xlu0 %v3380, 112
      %v3478 = vpop.permute.xlu0 %3477
      %v3479 = vsel %vm390, %v3476, %v3478
      %v3480 = vsel %vm390, %v3478, %v642
      %3483 = vst [vmem:[#allocation2 + $0x110] sm:$0xf] %v3479
      %3484 = vst [vmem:[#allocation2 + $0x118] sm:$0xf] %v3480
      %v3485 = vmul.f32 %v3379, %v398
      %v3486 = vmul.f32 %v3380, %v401
      %v3489 = vrot.slane %v3485, 4
      %v3490 = vrot.slane %v3486, 4
      %3491 = vrot.lane.b32.xlu0 %v3489, 111
      %v3492 = vpop.permute.xlu0 %3491
      %3493 = vrot.lane.b32.xlu0 %v3490, 111
      %v3494 = vpop.permute.xlu0 %3493
      %v3495 = vsel %vm218, %v3492, %v3494
      %v3496 = vsel %vm218, %v3494, %v661
      %3499 = vst [vmem:[#allocation2 + $0x110] sm:$0xf0] %v3495
      %3500 = vst [vmem:[#allocation2 + $0x118] sm:$0xf0] %v3496
      %s3501 = scalar_lea.vmem %s1, 104
      %v3502 = vld [vmem:[%s3501] sm:$0xff]
      %v3503 = vld [vmem:[#allocation2] sm:$0xff]
      %v3504 = vld [vmem:[#allocation2 + $0x8] sm:$0xff]
      %v3505 = vld [vmem:[#allocation2 + $0x10] sm:$0xff]
      %v3506 = vld [vmem:[#allocation2 + $0x18] sm:$0xff]
      %v3507 = vld [vmem:[#allocation2 + $0x20] sm:$0xff]
      %v3508 = vld [vmem:[#allocation2 + $0x28] sm:$0xff]
      %v3509 = vld [vmem:[#allocation2 + $0x30] sm:$0xff]
      %v3510 = vld [vmem:[#allocation2 + $0x38] sm:$0xff]
      %v3511 = vld [vmem:[#allocation2 + $0x40] sm:$0xff]
      %v3512 = vld [vmem:[#allocation2 + $0x48] sm:$0xff]
      %v3513 = vld [vmem:[#allocation2 + $0x50] sm:$0xff]
      %v3514 = vld [vmem:[#allocation2 + $0x58] sm:$0xff]
      %v3515 = vld [vmem:[#allocation2 + $0x60] sm:$0xff]
      %v3516 = vld [vmem:[#allocation2 + $0x68] sm:$0xff]
      %v3517 = vld [vmem:[#allocation2 + $0x70] sm:$0xff]
      %v3518 = vld [vmem:[#allocation2 + $0x78] sm:$0xff]
      %v3519 = vld [vmem:[#allocation2 + $0x80] sm:$0xff]
      %v3520 = vld [vmem:[#allocation2 + $0x88] sm:$0xff]
      %v3521 = vld [vmem:[#allocation2 + $0x90] sm:$0xff]
      %v3522 = vld [vmem:[#allocation2 + $0x98] sm:$0xff]
      %v3523 = vld [vmem:[#allocation2 + $0xa0] sm:$0xff]
      %v3524 = vld [vmem:[#allocation2 + $0xa8] sm:$0xff]
      %v3525 = vld [vmem:[#allocation2 + $0xb0] sm:$0xff]
      %v3526 = vld [vmem:[#allocation2 + $0xb8] sm:$0xff]
      %v3527 = vld [vmem:[#allocation2 + $0xc0] sm:$0xff]
      %v3528 = vld [vmem:[#allocation2 + $0xc8] sm:$0xff]
      %v3529 = vld [vmem:[#allocation2 + $0xd0] sm:$0xff]
      %v3530 = vld [vmem:[#allocation2 + $0xd8] sm:$0xff]
      %v3531 = vld [vmem:[#allocation2 + $0xe0] sm:$0xff]
      %v3532 = vld [vmem:[#allocation2 + $0xe8] sm:$0xff]
      %v3533 = vld [vmem:[#allocation2 + $0xf0] sm:$0xff]
      %v3534 = vld [vmem:[#allocation2 + $0xf8] sm:$0xff]
      %v3535 = vld [vmem:[#allocation2 + $0x100] sm:$0xff]
      %v3536 = vld [vmem:[#allocation2 + $0x108] sm:$0xff]
      %v3537 = vld [vmem:[#allocation2 + $0x110] sm:$0xff]
      %v3538 = vld [vmem:[#allocation2 + $0x118] sm:$0xff]
      %s3539 = scalar_lea.vmem %s2, 52
      %v3540 = vld [vmem:[%s3539] sm:$0xf]
      %3542 = vset.pattern.permute.xlu0 0
      %3543 = vperm.xlu0 %3542, %v3540
      %v3544 = vpop.permute.xlu0 %3543
      %v3547 = vcombine.high %v3502, %v3502
      %v3548 = vsel %vm252, %v3547, 0
      %3550 = vmatprep.subr.mxu0 %v3504
      %3551 = vmatpush1.msra.mxu0 %v3503
      %3552 = vmatprep.subr.mxu0 %v3506
      %3553 = vmatpush1.msra.mxu0 %v3505
      %3554 = vmatprep.subr.mxu0 %v3508
      %3555 = vmatpush1.msra.mxu0 %v3507
      %3556 = vmatprep.subr.mxu0 %v3510
      %3557 = vmatpush1.msra.mxu0 %v3509
      %3558 = vmatprep.subr.mxu0 %v3512
      %3559 = vmatpush1.msra.mxu0 %v3511
      %3560 = vmatprep.subr.mxu0 %v3514
      %3561 = vmatpush1.msra.mxu0 %v3513
      %3562 = vmatprep.subr.mxu0 %v3516
      %3563 = vmatpush1.msra.mxu0 %v3515
      %3564 = vmatprep.subr.mxu0 %v3518
      %3565 = vmatpush1.msra.mxu0 %v3517
      %3566 = vmatprep.subr.mxu0 %v3520
      %3567 = vmatpush1.msra.mxu0 %v3519
      %3568 = vmatprep.subr.mxu0 %v3522
      %3569 = vmatpush1.msra.mxu0 %v3521
      %3570 = vmatprep.subr.mxu0 %v3524
      %3571 = vmatpush1.msra.mxu0 %v3523
      %3572 = vmatprep.subr.mxu0 %v3526
      %3573 = vmatpush1.msra.mxu0 %v3525
      %3574 = vmatprep.subr.mxu0 %v3528
      %3575 = vmatpush1.msra.mxu0 %v3527
      %3576 = vmatprep.subr.mxu0 %v3530
      %3577 = vmatpush1.msra.mxu0 %v3529
      %3578 = vmatprep.subr.mxu0 %v3532
      %3579 = vmatpush1.msra.mxu0 %v3531
      %3580 = vmatprep.subr.mxu0 %v3534
      %3581 = vmatpush1.msra.mxu0 %v3533
      %3582 = vmatprep.subr.mxu0 %v3536
      %3583 = vmatpush1.msra.mxu0 %v3535
      %3584 = vmatprep.subr.mxu0 %v3538
      %3585 = vmatpush1.msra.mxu0 %v3537
      %3586 = vmatprep.subr.mxu0 0.0
      %3587 = vmatpush1.msra.mxu0 0.0
      %3588 = vmatprep.subr.mxu0 0.0
      %3589 = vmatpush1.msra.mxu0 0.0
      %3590 = vmatprep.subr.mxu0 0.0
      %3591 = vmatpush1.msra.mxu0 0.0
      %3592 = vmatprep.subr.mxu0 0.0
      %3593 = vmatpush1.msra.mxu0 0.0
      %3594 = vmatprep.subr.mxu0 0.0
      %3595 = vmatpush1.msra.mxu0 0.0
      %3596 = vmatprep.subr.mxu0 0.0
      %3597 = vmatpush1.msra.mxu0 0.0
      %3598 = vmatprep.subr.mxu0 0.0
      %3599 = vmatpush1.msra.mxu0 0.0
      %3600 = vmatprep.subr.mxu0 0.0
      %3601 = vmatpush1.msra.mxu0 0.0
      %3602 = vmatprep.subr.mxu0 0.0
      %3603 = vmatpush1.msra.mxu0 0.0
      %3604 = vmatprep.subr.mxu0 0.0
      %3605 = vmatpush1.msra.mxu0 0.0
      %3606 = vmatprep.subr.mxu0 0.0
      %3607 = vmatpush1.msra.mxu0 0.0
      %3608 = vmatprep.subr.mxu0 0.0
      %3609 = vmatpush1.msra.mxu0 0.0
      %3610 = vmatprep.subr.mxu0 0.0
      %3611 = vmatpush1.msra.mxu0 0.0
      %3612 = vmatprep.subr.mxu0 0.0
      %3613 = vmatpush1.msra.mxu0 0.0
      %3614 = vmatprep.mubr.f32.mxu0 %v3548
      %3615 = vmatmul.mubr.f32.gmra.mrb[0].mxu0 %v3502
      %v3616 = vpop.f32.mrb[0].mxu0
      %v3617 = vadd.f32 %v3544, %v3616
      %v3618 = vpop.f32.mrb[0].mxu0
      %v3619 = vadd.f32 %v3544, %v3618
      %3620 = vdwg.mxu0
      %vm3621 = vcmp.ge.f32.partialorder %v3617, 0.0
      %vm3622 = vcmp.ge.f32.partialorder %v3619, 0.0
      %v3623 = vmul.f32 %v3617, 0.01
      %v3624 = vmul.f32 %v3619, 0.01
      %v3625 = vsel %vm3621, %v3617, %v3623
      %v3626 = vsel %vm3622, %v3619, %v3624
      %v3627 = vmul.f32 %v3625, %v219
      %v3628 = vmul.f32 %v3626, %v217
      %3631 = vrot.lane.b32.xlu0 %v3627, 17
      %v3632 = vpop.permute.xlu0 %3631
      %3633 = vrot.lane.b32.xlu0 %v3628, 17
      %v3634 = vpop.permute.xlu0 %3633
      %v3635 = vsel %vm235, %v230, %v3632
      %v3636 = vsel %vm235, %v3632, %v3634
      %3639 = vst [vmem:[#allocation2 + $0x120] sm:$0xf] %v3635
      %3640 = vst [vmem:[#allocation2 + $0x128] sm:$0xf] %v3636
      %v3643 = vrot.slane %v3625, 4
      %v3644 = vrot.slane %v3626, 4
      %3645 = vrot.lane.b32.xlu0 %v3643, 16
      %v3646 = vpop.permute.xlu0 %3645
      %3647 = vrot.lane.b32.xlu0 %v3644, 16
      %v3648 = vpop.permute.xlu0 %3647
      %v3649 = vsel %vm252, %v247, %v3646
      %v3650 = vsel %vm252, %v3646, %v3648
      %3653 = vst [vmem:[#allocation2 + $0x120] sm:$0xf0] %v3649
      %3654 = vst [vmem:[#allocation2 + $0x128] sm:$0xf0] %v3650
      %v3655 = vmul.f32 %v3625, %v273
      %v3656 = vmul.f32 %v3626, %v271
      %3659 = vrot.lane.b32.xlu0 %v3655, 15
      %v3660 = vpop.permute.xlu0 %3659
      %3661 = vrot.lane.b32.xlu0 %v3656, 15
      %v3662 = vpop.permute.xlu0 %3661
      %v3663 = vsel %vm289, %v284, %v3660
      %v3664 = vsel %vm289, %v3660, %v3662
      %3667 = vst [vmem:[#allocation2 + $0x130] sm:$0xf] %v3663
      %3668 = vst [vmem:[#allocation2 + $0x138] sm:$0xf] %v3664
      %v3669 = vmul.f32 %v3625, %v301
      %v3670 = vmul.f32 %v3626, %v299
      %v3673 = vrot.slane %v3669, 4
      %v3674 = vrot.slane %v3670, 4
      %3675 = vrot.lane.b32.xlu0 %v3673, 1
      %v3676 = vpop.permute.xlu0 %3675
      %3677 = vrot.lane.b32.xlu0 %v3674, 1
      %v3678 = vpop.permute.xlu0 %3677
      %v3679 = vsel %vm320, %v315, %v3676
      %v3680 = vsel %vm320, %v3676, %v3678
      %3683 = vst [vmem:[#allocation2 + $0x130] sm:$0xf0] %v3679
      %3684 = vst [vmem:[#allocation2 + $0x138] sm:$0xf0] %v3680
      %3685 = vst [vmem:[#allocation2 + $0x140] sm:$0xf] %v3625
      %3686 = vst [vmem:[#allocation2 + $0x148] sm:$0xf] %v3626
      %v3687 = vmul.f32 %v3625, %v330
      %v3688 = vmul.f32 %v3626, %v333
      %v3691 = vrot.slane %v3687, 4
      %v3692 = vrot.slane %v3688, 4
      %3693 = vrot.lane.b32.xlu0 %v3691, 127
      %v3694 = vpop.permute.xlu0 %3693
      %3695 = vrot.lane.b32.xlu0 %v3692, 127
      %v3696 = vpop.permute.xlu0 %3695
      %v3697 = vsel %vm300, %v3694, %v3696
      %v3698 = vsel %vm300, %v3696, %v351
      %3701 = vst [vmem:[#allocation2 + $0x140] sm:$0xf0] %v3697
      %3702 = vst [vmem:[#allocation2 + $0x148] sm:$0xf0] %v3698
      %v3703 = vmul.f32 %v3625, %v359
      %v3704 = vmul.f32 %v3626, %v362
      %3707 = vrot.lane.b32.xlu0 %v3703, 113
      %v3708 = vpop.permute.xlu0 %3707
      %3709 = vrot.lane.b32.xlu0 %v3704, 113
      %v3710 = vpop.permute.xlu0 %3709
      %v3711 = vsel %vm272, %v3708, %v3710
      %v3712 = vsel %vm272, %v3710, %v377
      %3715 = vst [vmem:[#allocation2 + $0x150] sm:$0xf] %v3711
      %3716 = vst [vmem:[#allocation2 + $0x158] sm:$0xf] %v3712
      %3717 = vrot.lane.b32.xlu0 %v3643, 112
      %v3718 = vpop.permute.xlu0 %3717
      %3719 = vrot.lane.b32.xlu0 %v3644, 112
      %v3720 = vpop.permute.xlu0 %3719
      %v3721 = vsel %vm390, %v3718, %v3720
      %v3722 = vsel %vm390, %v3720, %v389
      %3725 = vst [vmem:[#allocation2 + $0x150] sm:$0xf0] %v3721
      %3726 = vst [vmem:[#allocation2 + $0x158] sm:$0xf0] %v3722
      %v3727 = vmul.f32 %v3625, %v398
      %v3728 = vmul.f32 %v3626, %v401
      %3731 = vrot.lane.b32.xlu0 %v3727, 111
      %v3732 = vpop.permute.xlu0 %3731
      %3733 = vrot.lane.b32.xlu0 %v3728, 111
      %v3734 = vpop.permute.xlu0 %3733
      %v3735 = vsel %vm218, %v3732, %v3734
      %v3736 = vsel %vm218, %v3734, %v416
      %3739 = vst [vmem:[#allocation2 + $0x160] sm:$0xf] %v3735
      %3740 = vst [vmem:[#allocation2 + $0x168] sm:$0xf] %v3736
      %s3741 = scalar_lea.vmem %s1, 112
      %v3742 = vld [vmem:[%s3741] sm:$0xff]
      %v3743 = vld [vmem:[#allocation2] sm:$0xff]
      %v3744 = vld [vmem:[#allocation2 + $0x8] sm:$0xff]
      %v3745 = vld [vmem:[#allocation2 + $0x10] sm:$0xff]
      %v3746 = vld [vmem:[#allocation2 + $0x18] sm:$0xff]
      %v3747 = vld [vmem:[#allocation2 + $0x20] sm:$0xff]
      %v3748 = vld [vmem:[#allocation2 + $0x28] sm:$0xff]
      %v3749 = vld [vmem:[#allocation2 + $0x30] sm:$0xff]
      %v3750 = vld [vmem:[#allocation2 + $0x38] sm:$0xff]
      %v3751 = vld [vmem:[#allocation2 + $0x40] sm:$0xff]
      %v3752 = vld [vmem:[#allocation2 + $0x48] sm:$0xff]
      %v3753 = vld [vmem:[#allocation2 + $0x50] sm:$0xff]
      %v3754 = vld [vmem:[#allocation2 + $0x58] sm:$0xff]
      %v3755 = vld [vmem:[#allocation2 + $0x60] sm:$0xff]
      %v3756 = vld [vmem:[#allocation2 + $0x68] sm:$0xff]
      %v3757 = vld [vmem:[#allocation2 + $0x70] sm:$0xff]
      %v3758 = vld [vmem:[#allocation2 + $0x78] sm:$0xff]
      %v3759 = vld [vmem:[#allocation2 + $0x80] sm:$0xff]
      %v3760 = vld [vmem:[#allocation2 + $0x88] sm:$0xff]
      %v3761 = vld [vmem:[#allocation2 + $0x90] sm:$0xff]
      %v3762 = vld [vmem:[#allocation2 + $0x98] sm:$0xff]
      %v3763 = vld [vmem:[#allocation2 + $0xa0] sm:$0xff]
      %v3764 = vld [vmem:[#allocation2 + $0xa8] sm:$0xff]
      %v3765 = vld [vmem:[#allocation2 + $0xb0] sm:$0xff]
      %v3766 = vld [vmem:[#allocation2 + $0xb8] sm:$0xff]
      %v3767 = vld [vmem:[#allocation2 + $0xc0] sm:$0xff]
      %v3768 = vld [vmem:[#allocation2 + $0xc8] sm:$0xff]
      %v3769 = vld [vmem:[#allocation2 + $0xd0] sm:$0xff]
      %v3770 = vld [vmem:[#allocation2 + $0xd8] sm:$0xff]
      %v3771 = vld [vmem:[#allocation2 + $0xe0] sm:$0xff]
      %v3772 = vld [vmem:[#allocation2 + $0xe8] sm:$0xff]
      %v3773 = vld [vmem:[#allocation2 + $0xf0] sm:$0xff]
      %v3774 = vld [vmem:[#allocation2 + $0xf8] sm:$0xff]
      %v3775 = vld [vmem:[#allocation2 + $0x100] sm:$0xff]
      %v3776 = vld [vmem:[#allocation2 + $0x108] sm:$0xff]
      %v3777 = vld [vmem:[#allocation2 + $0x110] sm:$0xff]
      %v3778 = vld [vmem:[#allocation2 + $0x118] sm:$0xff]
      %v3779 = vld [vmem:[#allocation2 + $0x120] sm:$0xff]
      %v3780 = vld [vmem:[#allocation2 + $0x128] sm:$0xff]
      %v3781 = vld [vmem:[#allocation2 + $0x130] sm:$0xff]
      %v3782 = vld [vmem:[#allocation2 + $0x138] sm:$0xff]
      %v3783 = vld [vmem:[#allocation2 + $0x140] sm:$0xff]
      %v3784 = vld [vmem:[#allocation2 + $0x148] sm:$0xff]
      %v3785 = vld [vmem:[#allocation2 + $0x150] sm:$0xff]
      %v3786 = vld [vmem:[#allocation2 + $0x158] sm:$0xff]
      %v3787 = vld [vmem:[#allocation2 + $0x160] sm:$0xf]
      %v3788 = vld [vmem:[#allocation2 + $0x168] sm:$0xf]
      %s3789 = scalar_lea.vmem %s2, 56
      %v3790 = vld [vmem:[%s3789] sm:$0xf]
      %3792 = vset.pattern.permute.xlu0 0
      %3793 = vperm.xlu0 %3792, %v3790
      %v3794 = vpop.permute.xlu0 %3793
      %v3797 = vcombine.high %v3742, %v3742
      %v3798 = vsel %vm1431, %v3797, 0
      %v3801 = vsel %vm444, %v3787, 0
      %v3804 = vsel %vm444, %v3788, 0
      %3806 = vmatprep.subr.mxu0 %v3744
      %3807 = vmatpush1.msra.mxu0 %v3743
      %3808 = vmatprep.subr.mxu0 %v3746
      %3809 = vmatpush1.msra.mxu0 %v3745
      %3810 = vmatprep.subr.mxu0 %v3748
      %3811 = vmatpush1.msra.mxu0 %v3747
      %3812 = vmatprep.subr.mxu0 %v3750
      %3813 = vmatpush1.msra.mxu0 %v3749
      %3814 = vmatprep.subr.mxu0 %v3752
      %3815 = vmatpush1.msra.mxu0 %v3751
      %3816 = vmatprep.subr.mxu0 %v3754
      %3817 = vmatpush1.msra.mxu0 %v3753
      %3818 = vmatprep.subr.mxu0 %v3756
      %3819 = vmatpush1.msra.mxu0 %v3755
      %3820 = vmatprep.subr.mxu0 %v3758
      %3821 = vmatpush1.msra.mxu0 %v3757
      %3822 = vmatprep.subr.mxu0 %v3760
      %3823 = vmatpush1.msra.mxu0 %v3759
      %3824 = vmatprep.subr.mxu0 %v3762
      %3825 = vmatpush1.msra.mxu0 %v3761
      %3826 = vmatprep.subr.mxu0 %v3764
      %3827 = vmatpush1.msra.mxu0 %v3763
      %3828 = vmatprep.subr.mxu0 %v3766
      %3829 = vmatpush1.msra.mxu0 %v3765
      %3830 = vmatprep.subr.mxu0 %v3768
      %3831 = vmatpush1.msra.mxu0 %v3767
      %3832 = vmatprep.subr.mxu0 %v3770
      %3833 = vmatpush1.msra.mxu0 %v3769
      %3834 = vmatprep.subr.mxu0 %v3772
      %3835 = vmatpush1.msra.mxu0 %v3771
      %3836 = vmatprep.subr.mxu0 %v3774
      %3837 = vmatpush1.msra.mxu0 %v3773
      %3838 = vmatprep.subr.mxu0 %v3776
      %3839 = vmatpush1.msra.mxu0 %v3775
      %3840 = vmatprep.subr.mxu0 %v3778
      %3841 = vmatpush1.msra.mxu0 %v3777
      %3842 = vmatprep.subr.mxu0 %v3780
      %3843 = vmatpush1.msra.mxu0 %v3779
      %3844 = vmatprep.subr.mxu0 %v3782
      %3845 = vmatpush1.msra.mxu0 %v3781
      %3846 = vmatprep.subr.mxu0 %v3784
      %3847 = vmatpush1.msra.mxu0 %v3783
      %3848 = vmatprep.subr.mxu0 %v3786
      %3849 = vmatpush1.msra.mxu0 %v3785
      %3850 = vmatprep.subr.mxu0 %v3804
      %3851 = vmatpush1.msra.mxu0 %v3801
      %3852 = vmatprep.subr.mxu0 0.0
      %3853 = vmatpush1.msra.mxu0 0.0
      %3854 = vmatprep.subr.mxu0 0.0
      %3855 = vmatpush1.msra.mxu0 0.0
      %3856 = vmatprep.subr.mxu0 0.0
      %3857 = vmatpush1.msra.mxu0 0.0
      %3858 = vmatprep.subr.mxu0 0.0
      %3859 = vmatpush1.msra.mxu0 0.0
      %3860 = vmatprep.subr.mxu0 0.0
      %3861 = vmatpush1.msra.mxu0 0.0
      %3862 = vmatprep.subr.mxu0 0.0
      %3863 = vmatpush1.msra.mxu0 0.0
      %3864 = vmatprep.subr.mxu0 0.0
      %3865 = vmatpush1.msra.mxu0 0.0
      %3866 = vmatprep.subr.mxu0 0.0
      %3867 = vmatpush1.msra.mxu0 0.0
      %3868 = vmatprep.subr.mxu0 0.0
      %3869 = vmatpush1.msra.mxu0 0.0
      %3870 = vmatprep.mubr.f32.mxu0 %v3798
      %3871 = vmatmul.mubr.f32.gmra.mrb[0].mxu0 %v3742
      %v3872 = vpop.f32.mrb[0].mxu0
      %v3873 = vadd.f32 %v3794, %v3872
      %v3874 = vpop.f32.mrb[0].mxu0
      %v3875 = vadd.f32 %v3794, %v3874
      %3876 = vdwg.mxu0
      %v3877 = vmul.f32 %v3873, 0.2
      %v3878 = vmul.f32 %v3875, 0.2
      %v3879 = vadd.f32 %v3877, %v2696
      %v3880 = vadd.f32 %v3878, %v2697
      %v3881 = vmul.f32 %v3879, 0.2
      %v3882 = vmul.f32 %v3880, 0.2
      %v3883 = vadd.f32 %v3881, %v201
      %v3884 = vadd.f32 %v3882, %v203
      %v3887 = vcombine.low %v3883, %v3884
      %3889 = vst [vmem:[%s197] sm:$0xff] %v3887
      %p3890 = scmp.lt.s32.totalorder %s15, 1
      %s3891 = scalar_select %p3890, %s15, 1
      %s3892 = smul.addr %s3891, 2
      %s3893 = smul.addr %s3892, 4
      %s3894 = scalar_lea.vmem %s4, %s3893
      // Predicated region
      $region37: #{shortcut_rrdb_forward.1} parent=35 // pred_check
        %p3895 = pneg %p122
      $region38: #{shortcut_rrdb_forward.1} parent=35 // pred_check_branch
        %3897 = sbr.rel (%p3895) target = $region40
      $region39: #{shortcut_rrdb_forward.1} parent=35 // pred_region
        _
      $region40: #{shortcut_rrdb_forward.1} parent=35 // pred_fallthru
        _
    $region36: #{shortcut_rrdb_forward.1} parent=5 // pred_fallthru
      _
    %p3898 = scmp.le.s32.totalorder 2, %s10
    // Predicated region
    $region41: #{shortcut_rrdb_forward.1} parent=5 // pred_check
      %p3899 = pneg %p3898
    $region42: #{shortcut_rrdb_forward.1} parent=5 // pred_check_branch
      %3901 = sbr.rel (%p3899) target = $region44
    $region43: #{shortcut_rrdb_forward.1} parent=5 // pred_region
      %s3902 = ssub.s32 %s10, 2
      // Predicated region
      $region45: #{shortcut_rrdb_forward.1} parent=43 // pred_check
        %p3903 = pneg %p128
      $region46: #{shortcut_rrdb_forward.1} parent=43 // pred_check_branch
        %3905 = sbr.rel (%p3903) target = $region48
      $region47: #{shortcut_rrdb_forward.1} parent=43 // pred_region
        %p3906 = scmp.lt.s32.totalorder %s16, 1
        %s3907 = scalar_select %p3906, %s16, 1
        %s3908 = smul.addr %s3907, 2
        %s3909 = smul.addr %s3908, 4
        %s3910 = scalar_lea.vmem %s4, %s3909
      $region48: #{shortcut_rrdb_forward.1} parent=43 // pred_fallthru
        _
    $region44: #{shortcut_rrdb_forward.1} parent=5 // pred_fallthru
      _
  $region6: #{shortcut_rrdb_forward.1} parent=0 // loop_footer
    %s14 = sadd.s32 1, %s10
  $region7: #{shortcut_rrdb_forward.1} parent=0 // loop_footer_branch
    %9 = sbr.rel target = $region3
  $region8: #{shortcut_rrdb_forward.1} parent=0 // loop_exit
    _

</llo_original>
